<compile_context>
chip_gen: v7x
topology: tpu7x:2x2x1
jax: 0.10.0
libtpu: 0.0.40
codegen_flags: <defaults>
</compile_context>

<pallas_src>
import numpy as np

import jax
import jax.numpy as jnp
from jax import lax
from jax.experimental import pallas as pl
from jax.experimental.pallas import tpu as pltpu


# ---------------------------------------------------------------------------
# One-time parameter preparation (host-side, free at load time)
# ---------------------------------------------------------------------------
def prepare_lenet_params(params):
    """Build banded conv weights and an NHWC-ordered fc weight.

    Incoming params (same format as the original script / torch):
      w1 : (25, 10)       row kh*5+kw, col co        (conv1, Cin=1)
      b1 : (1, 10)
      w2 : (25, 10, 20)   [kh*5+kw, cin, cout]       (conv2)
      b2 : (1, 20)
      wf : (320, 10)      torch Linear weight transposed (NCHW flatten order)
      bf : (1, 10)
    """
    w1 = np.asarray(params["w1"], np.float32)
    b1 = np.asarray(params["b1"], np.float32)
    w2 = np.asarray(params["w2"], np.float32)
    b2 = np.asarray(params["b2"], np.float32)
    wf = np.asarray(params["wf"], np.float32)
    bf = np.asarray(params["bf"], np.float32)

    # conv1 banded weights, split by output-column parity (wo = 2j / 2j+1).
    # y[(n,ho) row, j*10+co] = sum_wi x[n, ho+kh, wi] * w1e[kh, wi, j*10+co]
    w1e = np.zeros((5, 28, 120), np.float32)
    w1o = np.zeros((5, 28, 120), np.float32)
    for kh in range(5):
        for kw in range(5):
            for j in range(12):
                w1e[kh, 2 * j + kw, j * 10:(j + 1) * 10] = w1[kh * 5 + kw]
                w1o[kh, 2 * j + 1 + kw, j * 10:(j + 1) * 10] = w1[kh * 5 + kw]

    # conv2 banded weights over (input-w j, cin), split by output parity (wo2 = 2m / 2m+1).
    w2e = np.zeros((5, 120, 80), np.float32)
    w2o = np.zeros((5, 120, 80), np.float32)
    for kh in range(5):
        for kw in range(5):
            for m in range(4):
                je = 2 * m + kw
                jo = 2 * m + 1 + kw
                w2e[kh, je * 10:(je + 1) * 10, m * 20:(m + 1) * 20] = w2[kh * 5 + kw]
                w2o[kh, jo * 10:(jo + 1) * 10, m * 20:(m + 1) * 20] = w2[kh * 5 + kw]

    # fc weight rearranged so the kernel's (h2, w2, c) layout matches torch's
    # NCHW flatten order (c*16 + h2*4 + w2) -- kills the runtime transpose.
    wff = np.zeros((4, 80, 10), np.float32)
    for i2 in range(4):          # pooled h
        for m in range(4):       # pooled w
            for c in range(20):  # channel
                wff[i2, m * 20 + c, :] = wf[c * 16 + i2 * 4 + m, :]

    b1row = np.tile(b1, (1, 12))   # (1, 120), index j*10+co
    b2row = np.tile(b2, (1, 4))    # (1, 80),  index m*20+co

    return {
        "w1e": jnp.asarray(w1e), "w1o": jnp.asarray(w1o), "b1": jnp.asarray(b1row),
        "w2e": jnp.asarray(w2e), "w2o": jnp.asarray(w2o), "b2": jnp.asarray(b2row),
        "wf": jnp.asarray(wff), "bf": jnp.asarray(bf),
    }


# ---------------------------------------------------------------------------
# Fused kernel: whole LeNet forward for one batch tile
# ---------------------------------------------------------------------------
def lenet_kernel(x_ref, w1e_ref, w1o_ref, b1_ref,
                 w2e_ref, w2o_ref, b2_ref, wf_ref, bf_ref, o_ref):
    bn = x_ref.shape[1]                       # batch tile (multiple of 8)
    x = x_ref[...].astype(jnp.float32)        # (28, BN, 28)  H-major layout

    # ---- conv1: banded MXU matmuls, even/odd output columns separately ----
    y1e = jnp.zeros((24 * bn, 120), jnp.float32)
    y1o = jnp.zeros((24 * bn, 120), jnp.float32)
    for kh in range(5):
        xs = x[kh:kh + 24].reshape(24 * bn, 28)            # rows = (ho, n)
        y1e = y1e + jnp.dot(xs, w1e_ref[kh], preferred_element_type=jnp.float32)
        y1o = y1o + jnp.dot(xs, w1o_ref[kh], preferred_element_type=jnp.float32)

    # ---- bias + 2x2 max-pool + relu (all in registers / VMEM) ----
    m1 = jnp.maximum(y1e, y1o) + b1_ref[...]                # W-pool + bias
    m1 = m1.reshape(12, 2, bn, 120)                         # rows (ho=2a+b, n)
    p1 = jnp.maximum(jnp.maximum(m1[:, 0], m1[:, 1]), 0.0)  # H-pool + relu -> (12, BN, 120)

    # ---- conv2: banded MXU matmuls over (w, cin), even/odd output columns ----
    y2e = jnp.zeros((8 * bn, 80), jnp.float32)
    y2o = jnp.zeros((8 * bn, 80), jnp.float32)
    for kh in range(5):
        ps = p1[kh:kh + 8].reshape(8 * bn, 120)             # rows = (ho2, n)
        y2e = y2e + jnp.dot(ps, w2e_ref[kh], preferred_element_type=jnp.float32)
        y2o = y2o + jnp.dot(ps, w2o_ref[kh], preferred_element_type=jnp.float32)

    m2 = jnp.maximum(y2e, y2o) + b2_ref[...]
    m2 = m2.reshape(4, 2, bn, 80)
    p2 = jnp.maximum(jnp.maximum(m2[:, 0], m2[:, 1]), 0.0)  # (4, BN, 80)

    # ---- fc: weight pre-permuted to the kernel's flatten order ----
    acc = jnp.zeros((bn, 10), jnp.float32)
    for i2 in range(4):
        acc = acc + jnp.dot(p2[i2], wf_ref[i2], preferred_element_type=jnp.float32)
    o_ref[...] = acc + bf_ref[...]


# ---------------------------------------------------------------------------
# Wrapper: batch tiling / padding + pallas_call
# ---------------------------------------------------------------------------
def _pick_batch_tile(n_pad):
    for bn in (128, 64, 32, 16, 8):
        if n_pad % bn == 0:
            return bn
    return 8


def lenet_forward(x_nchw, prep):
    n = x_nchw.shape[0]
    assert x_nchw.shape[1:] == (1, 28, 28), "LeNet expects (N, 1, 28, 28) input"

    n_pad = ((n + 7) // 8) * 8
    bn = _pick_batch_tile(n_pad)

    x = x_nchw.reshape(n, 28, 28).astype(jnp.float32)       # squeeze Cin=1
    if n_pad != n:
        x = jnp.concatenate([x, jnp.zeros((n_pad - n, 28, 28), jnp.float32)], axis=0)
    xt = jnp.transpose(x, (1, 0, 2))                         # (28, N_pad, 28), H-major

    grid = (n_pad // bn,)
    out = pl.pallas_call(
        lenet_kernel,
        out_shape=jax.ShapeDtypeStruct((n_pad, 10), jnp.float32),
        grid_spec=pltpu.PrefetchScalarGridSpec(
            num_scalar_prefetch=0,
            grid=grid,
            in_specs=[
                pl.BlockSpec((28, bn, 28), lambda i: (0, i, 0)),     # input tile
                pl.BlockSpec((5, 28, 120), lambda i: (0, 0, 0)),     # w1 even (VMEM-resident)
                pl.BlockSpec((5, 28, 120), lambda i: (0, 0, 0)),     # w1 odd
                pl.BlockSpec((1, 120), lambda i: (0, 0)),            # b1
                pl.BlockSpec((5, 120, 80), lambda i: (0, 0, 0)),     # w2 even
                pl.BlockSpec((5, 120, 80), lambda i: (0, 0, 0)),     # w2 odd
                pl.BlockSpec((1, 80), lambda i: (0, 0)),             # b2
                pl.BlockSpec((4, 80, 10), lambda i: (0, 0, 0)),      # fc weight
                pl.BlockSpec((1, 10), lambda i: (0, 0)),             # fc bias
            ],
            out_specs=pl.BlockSpec((bn, 10), lambda i: (i, 0)),
        ),
        compiler_params=pltpu.CompilerParams(
            dimension_semantics=("parallel",),       # shard batch tiles across TCs (v7x)
            vmem_limit_bytes=32 * 1024 * 1024,       # fits v5e/v6e/v7x scoped VMEM
        ),
    )(xt, prep["w1e"], prep["w1o"], prep["b1"],
      prep["w2e"], prep["w2o"], prep["b2"], prep["wf"], prep["bf"])
    return out[:n]


# ---------------------------------------------------------------------------
# Pure-JAX reference (matches PyTorch semantics)
# ---------------------------------------------------------------------------
def ref_forward(x_nchw, params):
    w1 = jnp.transpose(params["w1"].reshape(5, 5, 1, 10), (3, 2, 0, 1))    # OIHW
    w2 = jnp.transpose(params["w2"].reshape(5, 5, 10, 20), (3, 2, 0, 1))   # OIHW
    dn = ("NCHW", "OIHW", "NCHW")

    def mp(z):
        return lax.reduce_window(z, -jnp.inf, lax.max,
                                 (1, 1, 2, 2), (1, 1, 2, 2), "VALID")

    y = lax.conv_general_dilated(x_nchw, w1, (1, 1), "VALID", dimension_numbers=dn,
                                 precision=lax.Precision.HIGHEST)
    y = y + params["b1"].reshape(1, 10, 1, 1)
    y = jnp.maximum(mp(y), 0.0)
    y = lax.conv_general_dilated(y, w2, (1, 1), "VALID", dimension_numbers=dn,
                                 precision=lax.Precision.HIGHEST)
    y = y + params["b2"].reshape(1, 20, 1, 1)
    y = jnp.maximum(mp(y), 0.0)
    y = y.reshape(x_nchw.shape[0], -1)
    return jnp.dot(y, params["wf"], precision=lax.Precision.HIGHEST) + params["bf"]


# ---------------------------------------------------------------------------
if __name__ == "__main__":
    key = jax.random.PRNGKey(0)
    k1, k2, k3, k4, k5, k6, kx = jax.random.split(key, 7)

    params = {
        # conv1: (kh*kw, Cout) == torch W[co, 0, kh, kw] at row kh*5+kw
        "w1": jax.random.normal(k1, (25, 10), jnp.float32) * 0.1,
        "b1": jax.random.normal(k2, (1, 10), jnp.float32) * 0.1,
        # conv2: (kh*kw, Cin, Cout)
        "w2": jax.random.normal(k3, (25, 10, 20), jnp.float32) * 0.05,
        "b2": jax.random.normal(k4, (1, 20), jnp.float32) * 0.05,
        # fc: (320, 10) == torch Linear weight transposed
        "wf": jax.random.normal(k5, (320, 10), jnp.float32) * 0.05,
        "bf": jax.random.normal(k6, (1, 10), jnp.float32) * 0.05,
    }

    # batch=2, single channel, 28x28 (spatial size is dictated by fc's 320 inputs)
    x = jax.random.normal(kx, (2, 1, 28, 28), jnp.float32)

    prep = prepare_lenet_params(params)
    fwd = jax.jit(lenet_forward)

    out = jax.block_until_ready(fwd(x, prep))
    assert out.shape == (2, 10) and out.dtype == jnp.float32

    ref = jax.block_until_ready(ref_forward(x, params))
    err = float(jnp.max(jnp.abs(out - ref)))
    assert err < 2e-3, f"mismatch vs reference: max abs err = {err}"

    print("KERNEL_OK")
</pallas_src>

<mosaic_0001>
module attributes {stable_mosaic.version = 11 : i64} {
  func.func @lenet_kernel(%arg0: i32, %arg1: memref<28x8x28xf32, #tpu.memory_space<vmem>>, %arg2: memref<5x28x120xf32, #tpu.memory_space<vmem>>, %arg3: memref<5x28x120xf32, #tpu.memory_space<vmem>>, %arg4: memref<1x120xf32, #tpu.memory_space<vmem>>, %arg5: memref<5x120x80xf32, #tpu.memory_space<vmem>>, %arg6: memref<5x120x80xf32, #tpu.memory_space<vmem>>, %arg7: memref<1x80xf32, #tpu.memory_space<vmem>>, %arg8: memref<4x80x10xf32, #tpu.memory_space<vmem>>, %arg9: memref<1x10xf32, #tpu.memory_space<vmem>>, %arg10: memref<8x10xf32, #tpu.memory_space<vmem>>) attributes {dimension_semantics = [#tpu.dimension_semantics<parallel>], iteration_bounds = array<i64: 1>, scalar_prefetch = 0 : i64, scratch_operands = 0 : i64, tpu.core_type = #tpu.core_type<tc>, window_params = [{transform_indices = @transform_0, window_bounds = array<i64: 28, 8, 28>}, {pipeline_mode = #tpu.pipeline_mode<synchronous>, transform_indices = @transform_1, window_bounds = array<i64: 5, 28, 120>}, {pipeline_mode = #tpu.pipeline_mode<synchronous>, transform_indices = @transform_2, window_bounds = array<i64: 5, 28, 120>}, {pipeline_mode = #tpu.pipeline_mode<synchronous>, transform_indices = @transform_3, window_bounds = array<i64: 1, 120>}, {pipeline_mode = #tpu.pipeline_mode<synchronous>, transform_indices = @transform_4, window_bounds = array<i64: 5, 120, 80>}, {pipeline_mode = #tpu.pipeline_mode<synchronous>, transform_indices = @transform_5, window_bounds = array<i64: 5, 120, 80>}, {pipeline_mode = #tpu.pipeline_mode<synchronous>, transform_indices = @transform_6, window_bounds = array<i64: 1, 80>}, {pipeline_mode = #tpu.pipeline_mode<synchronous>, transform_indices = @transform_7, window_bounds = array<i64: 4, 80, 10>}, {pipeline_mode = #tpu.pipeline_mode<synchronous>, transform_indices = @transform_8, window_bounds = array<i64: 1, 10>}, {transform_indices = @transform_9, window_bounds = array<i64: 8, 10>}]} {
    %c0 = arith.constant 0 : index
    %c0_0 = arith.constant 0 : index
    %c0_1 = arith.constant 0 : index
    %0 = vector.load %arg1[%c0, %c0_0, %c0_1] : memref<28x8x28xf32, #tpu.memory_space<vmem>>, vector<28x8x28xf32>
    %cst = arith.constant 0.000000e+00 : f32
    %1 = vector.broadcast %cst : f32 to vector<192x120xf32>
    %cst_2 = arith.constant 0.000000e+00 : f32
    %2 = vector.broadcast %cst_2 : f32 to vector<192x120xf32>
    %3 = vector.extract_strided_slice %0 {offsets = [0, 0, 0], sizes = [24, 8, 28], strides = [1, 1, 1]} : vector<28x8x28xf32> to vector<24x8x28xf32>
    %4 = vector.shape_cast %3 : vector<24x8x28xf32> to vector<192x28xf32>
    %c0_3 = arith.constant 0 : index
    %c0_4 = arith.constant 0 : index
    %c0_5 = arith.constant 0 : index
    %5 = vector.load %arg2[%c0_3, %c0_4, %c0_5] : memref<5x28x120xf32, #tpu.memory_space<vmem>>, vector<1x28x120xf32>
    %6 = vector.shape_cast %5 : vector<1x28x120xf32> to vector<28x120xf32>
    %cst_6 = arith.constant dense<0.000000e+00> : vector<192x120xf32>
    %7 = tpu.matmul %4, %6, %cst_6 {dimension_numbers = #tpu.dot_dimension_numbers<[1], [0], [0], [1], [0, 0, 1, 1], [], []>} : vector<192x28xf32>, vector<28x120xf32>, vector<192x120xf32> -> vector<192x120xf32>
    %8 = arith.addf %1, %7 : vector<192x120xf32>
    %c0_7 = arith.constant 0 : index
    %c0_8 = arith.constant 0 : index
    %c0_9 = arith.constant 0 : index
    %9 = vector.load %arg3[%c0_7, %c0_8, %c0_9] : memref<5x28x120xf32, #tpu.memory_space<vmem>>, vector<1x28x120xf32>
    %10 = vector.shape_cast %9 : vector<1x28x120xf32> to vector<28x120xf32>
    %cst_10 = arith.constant dense<0.000000e+00> : vector<192x120xf32>
    %11 = tpu.matmul %4, %10, %cst_10 {dimension_numbers = #tpu.dot_dimension_numbers<[1], [0], [0], [1], [0, 0, 1, 1], [], []>} : vector<192x28xf32>, vector<28x120xf32>, vector<192x120xf32> -> vector<192x120xf32>
    %12 = arith.addf %2, %11 : vector<192x120xf32>
    %13 = vector.extract_strided_slice %0 {offsets = [1, 0, 0], sizes = [24, 8, 28], strides = [1, 1, 1]} : vector<28x8x28xf32> to vector<24x8x28xf32>
    %14 = vector.shape_cast %13 : vector<24x8x28xf32> to vector<192x28xf32>
    %c1 = arith.constant 1 : index
    %c0_11 = arith.constant 0 : index
    %c0_12 = arith.constant 0 : index
    %15 = vector.load %arg2[%c1, %c0_11, %c0_12] : memref<5x28x120xf32, #tpu.memory_space<vmem>>, vector<1x28x120xf32>
    %16 = vector.shape_cast %15 : vector<1x28x120xf32> to vector<28x120xf32>
    %cst_13 = arith.constant dense<0.000000e+00> : vector<192x120xf32>
    %17 = tpu.matmul %14, %16, %cst_13 {dimension_numbers = #tpu.dot_dimension_numbers<[1], [0], [0], [1], [0, 0, 1, 1], [], []>} : vector<192x28xf32>, vector<28x120xf32>, vector<192x120xf32> -> vector<192x120xf32>
    %18 = arith.addf %8, %17 : vector<192x120xf32>
    %c1_14 = arith.constant 1 : index
    %c0_15 = arith.constant 0 : index
    %c0_16 = arith.constant 0 : index
    %19 = vector.load %arg3[%c1_14, %c0_15, %c0_16] : memref<5x28x120xf32, #tpu.memory_space<vmem>>, vector<1x28x120xf32>
    %20 = vector.shape_cast %19 : vector<1x28x120xf32> to vector<28x120xf32>
    %cst_17 = arith.constant dense<0.000000e+00> : vector<192x120xf32>
    %21 = tpu.matmul %14, %20, %cst_17 {dimension_numbers = #tpu.dot_dimension_numbers<[1], [0], [0], [1], [0, 0, 1, 1], [], []>} : vector<192x28xf32>, vector<28x120xf32>, vector<192x120xf32> -> vector<192x120xf32>
    %22 = arith.addf %12, %21 : vector<192x120xf32>
    %23 = vector.extract_strided_slice %0 {offsets = [2, 0, 0], sizes = [24, 8, 28], strides = [1, 1, 1]} : vector<28x8x28xf32> to vector<24x8x28xf32>
    %24 = vector.shape_cast %23 : vector<24x8x28xf32> to vector<192x28xf32>
    %c2 = arith.constant 2 : index
    %c0_18 = arith.constant 0 : index
    %c0_19 = arith.constant 0 : index
    %25 = vector.load %arg2[%c2, %c0_18, %c0_19] : memref<5x28x120xf32, #tpu.memory_space<vmem>>, vector<1x28x120xf32>
    %26 = vector.shape_cast %25 : vector<1x28x120xf32> to vector<28x120xf32>
    %cst_20 = arith.constant dense<0.000000e+00> : vector<192x120xf32>
    %27 = tpu.matmul %24, %26, %cst_20 {dimension_numbers = #tpu.dot_dimension_numbers<[1], [0], [0], [1], [0, 0, 1, 1], [], []>} : vector<192x28xf32>, vector<28x120xf32>, vector<192x120xf32> -> vector<192x120xf32>
    %28 = arith.addf %18, %27 : vector<192x120xf32>
    %c2_21 = arith.constant 2 : index
    %c0_22 = arith.constant 0 : index
    %c0_23 = arith.constant 0 : index
    %29 = vector.load %arg3[%c2_21, %c0_22, %c0_23] : memref<5x28x120xf32, #tpu.memory_space<vmem>>, vector<1x28x120xf32>
    %30 = vector.shape_cast %29 : vector<1x28x120xf32> to vector<28x120xf32>
    %cst_24 = arith.constant dense<0.000000e+00> : vector<192x120xf32>
    %31 = tpu.matmul %24, %30, %cst_24 {dimension_numbers = #tpu.dot_dimension_numbers<[1], [0], [0], [1], [0, 0, 1, 1], [], []>} : vector<192x28xf32>, vector<28x120xf32>, vector<192x120xf32> -> vector<192x120xf32>
    %32 = arith.addf %22, %31 : vector<192x120xf32>
    %33 = vector.extract_strided_slice %0 {offsets = [3, 0, 0], sizes = [24, 8, 28], strides = [1, 1, 1]} : vector<28x8x28xf32> to vector<24x8x28xf32>
    %34 = vector.shape_cast %33 : vector<24x8x28xf32> to vector<192x28xf32>
    %c3 = arith.constant 3 : index
    %c0_25 = arith.constant 0 : index
    %c0_26 = arith.constant 0 : index
    %35 = vector.load %arg2[%c3, %c0_25, %c0_26] : memref<5x28x120xf32, #tpu.memory_space<vmem>>, vector<1x28x120xf32>
    %36 = vector.shape_cast %35 : vector<1x28x120xf32> to vector<28x120xf32>
    %cst_27 = arith.constant dense<0.000000e+00> : vector<192x120xf32>
    %37 = tpu.matmul %34, %36, %cst_27 {dimension_numbers = #tpu.dot_dimension_numbers<[1], [0], [0], [1], [0, 0, 1, 1], [], []>} : vector<192x28xf32>, vector<28x120xf32>, vector<192x120xf32> -> vector<192x120xf32>
    %38 = arith.addf %28, %37 : vector<192x120xf32>
    %c3_28 = arith.constant 3 : index
    %c0_29 = arith.constant 0 : index
    %c0_30 = arith.constant 0 : index
    %39 = vector.load %arg3[%c3_28, %c0_29, %c0_30] : memref<5x28x120xf32, #tpu.memory_space<vmem>>, vector<1x28x120xf32>
    %40 = vector.shape_cast %39 : vector<1x28x120xf32> to vector<28x120xf32>
    %cst_31 = arith.constant dense<0.000000e+00> : vector<192x120xf32>
    %41 = tpu.matmul %34, %40, %cst_31 {dimension_numbers = #tpu.dot_dimension_numbers<[1], [0], [0], [1], [0, 0, 1, 1], [], []>} : vector<192x28xf32>, vector<28x120xf32>, vector<192x120xf32> -> vector<192x120xf32>
    %42 = arith.addf %32, %41 : vector<192x120xf32>
    %43 = vector.extract_strided_slice %0 {offsets = [4, 0, 0], sizes = [24, 8, 28], strides = [1, 1, 1]} : vector<28x8x28xf32> to vector<24x8x28xf32>
    %44 = vector.shape_cast %43 : vector<24x8x28xf32> to vector<192x28xf32>
    %c4 = arith.constant 4 : index
    %c0_32 = arith.constant 0 : index
    %c0_33 = arith.constant 0 : index
    %45 = vector.load %arg2[%c4, %c0_32, %c0_33] : memref<5x28x120xf32, #tpu.memory_space<vmem>>, vector<1x28x120xf32>
    %46 = vector.shape_cast %45 : vector<1x28x120xf32> to vector<28x120xf32>
    %cst_34 = arith.constant dense<0.000000e+00> : vector<192x120xf32>
    %47 = tpu.matmul %44, %46, %cst_34 {dimension_numbers = #tpu.dot_dimension_numbers<[1], [0], [0], [1], [0, 0, 1, 1], [], []>} : vector<192x28xf32>, vector<28x120xf32>, vector<192x120xf32> -> vector<192x120xf32>
    %48 = arith.addf %38, %47 : vector<192x120xf32>
    %c4_35 = arith.constant 4 : index
    %c0_36 = arith.constant 0 : index
    %c0_37 = arith.constant 0 : index
    %49 = vector.load %arg3[%c4_35, %c0_36, %c0_37] : memref<5x28x120xf32, #tpu.memory_space<vmem>>, vector<1x28x120xf32>
    %50 = vector.shape_cast %49 : vector<1x28x120xf32> to vector<28x120xf32>
    %cst_38 = arith.constant dense<0.000000e+00> : vector<192x120xf32>
    %51 = tpu.matmul %44, %50, %cst_38 {dimension_numbers = #tpu.dot_dimension_numbers<[1], [0], [0], [1], [0, 0, 1, 1], [], []>} : vector<192x28xf32>, vector<28x120xf32>, vector<192x120xf32> -> vector<192x120xf32>
    %52 = arith.addf %42, %51 : vector<192x120xf32>
    %53 = arith.maximumf %48, %52 : vector<192x120xf32>
    %c0_39 = arith.constant 0 : index
    %c0_40 = arith.constant 0 : index
    %54 = vector.load %arg4[%c0_39, %c0_40] : memref<1x120xf32, #tpu.memory_space<vmem>>, vector<1x120xf32>
    %55 = vector.broadcast %54 : vector<1x120xf32> to vector<192x120xf32>
    %56 = arith.addf %53, %55 : vector<192x120xf32>
    %57 = vector.shape_cast %56 : vector<192x120xf32> to vector<12x2x8x120xf32>
    %58 = vector.extract_strided_slice %57 {offsets = [0, 0, 0, 0], sizes = [12, 1, 8, 120], strides = [1, 1, 1, 1]} : vector<12x2x8x120xf32> to vector<12x1x8x120xf32>
    %59 = vector.shape_cast %58 : vector<12x1x8x120xf32> to vector<12x8x120xf32>
    %60 = vector.extract_strided_slice %57 {offsets = [0, 1, 0, 0], sizes = [12, 1, 8, 120], strides = [1, 1, 1, 1]} : vector<12x2x8x120xf32> to vector<12x1x8x120xf32>
    %61 = vector.shape_cast %60 : vector<12x1x8x120xf32> to vector<12x8x120xf32>
    %62 = arith.maximumf %59, %61 : vector<12x8x120xf32>
    %cst_41 = arith.constant 0.000000e+00 : f32
    %63 = vector.broadcast %cst_41 : f32 to vector<12x8x120xf32>
    %64 = arith.maximumf %62, %63 : vector<12x8x120xf32>
    %cst_42 = arith.constant 0.000000e+00 : f32
    %65 = vector.broadcast %cst_42 : f32 to vector<64x80xf32>
    %cst_43 = arith.constant 0.000000e+00 : f32
    %66 = vector.broadcast %cst_43 : f32 to vector<64x80xf32>
    %67 = vector.extract_strided_slice %64 {offsets = [0, 0, 0], sizes = [8, 8, 120], strides = [1, 1, 1]} : vector<12x8x120xf32> to vector<8x8x120xf32>
    %68 = vector.shape_cast %67 : vector<8x8x120xf32> to vector<64x120xf32>
    %c0_44 = arith.constant 0 : index
    %c0_45 = arith.constant 0 : index
    %c0_46 = arith.constant 0 : index
    %69 = vector.load %arg5[%c0_44, %c0_45, %c0_46] : memref<5x120x80xf32, #tpu.memory_space<vmem>>, vector<1x120x80xf32>
    %70 = vector.shape_cast %69 : vector<1x120x80xf32> to vector<120x80xf32>
    %cst_47 = arith.constant dense<0.000000e+00> : vector<64x80xf32>
    %71 = tpu.matmul %68, %70, %cst_47 {dimension_numbers = #tpu.dot_dimension_numbers<[1], [0], [0], [1], [0, 0, 1, 1], [], []>} : vector<64x120xf32>, vector<120x80xf32>, vector<64x80xf32> -> vector<64x80xf32>
    %72 = arith.addf %65, %71 : vector<64x80xf32>
    %c0_48 = arith.constant 0 : index
    %c0_49 = arith.constant 0 : index
    %c0_50 = arith.constant 0 : index
    %73 = vector.load %arg6[%c0_48, %c0_49, %c0_50] : memref<5x120x80xf32, #tpu.memory_space<vmem>>, vector<1x120x80xf32>
    %74 = vector.shape_cast %73 : vector<1x120x80xf32> to vector<120x80xf32>
    %cst_51 = arith.constant dense<0.000000e+00> : vector<64x80xf32>
    %75 = tpu.matmul %68, %74, %cst_51 {dimension_numbers = #tpu.dot_dimension_numbers<[1], [0], [0], [1], [0, 0, 1, 1], [], []>} : vector<64x120xf32>, vector<120x80xf32>, vector<64x80xf32> -> vector<64x80xf32>
    %76 = arith.addf %66, %75 : vector<64x80xf32>
    %77 = vector.extract_strided_slice %64 {offsets = [1, 0, 0], sizes = [8, 8, 120], strides = [1, 1, 1]} : vector<12x8x120xf32> to vector<8x8x120xf32>
    %78 = vector.shape_cast %77 : vector<8x8x120xf32> to vector<64x120xf32>
    %c1_52 = arith.constant 1 : index
    %c0_53 = arith.constant 0 : index
    %c0_54 = arith.constant 0 : index
    %79 = vector.load %arg5[%c1_52, %c0_53, %c0_54] : memref<5x120x80xf32, #tpu.memory_space<vmem>>, vector<1x120x80xf32>
    %80 = vector.shape_cast %79 : vector<1x120x80xf32> to vector<120x80xf32>
    %cst_55 = arith.constant dense<0.000000e+00> : vector<64x80xf32>
    %81 = tpu.matmul %78, %80, %cst_55 {dimension_numbers = #tpu.dot_dimension_numbers<[1], [0], [0], [1], [0, 0, 1, 1], [], []>} : vector<64x120xf32>, vector<120x80xf32>, vector<64x80xf32> -> vector<64x80xf32>
    %82 = arith.addf %72, %81 : vector<64x80xf32>
    %c1_56 = arith.constant 1 : index
    %c0_57 = arith.constant 0 : index
    %c0_58 = arith.constant 0 : index
    %83 = vector.load %arg6[%c1_56, %c0_57, %c0_58] : memref<5x120x80xf32, #tpu.memory_space<vmem>>, vector<1x120x80xf32>
    %84 = vector.shape_cast %83 : vector<1x120x80xf32> to vector<120x80xf32>
    %cst_59 = arith.constant dense<0.000000e+00> : vector<64x80xf32>
    %85 = tpu.matmul %78, %84, %cst_59 {dimension_numbers = #tpu.dot_dimension_numbers<[1], [0], [0], [1], [0, 0, 1, 1], [], []>} : vector<64x120xf32>, vector<120x80xf32>, vector<64x80xf32> -> vector<64x80xf32>
    %86 = arith.addf %76, %85 : vector<64x80xf32>
    %87 = vector.extract_strided_slice %64 {offsets = [2, 0, 0], sizes = [8, 8, 120], strides = [1, 1, 1]} : vector<12x8x120xf32> to vector<8x8x120xf32>
    %88 = vector.shape_cast %87 : vector<8x8x120xf32> to vector<64x120xf32>
    %c2_60 = arith.constant 2 : index
    %c0_61 = arith.constant 0 : index
    %c0_62 = arith.constant 0 : index
    %89 = vector.load %arg5[%c2_60, %c0_61, %c0_62] : memref<5x120x80xf32, #tpu.memory_space<vmem>>, vector<1x120x80xf32>
    %90 = vector.shape_cast %89 : vector<1x120x80xf32> to vector<120x80xf32>
    %cst_63 = arith.constant dense<0.000000e+00> : vector<64x80xf32>
    %91 = tpu.matmul %88, %90, %cst_63 {dimension_numbers = #tpu.dot_dimension_numbers<[1], [0], [0], [1], [0, 0, 1, 1], [], []>} : vector<64x120xf32>, vector<120x80xf32>, vector<64x80xf32> -> vector<64x80xf32>
    %92 = arith.addf %82, %91 : vector<64x80xf32>
    %c2_64 = arith.constant 2 : index
    %c0_65 = arith.constant 0 : index
    %c0_66 = arith.constant 0 : index
    %93 = vector.load %arg6[%c2_64, %c0_65, %c0_66] : memref<5x120x80xf32, #tpu.memory_space<vmem>>, vector<1x120x80xf32>
    %94 = vector.shape_cast %93 : vector<1x120x80xf32> to vector<120x80xf32>
    %cst_67 = arith.constant dense<0.000000e+00> : vector<64x80xf32>
    %95 = tpu.matmul %88, %94, %cst_67 {dimension_numbers = #tpu.dot_dimension_numbers<[1], [0], [0], [1], [0, 0, 1, 1], [], []>} : vector<64x120xf32>, vector<120x80xf32>, vector<64x80xf32> -> vector<64x80xf32>
    %96 = arith.addf %86, %95 : vector<64x80xf32>
    %97 = vector.extract_strided_slice %64 {offsets = [3, 0, 0], sizes = [8, 8, 120], strides = [1, 1, 1]} : vector<12x8x120xf32> to vector<8x8x120xf32>
    %98 = vector.shape_cast %97 : vector<8x8x120xf32> to vector<64x120xf32>
    %c3_68 = arith.constant 3 : index
    %c0_69 = arith.constant 0 : index
    %c0_70 = arith.constant 0 : index
    %99 = vector.load %arg5[%c3_68, %c0_69, %c0_70] : memref<5x120x80xf32, #tpu.memory_space<vmem>>, vector<1x120x80xf32>
    %100 = vector.shape_cast %99 : vector<1x120x80xf32> to vector<120x80xf32>
    %cst_71 = arith.constant dense<0.000000e+00> : vector<64x80xf32>
    %101 = tpu.matmul %98, %100, %cst_71 {dimension_numbers = #tpu.dot_dimension_numbers<[1], [0], [0], [1], [0, 0, 1, 1], [], []>} : vector<64x120xf32>, vector<120x80xf32>, vector<64x80xf32> -> vector<64x80xf32>
    %102 = arith.addf %92, %101 : vector<64x80xf32>
    %c3_72 = arith.constant 3 : index
    %c0_73 = arith.constant 0 : index
    %c0_74 = arith.constant 0 : index
    %103 = vector.load %arg6[%c3_72, %c0_73, %c0_74] : memref<5x120x80xf32, #tpu.memory_space<vmem>>, vector<1x120x80xf32>
    %104 = vector.shape_cast %103 : vector<1x120x80xf32> to vector<120x80xf32>
    %cst_75 = arith.constant dense<0.000000e+00> : vector<64x80xf32>
    %105 = tpu.matmul %98, %104, %cst_75 {dimension_numbers = #tpu.dot_dimension_numbers<[1], [0], [0], [1], [0, 0, 1, 1], [], []>} : vector<64x120xf32>, vector<120x80xf32>, vector<64x80xf32> -> vector<64x80xf32>
    %106 = arith.addf %96, %105 : vector<64x80xf32>
    %107 = vector.extract_strided_slice %64 {offsets = [4, 0, 0], sizes = [8, 8, 120], strides = [1, 1, 1]} : vector<12x8x120xf32> to vector<8x8x120xf32>
    %108 = vector.shape_cast %107 : vector<8x8x120xf32> to vector<64x120xf32>
    %c4_76 = arith.constant 4 : index
    %c0_77 = arith.constant 0 : index
    %c0_78 = arith.constant 0 : index
    %109 = vector.load %arg5[%c4_76, %c0_77, %c0_78] : memref<5x120x80xf32, #tpu.memory_space<vmem>>, vector<1x120x80xf32>
    %110 = vector.shape_cast %109 : vector<1x120x80xf32> to vector<120x80xf32>
    %cst_79 = arith.constant dense<0.000000e+00> : vector<64x80xf32>
    %111 = tpu.matmul %108, %110, %cst_79 {dimension_numbers = #tpu.dot_dimension_numbers<[1], [0], [0], [1], [0, 0, 1, 1], [], []>} : vector<64x120xf32>, vector<120x80xf32>, vector<64x80xf32> -> vector<64x80xf32>
    %112 = arith.addf %102, %111 : vector<64x80xf32>
    %c4_80 = arith.constant 4 : index
    %c0_81 = arith.constant 0 : index
    %c0_82 = arith.constant 0 : index
    %113 = vector.load %arg6[%c4_80, %c0_81, %c0_82] : memref<5x120x80xf32, #tpu.memory_space<vmem>>, vector<1x120x80xf32>
    %114 = vector.shape_cast %113 : vector<1x120x80xf32> to vector<120x80xf32>
    %cst_83 = arith.constant dense<0.000000e+00> : vector<64x80xf32>
    %115 = tpu.matmul %108, %114, %cst_83 {dimension_numbers = #tpu.dot_dimension_numbers<[1], [0], [0], [1], [0, 0, 1, 1], [], []>} : vector<64x120xf32>, vector<120x80xf32>, vector<64x80xf32> -> vector<64x80xf32>
    %116 = arith.addf %106, %115 : vector<64x80xf32>
    %117 = arith.maximumf %112, %116 : vector<64x80xf32>
    %c0_84 = arith.constant 0 : index
    %c0_85 = arith.constant 0 : index
    %118 = vector.load %arg7[%c0_84, %c0_85] : memref<1x80xf32, #tpu.memory_space<vmem>>, vector<1x80xf32>
    %119 = vector.broadcast %118 : vector<1x80xf32> to vector<64x80xf32>
    %120 = arith.addf %117, %119 : vector<64x80xf32>
    %121 = vector.shape_cast %120 : vector<64x80xf32> to vector<4x2x8x80xf32>
    %122 = vector.extract_strided_slice %121 {offsets = [0, 0, 0, 0], sizes = [4, 1, 8, 80], strides = [1, 1, 1, 1]} : vector<4x2x8x80xf32> to vector<4x1x8x80xf32>
    %123 = vector.shape_cast %122 : vector<4x1x8x80xf32> to vector<4x8x80xf32>
    %124 = vector.extract_strided_slice %121 {offsets = [0, 1, 0, 0], sizes = [4, 1, 8, 80], strides = [1, 1, 1, 1]} : vector<4x2x8x80xf32> to vector<4x1x8x80xf32>
    %125 = vector.shape_cast %124 : vector<4x1x8x80xf32> to vector<4x8x80xf32>
    %126 = arith.maximumf %123, %125 : vector<4x8x80xf32>
    %cst_86 = arith.constant 0.000000e+00 : f32
    %127 = vector.broadcast %cst_86 : f32 to vector<4x8x80xf32>
    %128 = arith.maximumf %126, %127 : vector<4x8x80xf32>
    %cst_87 = arith.constant 0.000000e+00 : f32
    %129 = vector.broadcast %cst_87 : f32 to vector<8x10xf32>
    %130 = vector.extract_strided_slice %128 {offsets = [0, 0, 0], sizes = [1, 8, 80], strides = [1, 1, 1]} : vector<4x8x80xf32> to vector<1x8x80xf32>
    %131 = vector.shape_cast %130 : vector<1x8x80xf32> to vector<8x80xf32>
    %c0_88 = arith.constant 0 : index
    %c0_89 = arith.constant 0 : index
    %c0_90 = arith.constant 0 : index
    %132 = vector.load %arg8[%c0_88, %c0_89, %c0_90] : memref<4x80x10xf32, #tpu.memory_space<vmem>>, vector<1x80x10xf32>
    %133 = vector.shape_cast %132 : vector<1x80x10xf32> to vector<80x10xf32>
    %cst_91 = arith.constant dense<0.000000e+00> : vector<8x10xf32>
    %134 = tpu.matmul %131, %133, %cst_91 {dimension_numbers = #tpu.dot_dimension_numbers<[1], [0], [0], [1], [0, 0, 1, 1], [], []>} : vector<8x80xf32>, vector<80x10xf32>, vector<8x10xf32> -> vector<8x10xf32>
    %135 = arith.addf %129, %134 : vector<8x10xf32>
    %136 = vector.extract_strided_slice %128 {offsets = [1, 0, 0], sizes = [1, 8, 80], strides = [1, 1, 1]} : vector<4x8x80xf32> to vector<1x8x80xf32>
    %137 = vector.shape_cast %136 : vector<1x8x80xf32> to vector<8x80xf32>
    %c1_92 = arith.constant 1 : index
    %c0_93 = arith.constant 0 : index
    %c0_94 = arith.constant 0 : index
    %138 = vector.load %arg8[%c1_92, %c0_93, %c0_94] : memref<4x80x10xf32, #tpu.memory_space<vmem>>, vector<1x80x10xf32>
    %139 = vector.shape_cast %138 : vector<1x80x10xf32> to vector<80x10xf32>
    %cst_95 = arith.constant dense<0.000000e+00> : vector<8x10xf32>
    %140 = tpu.matmul %137, %139, %cst_95 {dimension_numbers = #tpu.dot_dimension_numbers<[1], [0], [0], [1], [0, 0, 1, 1], [], []>} : vector<8x80xf32>, vector<80x10xf32>, vector<8x10xf32> -> vector<8x10xf32>
    %141 = arith.addf %135, %140 : vector<8x10xf32>
    %142 = vector.extract_strided_slice %128 {offsets = [2, 0, 0], sizes = [1, 8, 80], strides = [1, 1, 1]} : vector<4x8x80xf32> to vector<1x8x80xf32>
    %143 = vector.shape_cast %142 : vector<1x8x80xf32> to vector<8x80xf32>
    %c2_96 = arith.constant 2 : index
    %c0_97 = arith.constant 0 : index
    %c0_98 = arith.constant 0 : index
    %144 = vector.load %arg8[%c2_96, %c0_97, %c0_98] : memref<4x80x10xf32, #tpu.memory_space<vmem>>, vector<1x80x10xf32>
    %145 = vector.shape_cast %144 : vector<1x80x10xf32> to vector<80x10xf32>
    %cst_99 = arith.constant dense<0.000000e+00> : vector<8x10xf32>
    %146 = tpu.matmul %143, %145, %cst_99 {dimension_numbers = #tpu.dot_dimension_numbers<[1], [0], [0], [1], [0, 0, 1, 1], [], []>} : vector<8x80xf32>, vector<80x10xf32>, vector<8x10xf32> -> vector<8x10xf32>
    %147 = arith.addf %141, %146 : vector<8x10xf32>
    %148 = vector.extract_strided_slice %128 {offsets = [3, 0, 0], sizes = [1, 8, 80], strides = [1, 1, 1]} : vector<4x8x80xf32> to vector<1x8x80xf32>
    %149 = vector.shape_cast %148 : vector<1x8x80xf32> to vector<8x80xf32>
    %c3_100 = arith.constant 3 : index
    %c0_101 = arith.constant 0 : index
    %c0_102 = arith.constant 0 : index
    %150 = vector.load %arg8[%c3_100, %c0_101, %c0_102] : memref<4x80x10xf32, #tpu.memory_space<vmem>>, vector<1x80x10xf32>
    %151 = vector.shape_cast %150 : vector<1x80x10xf32> to vector<80x10xf32>
    %cst_103 = arith.constant dense<0.000000e+00> : vector<8x10xf32>
    %152 = tpu.matmul %149, %151, %cst_103 {dimension_numbers = #tpu.dot_dimension_numbers<[1], [0], [0], [1], [0, 0, 1, 1], [], []>} : vector<8x80xf32>, vector<80x10xf32>, vector<8x10xf32> -> vector<8x10xf32>
    %153 = arith.addf %147, %152 : vector<8x10xf32>
    %c0_104 = arith.constant 0 : index
    %c0_105 = arith.constant 0 : index
    %154 = vector.load %arg9[%c0_104, %c0_105] : memref<1x10xf32, #tpu.memory_space<vmem>>, vector<1x10xf32>
    %155 = vector.broadcast %154 : vector<1x10xf32> to vector<8x10xf32>
    %156 = arith.addf %153, %155 : vector<8x10xf32>
    %c0_106 = arith.constant 0 : index
    %c0_107 = arith.constant 0 : index
    %157 = vector.load %arg10[%c0_106, %c0_107] : memref<8x10xf32, #tpu.memory_space<vmem>>, vector<8x10xf32>
    tpu.vector_store %arg10[%c0_106, %c0_107], %156 {strides = array<i32>} : memref<8x10xf32, #tpu.memory_space<vmem>>, vector<8x10xf32>,
    return
  }
  func.func @transform_0(%arg0: i32) -> (i32, i32, i32) {
    %c0_i32 = arith.constant 0 : i32
    %c0_i32_0 = arith.constant 0 : i32
    %c0_i32_1 = arith.constant 0 : i32
    return %c0_i32, %arg0, %c0_i32_0 : i32, i32, i32
  }
  func.func @transform_1(%arg0: i32) -> (i32, i32, i32) {
    %c0_i32 = arith.constant 0 : i32
    %c0_i32_0 = arith.constant 0 : i32
    %c0_i32_1 = arith.constant 0 : i32
    %c0_i32_2 = arith.constant 0 : i32
    return %c0_i32, %c0_i32_0, %c0_i32_1 : i32, i32, i32
  }
  func.func @transform_2(%arg0: i32) -> (i32, i32, i32) {
    %c0_i32 = arith.constant 0 : i32
    %c0_i32_0 = arith.constant 0 : i32
    %c0_i32_1 = arith.constant 0 : i32
    %c0_i32_2 = arith.constant 0 : i32
    return %c0_i32, %c0_i32_0, %c0_i32_1 : i32, i32, i32
  }
  func.func @transform_3(%arg0: i32) -> (i32, i32) {
    %c0_i32 = arith.constant 0 : i32
    %c0_i32_0 = arith.constant 0 : i32
    %c0_i32_1 = arith.constant 0 : i32
    return %c0_i32, %c0_i32_0 : i32, i32
  }
  func.func @transform_4(%arg0: i32) -> (i32, i32, i32) {
    %c0_i32 = arith.constant 0 : i32
    %c0_i32_0 = arith.constant 0 : i32
    %c0_i32_1 = arith.constant 0 : i32
    %c0_i32_2 = arith.constant 0 : i32
    return %c0_i32, %c0_i32_0, %c0_i32_1 : i32, i32, i32
  }
  func.func @transform_5(%arg0: i32) -> (i32, i32, i32) {
    %c0_i32 = arith.constant 0 : i32
    %c0_i32_0 = arith.constant 0 : i32
    %c0_i32_1 = arith.constant 0 : i32
    %c0_i32_2 = arith.constant 0 : i32
    return %c0_i32, %c0_i32_0, %c0_i32_1 : i32, i32, i32
  }
  func.func @transform_6(%arg0: i32) -> (i32, i32) {
    %c0_i32 = arith.constant 0 : i32
    %c0_i32_0 = arith.constant 0 : i32
    %c0_i32_1 = arith.constant 0 : i32
    return %c0_i32, %c0_i32_0 : i32, i32
  }
  func.func @transform_7(%arg0: i32) -> (i32, i32, i32) {
    %c0_i32 = arith.constant 0 : i32
    %c0_i32_0 = arith.constant 0 : i32
    %c0_i32_1 = arith.constant 0 : i32
    %c0_i32_2 = arith.constant 0 : i32
    return %c0_i32, %c0_i32_0, %c0_i32_1 : i32, i32, i32
  }
  func.func @transform_8(%arg0: i32) -> (i32, i32) {
    %c0_i32 = arith.constant 0 : i32
    %c0_i32_0 = arith.constant 0 : i32
    %c0_i32_1 = arith.constant 0 : i32
    return %c0_i32, %c0_i32_0 : i32, i32
  }
  func.func @transform_9(%arg0: i32) -> (i32, i32) {
    %c0_i32 = arith.constant 0 : i32
    %c0_i32_0 = arith.constant 0 : i32
    return %arg0, %c0_i32 : i32, i32
  }
}

</mosaic_0001>

<llo_original>
// kernel: lenet_forward.1
$region0: #{lenet_forward.1}
  #allocation0 [shape = 'u32[]', space=smem, size = 0x4, offset = 0x4, fixed_abs, tag = 'smem constant byte address 0x4 - core index']
  #allocation1 [shape = 'u32[144,128]{1,0:T(1,128)}', space=vmem, size = 0x12000, scoped, tag = 'internal scratch']
  %s0 = inlined_call_operand.vmem [shape: f32[28,8,28], index: 0, kind: input, shape index: {}]
  %s1 = inlined_call_operand.vmem [shape: f32[5,28,120], index: 1, kind: input, shape index: {}]
  %s2 = inlined_call_operand.vmem [shape: f32[5,28,120], index: 2, kind: input, shape index: {}]
  %s3 = inlined_call_operand.vmem [shape: f32[1,120], index: 3, kind: input, shape index: {}]
  %s4 = inlined_call_operand.vmem [shape: f32[5,120,80], index: 4, kind: input, shape index: {}]
  %s5 = inlined_call_operand.vmem [shape: f32[5,120,80], index: 5, kind: input, shape index: {}]
  %s6 = inlined_call_operand.vmem [shape: f32[1,80], index: 6, kind: input, shape index: {}]
  %s7 = inlined_call_operand.vmem [shape: f32[4,80,10], index: 7, kind: input, shape index: {}]
  %s8 = inlined_call_operand.vmem [shape: f32[1,10], index: 8, kind: input, shape index: {}]
  %s9 = inlined_call_operand.vmem [shape: f32[8,10], index: 9, kind: output, shape index: {}]
  %s10 = sld [smem:[#allocation0]]
  $region46: #{lenet_forward.1} parent=0
    _
  %s12 = ssub.s32 1, %s10
  %s13 = scalar_select 0, %s12, %s10
  // Predicated region
  $region2: #{lenet_forward.1} parent=0 // pred_check
    _
  $region3: #{lenet_forward.1} parent=0 // pred_check_branch
    %15 = sbr.rel (0) target = $region5
  $region4: #{lenet_forward.1} parent=0 // pred_region
    _
  $region5: #{lenet_forward.1} parent=0 // pred_fallthru
    _
  // Predicated region
  $region6: #{lenet_forward.1} parent=0 // pred_check
    _
  $region7: #{lenet_forward.1} parent=0 // pred_check_branch
    %17 = sbr.rel (0) target = $region9
  $region8: #{lenet_forward.1} parent=0 // pred_region
    _
  $region9: #{lenet_forward.1} parent=0 // pred_fallthru
    _
  // Predicated region
  $region10: #{lenet_forward.1} parent=0 // pred_check
    _
  $region11: #{lenet_forward.1} parent=0 // pred_check_branch
    %19 = sbr.rel (0) target = $region13
  $region12: #{lenet_forward.1} parent=0 // pred_region
    _
  $region13: #{lenet_forward.1} parent=0 // pred_fallthru
    _
  // Predicated region
  $region14: #{lenet_forward.1} parent=0 // pred_check
    _
  $region15: #{lenet_forward.1} parent=0 // pred_check_branch
    %21 = sbr.rel (0) target = $region17
  $region16: #{lenet_forward.1} parent=0 // pred_region
    _
  $region17: #{lenet_forward.1} parent=0 // pred_fallthru
    _
  // Predicated region
  $region18: #{lenet_forward.1} parent=0 // pred_check
    _
  $region19: #{lenet_forward.1} parent=0 // pred_check_branch
    %23 = sbr.rel (0) target = $region21
  $region20: #{lenet_forward.1} parent=0 // pred_region
    _
  $region21: #{lenet_forward.1} parent=0 // pred_fallthru
    _
  // Predicated region
  $region22: #{lenet_forward.1} parent=0 // pred_check
    _
  $region23: #{lenet_forward.1} parent=0 // pred_check_branch
    %25 = sbr.rel (0) target = $region25
  $region24: #{lenet_forward.1} parent=0 // pred_region
    _
  $region25: #{lenet_forward.1} parent=0 // pred_fallthru
    _
  // Predicated region
  $region26: #{lenet_forward.1} parent=0 // pred_check
    _
  $region27: #{lenet_forward.1} parent=0 // pred_check_branch
    %27 = sbr.rel (0) target = $region29
  $region28: #{lenet_forward.1} parent=0 // pred_region
    _
  $region29: #{lenet_forward.1} parent=0 // pred_fallthru
    _
  // Predicated region
  $region30: #{lenet_forward.1} parent=0 // pred_check
    _
  $region31: #{lenet_forward.1} parent=0 // pred_check_branch
    %29 = sbr.rel (0) target = $region33
  $region32: #{lenet_forward.1} parent=0 // pred_region
    _
  $region33: #{lenet_forward.1} parent=0 // pred_fallthru
    _
  // Predicated region
  $region34: #{lenet_forward.1} parent=0 // pred_check
    _
  $region35: #{lenet_forward.1} parent=0 // pred_check_branch
    %31 = sbr.rel (0) target = $region37
  $region36: #{lenet_forward.1} parent=0 // pred_region
    _
  $region37: #{lenet_forward.1} parent=0 // pred_fallthru
    _
  %v32 = vld [vmem:[%s0] sm:$0xff]
  %v33 = vld [vmem:[%s0 + $0x8] sm:$0xff]
  %v34 = vld [vmem:[%s0 + $0x10] sm:$0xff]
  %v35 = vld [vmem:[%s0 + $0x18] sm:$0xff]
  %v36 = vld [vmem:[%s0 + $0x20] sm:$0xff]
  %v37 = vld [vmem:[%s0 + $0x28] sm:$0xff]
  %v38 = vld [vmem:[%s0 + $0x30] sm:$0xff]
  %v39 = vld [vmem:[%s0 + $0x38] sm:$0xff]
  %v40 = vld [vmem:[%s0 + $0x40] sm:$0xff]
  %v41 = vld [vmem:[%s0 + $0x48] sm:$0xff]
  %v42 = vld [vmem:[%s0 + $0x50] sm:$0xff]
  %v43 = vld [vmem:[%s0 + $0x58] sm:$0xff]
  %v44 = vld [vmem:[%s0 + $0x60] sm:$0xff]
  %v45 = vld [vmem:[%s0 + $0x68] sm:$0xff]
  %v46 = vld [vmem:[%s0 + $0x70] sm:$0xff]
  %v47 = vld [vmem:[%s0 + $0x78] sm:$0xff]
  %v48 = vld [vmem:[%s0 + $0x80] sm:$0xff]
  %v49 = vld [vmem:[%s0 + $0x88] sm:$0xff]
  %v50 = vld [vmem:[%s0 + $0x90] sm:$0xff]
  %v51 = vld [vmem:[%s0 + $0x98] sm:$0xff]
  %v52 = vld [vmem:[%s0 + $0xa0] sm:$0xff]
  %v53 = vld [vmem:[%s0 + $0xa8] sm:$0xff]
  %v54 = vld [vmem:[%s0 + $0xb0] sm:$0xff]
  %v55 = vld [vmem:[%s0 + $0xb8] sm:$0xff]
  %v56 = vld [vmem:[%s0 + $0xc0] sm:$0xff]
  %v57 = vld [vmem:[%s0 + $0xc8] sm:$0xff]
  %v58 = vld [vmem:[%s0 + $0xd0] sm:$0xff]
  %v59 = vld [vmem:[%s0 + $0xd8] sm:$0xff]
  %v60 = vld [vmem:[%s1] sm:$0xff]
  %v61 = vld [vmem:[%s1 + $0x8] sm:$0xff]
  %v62 = vld [vmem:[%s1 + $0x10] sm:$0xff]
  %v63 = vld [vmem:[%s1 + $0x18] sm:$0xf]
  %v64 = vld [vmem:[%s2] sm:$0xff]
  %v65 = vld [vmem:[%s2 + $0x8] sm:$0xff]
  %v66 = vld [vmem:[%s2 + $0x10] sm:$0xff]
  %v67 = vld [vmem:[%s2 + $0x18] sm:$0xf]
  %s68 = scalar_lea.vmem %s1, 32
  %v69 = vld [vmem:[%s68] sm:$0xff]
  %v70 = vld [vmem:[%s68 + $0x8] sm:$0xff]
  %v71 = vld [vmem:[%s68 + $0x10] sm:$0xff]
  %v72 = vld [vmem:[%s68 + $0x18] sm:$0xf]
  %vm73 = vcmask 228352
  %v75 = vsel %vm73, %v33, 0
  %v78 = vsel %vm73, %v34, 0
  %v81 = vsel %vm73, %v35, 0
  %v84 = vsel %vm73, %v36, 0
  %v87 = vsel %vm73, %v37, 0
  %v90 = vsel %vm73, %v38, 0
  %v93 = vsel %vm73, %v39, 0
  %v96 = vsel %vm73, %v40, 0
  %v99 = vsel %vm73, %v41, 0
  %v102 = vsel %vm73, %v42, 0
  %v105 = vsel %vm73, %v43, 0
  %v108 = vsel %vm73, %v44, 0
  %v111 = vsel %vm73, %v45, 0
  %v114 = vsel %vm73, %v46, 0
  %v117 = vsel %vm73, %v47, 0
  %v120 = vsel %vm73, %v48, 0
  %v123 = vsel %vm73, %v49, 0
  %v126 = vsel %vm73, %v50, 0
  %v129 = vsel %vm73, %v51, 0
  %v132 = vsel %vm73, %v52, 0
  %v135 = vsel %vm73, %v53, 0
  %v138 = vsel %vm73, %v54, 0
  %v141 = vsel %vm73, %v55, 0
  %v144 = vsel %vm73, %v56, 0
  %vm146 = vcmask 1043456
  %v148 = vsel %vm146, %v72, 0
  %150 = vmatprep.subr.mxu0 0.0
  %151 = vmatpush1.msra.mxu0 %v69
  %152 = vmatprep.subr.mxu0 0.0
  %153 = vmatpush1.msra.mxu0 %v70
  %154 = vmatprep.subr.mxu0 0.0
  %155 = vmatpush1.msra.mxu0 %v71
  %156 = vmatprep.subr.mxu0 0.0
  %157 = vmatpush1.msra.mxu0 %v148
  %158 = vmatprep.subr.mxu0 0.0
  %159 = vmatpush1.msra.mxu0 0.0
  %160 = vmatprep.subr.mxu0 0.0
  %161 = vmatpush1.msra.mxu0 0.0
  %162 = vmatprep.subr.mxu0 0.0
  %163 = vmatpush1.msra.mxu0 0.0
  %164 = vmatprep.subr.mxu0 0.0
  %165 = vmatpush1.msra.mxu0 0.0
  %166 = vmatprep.subr.mxu0 0.0
  %167 = vmatpush1.msra.mxu0 0.0
  %168 = vmatprep.subr.mxu0 0.0
  %169 = vmatpush1.msra.mxu0 0.0
  %170 = vmatprep.subr.mxu0 0.0
  %171 = vmatpush1.msra.mxu0 0.0
  %172 = vmatprep.subr.mxu0 0.0
  %173 = vmatpush1.msra.mxu0 0.0
  %174 = vmatprep.subr.mxu0 0.0
  %175 = vmatpush1.msra.mxu0 0.0
  %176 = vmatprep.subr.mxu0 0.0
  %177 = vmatpush1.msra.mxu0 0.0
  %178 = vmatprep.subr.mxu0 0.0
  %179 = vmatpush1.msra.mxu0 0.0
  %180 = vmatprep.subr.mxu0 0.0
  %181 = vmatpush1.msra.mxu0 0.0
  %182 = vmatprep.subr.mxu0 0.0
  %183 = vmatpush1.msra.mxu0 0.0
  %184 = vmatprep.subr.mxu0 0.0
  %185 = vmatpush1.msra.mxu0 0.0
  %186 = vmatprep.subr.mxu0 0.0
  %187 = vmatpush1.msra.mxu0 0.0
  %188 = vmatprep.subr.mxu0 0.0
  %189 = vmatpush1.msra.mxu0 0.0
  %190 = vmatprep.subr.mxu0 0.0
  %191 = vmatpush1.msra.mxu0 0.0
  %192 = vmatprep.subr.mxu0 0.0
  %193 = vmatpush1.msra.mxu0 0.0
  %194 = vmatprep.subr.mxu0 0.0
  %195 = vmatpush1.msra.mxu0 0.0
  %196 = vmatprep.subr.mxu0 0.0
  %197 = vmatpush1.msra.mxu0 0.0
  %198 = vmatprep.subr.mxu0 0.0
  %199 = vmatpush1.msra.mxu0 0.0
  %200 = vmatprep.subr.mxu0 0.0
  %201 = vmatpush1.msra.mxu0 0.0
  %202 = vmatprep.subr.mxu0 0.0
  %203 = vmatpush1.msra.mxu0 0.0
  %204 = vmatprep.subr.mxu0 0.0
  %205 = vmatpush1.msra.mxu0 0.0
  %206 = vmatprep.subr.mxu0 0.0
  %207 = vmatpush1.msra.mxu0 0.0
  %208 = vmatprep.subr.mxu0 0.0
  %209 = vmatpush1.msra.mxu0 0.0
  %210 = vmatprep.subr.mxu0 0.0
  %211 = vmatpush1.msra.mxu0 0.0
  %212 = vmatprep.subr.mxu0 0.0
  %213 = vmatpush1.msra.mxu0 0.0
  %214 = vmatprep.mubr.f32.mxu0 0.0
  %215 = vmatmul.mubr.f32.gmra.mrb[0].mxu0 %v75
  %v216 = vpop.f32.mrb[0].mxu0
  %v217 = vadd.f32 0.0, %v216
  %v218 = vpop.f32.mrb[0].mxu0
  %219 = vmatprep.mubr.f32.mxu0 0.0
  %220 = vmatmul.mubr.f32.gmra.mrb[0].mxu0 %v78
  %v221 = vpop.f32.mrb[0].mxu0
  %v222 = vadd.f32 0.0, %v221
  %v223 = vpop.f32.mrb[0].mxu0
  %224 = vmatprep.mubr.f32.mxu0 0.0
  %225 = vmatmul.mubr.f32.gmra.mrb[0].mxu0 %v81
  %v226 = vpop.f32.mrb[0].mxu0
  %v227 = vadd.f32 0.0, %v226
  %v228 = vpop.f32.mrb[0].mxu0
  %229 = vmatprep.mubr.f32.mxu0 0.0
  %230 = vmatmul.mubr.f32.gmra.mrb[0].mxu0 %v84
  %v231 = vpop.f32.mrb[0].mxu0
  %v232 = vadd.f32 0.0, %v231
  %v233 = vpop.f32.mrb[0].mxu0
  %234 = vmatprep.mubr.f32.mxu0 0.0
  %235 = vmatmul.mubr.f32.gmra.mrb[0].mxu0 %v87
  %v236 = vpop.f32.mrb[0].mxu0
  %v237 = vadd.f32 0.0, %v236
  %v238 = vpop.f32.mrb[0].mxu0
  %239 = vmatprep.mubr.f32.mxu0 0.0
  %240 = vmatmul.mubr.f32.gmra.mrb[0].mxu0 %v90
  %v241 = vpop.f32.mrb[0].mxu0
  %v242 = vadd.f32 0.0, %v241
  %v243 = vpop.f32.mrb[0].mxu0
  %244 = vmatprep.mubr.f32.mxu0 0.0
  %245 = vmatmul.mubr.f32.gmra.mrb[0].mxu0 %v93
  %v246 = vpop.f32.mrb[0].mxu0
  %v247 = vadd.f32 0.0, %v246
  %v248 = vpop.f32.mrb[0].mxu0
  %249 = vmatprep.mubr.f32.mxu0 0.0
  %250 = vmatmul.mubr.f32.gmra.mrb[0].mxu0 %v96
  %v251 = vpop.f32.mrb[0].mxu0
  %v252 = vadd.f32 0.0, %v251
  %v253 = vpop.f32.mrb[0].mxu0
  %254 = vmatprep.mubr.f32.mxu0 0.0
  %255 = vmatmul.mubr.f32.gmra.mrb[0].mxu0 %v99
  %v256 = vpop.f32.mrb[0].mxu0
  %v257 = vadd.f32 0.0, %v256
  %v258 = vpop.f32.mrb[0].mxu0
  %259 = vmatprep.mubr.f32.mxu0 0.0
  %260 = vmatmul.mubr.f32.gmra.mrb[0].mxu0 %v102
  %v261 = vpop.f32.mrb[0].mxu0
  %v262 = vadd.f32 0.0, %v261
  %v263 = vpop.f32.mrb[0].mxu0
  %264 = vmatprep.mubr.f32.mxu0 0.0
  %265 = vmatmul.mubr.f32.gmra.mrb[0].mxu0 %v105
  %v266 = vpop.f32.mrb[0].mxu0
  %v267 = vadd.f32 0.0, %v266
  %v268 = vpop.f32.mrb[0].mxu0
  %269 = vmatprep.mubr.f32.mxu0 0.0
  %270 = vmatmul.mubr.f32.gmra.mrb[0].mxu0 %v108
  %v271 = vpop.f32.mrb[0].mxu0
  %v272 = vadd.f32 0.0, %v271
  %v273 = vpop.f32.mrb[0].mxu0
  %274 = vmatprep.mubr.f32.mxu0 0.0
  %275 = vmatmul.mubr.f32.gmra.mrb[0].mxu0 %v111
  %v276 = vpop.f32.mrb[0].mxu0
  %v277 = vadd.f32 0.0, %v276
  %v278 = vpop.f32.mrb[0].mxu0
  %279 = vmatprep.mubr.f32.mxu0 0.0
  %280 = vmatmul.mubr.f32.gmra.mrb[0].mxu0 %v114
  %v281 = vpop.f32.mrb[0].mxu0
  %v282 = vadd.f32 0.0, %v281
  %v283 = vpop.f32.mrb[0].mxu0
  %284 = vmatprep.mubr.f32.mxu0 0.0
  %285 = vmatmul.mubr.f32.gmra.mrb[0].mxu0 %v117
  %v286 = vpop.f32.mrb[0].mxu0
  %v287 = vadd.f32 0.0, %v286
  %v288 = vpop.f32.mrb[0].mxu0
  %289 = vmatprep.mubr.f32.mxu0 0.0
  %290 = vmatmul.mubr.f32.gmra.mrb[0].mxu0 %v120
  %v291 = vpop.f32.mrb[0].mxu0
  %v292 = vadd.f32 0.0, %v291
  %v293 = vpop.f32.mrb[0].mxu0
  %294 = vmatprep.mubr.f32.mxu0 0.0
  %295 = vmatmul.mubr.f32.gmra.mrb[0].mxu0 %v123
  %v296 = vpop.f32.mrb[0].mxu0
  %v297 = vadd.f32 0.0, %v296
  %v298 = vpop.f32.mrb[0].mxu0
  %299 = vmatprep.mubr.f32.mxu0 0.0
  %300 = vmatmul.mubr.f32.gmra.mrb[0].mxu0 %v126
  %v301 = vpop.f32.mrb[0].mxu0
  %v302 = vadd.f32 0.0, %v301
  %v303 = vpop.f32.mrb[0].mxu0
  %304 = vmatprep.mubr.f32.mxu0 0.0
  %305 = vmatmul.mubr.f32.gmra.mrb[0].mxu0 %v129
  %v306 = vpop.f32.mrb[0].mxu0
  %v307 = vadd.f32 0.0, %v306
  %v308 = vpop.f32.mrb[0].mxu0
  %309 = vmatprep.mubr.f32.mxu0 0.0
  %310 = vmatmul.mubr.f32.gmra.mrb[0].mxu0 %v132
  %v311 = vpop.f32.mrb[0].mxu0
  %v312 = vadd.f32 0.0, %v311
  %v313 = vpop.f32.mrb[0].mxu0
  %314 = vmatprep.mubr.f32.mxu0 0.0
  %315 = vmatmul.mubr.f32.gmra.mrb[0].mxu0 %v135
  %v316 = vpop.f32.mrb[0].mxu0
  %v317 = vadd.f32 0.0, %v316
  %v318 = vpop.f32.mrb[0].mxu0
  %319 = vmatprep.mubr.f32.mxu0 0.0
  %320 = vmatmul.mubr.f32.gmra.mrb[0].mxu0 %v138
  %v321 = vpop.f32.mrb[0].mxu0
  %v322 = vadd.f32 0.0, %v321
  %v323 = vpop.f32.mrb[0].mxu0
  %324 = vmatprep.mubr.f32.mxu0 0.0
  %325 = vmatmul.mubr.f32.gmra.mrb[0].mxu0 %v141
  %v326 = vpop.f32.mrb[0].mxu0
  %v327 = vadd.f32 0.0, %v326
  %v328 = vpop.f32.mrb[0].mxu0
  %329 = vmatprep.mubr.f32.mxu0 0.0
  %330 = vmatmul.mubr.f32.gmra.mrb[0].mxu0 %v144
  %v331 = vpop.f32.mrb[0].mxu0
  %v332 = vadd.f32 0.0, %v331
  %v333 = vpop.f32.mrb[0].mxu0
  %334 = vdwg.mxu0
  %v336 = vsel %vm73, %v32, 0
  %v339 = vsel %vm146, %v63, 0
  %341 = vmatprep.subr.mxu0 0.0
  %342 = vmatpush1.msra.mxu0 %v60
  %343 = vmatprep.subr.mxu0 0.0
  %344 = vmatpush1.msra.mxu0 %v61
  %345 = vmatprep.subr.mxu0 0.0
  %346 = vmatpush1.msra.mxu0 %v62
  %347 = vmatprep.subr.mxu0 0.0
  %348 = vmatpush1.msra.mxu0 %v339
  %349 = vmatprep.subr.mxu0 0.0
  %350 = vmatpush1.msra.mxu0 0.0
  %351 = vmatprep.subr.mxu0 0.0
  %352 = vmatpush1.msra.mxu0 0.0
  %353 = vmatprep.subr.mxu0 0.0
  %354 = vmatpush1.msra.mxu0 0.0
  %355 = vmatprep.subr.mxu0 0.0
  %356 = vmatpush1.msra.mxu0 0.0
  %357 = vmatprep.subr.mxu0 0.0
  %358 = vmatpush1.msra.mxu0 0.0
  %359 = vmatprep.subr.mxu0 0.0
  %360 = vmatpush1.msra.mxu0 0.0
  %361 = vmatprep.subr.mxu0 0.0
  %362 = vmatpush1.msra.mxu0 0.0
  %363 = vmatprep.subr.mxu0 0.0
  %364 = vmatpush1.msra.mxu0 0.0
  %365 = vmatprep.subr.mxu0 0.0
  %366 = vmatpush1.msra.mxu0 0.0
  %367 = vmatprep.subr.mxu0 0.0
  %368 = vmatpush1.msra.mxu0 0.0
  %369 = vmatprep.subr.mxu0 0.0
  %370 = vmatpush1.msra.mxu0 0.0
  %371 = vmatprep.subr.mxu0 0.0
  %372 = vmatpush1.msra.mxu0 0.0
  %373 = vmatprep.subr.mxu0 0.0
  %374 = vmatpush1.msra.mxu0 0.0
  %375 = vmatprep.subr.mxu0 0.0
  %376 = vmatpush1.msra.mxu0 0.0
  %377 = vmatprep.subr.mxu0 0.0
  %378 = vmatpush1.msra.mxu0 0.0
  %379 = vmatprep.subr.mxu0 0.0
  %380 = vmatpush1.msra.mxu0 0.0
  %381 = vmatprep.subr.mxu0 0.0
  %382 = vmatpush1.msra.mxu0 0.0
  %383 = vmatprep.subr.mxu0 0.0
  %384 = vmatpush1.msra.mxu0 0.0
  %385 = vmatprep.subr.mxu0 0.0
  %386 = vmatpush1.msra.mxu0 0.0
  %387 = vmatprep.subr.mxu0 0.0
  %388 = vmatpush1.msra.mxu0 0.0
  %389 = vmatprep.subr.mxu0 0.0
  %390 = vmatpush1.msra.mxu0 0.0
  %391 = vmatprep.subr.mxu0 0.0
  %392 = vmatpush1.msra.mxu0 0.0
  %393 = vmatprep.subr.mxu0 0.0
  %394 = vmatpush1.msra.mxu0 0.0
  %395 = vmatprep.subr.mxu0 0.0
  %396 = vmatpush1.msra.mxu0 0.0
  %397 = vmatprep.subr.mxu0 0.0
  %398 = vmatpush1.msra.mxu0 0.0
  %399 = vmatprep.subr.mxu0 0.0
  %400 = vmatpush1.msra.mxu0 0.0
  %401 = vmatprep.subr.mxu0 0.0
  %402 = vmatpush1.msra.mxu0 0.0
  %403 = vmatprep.subr.mxu0 0.0
  %404 = vmatpush1.msra.mxu0 0.0
  %405 = vmatprep.mubr.f32.mxu0 0.0
  %406 = vmatmul.mubr.f32.gmra.mrb[0].mxu0 %v336
  %v407 = vpop.f32.mrb[0].mxu0
  %v408 = vadd.f32 %v217, %v407
  %v409 = vpop.f32.mrb[0].mxu0
  %410 = vmatprep.mubr.f32.mxu0 0.0
  %411 = vmatmul.mubr.f32.gmra.mrb[0].mxu0 %v75
  %v412 = vpop.f32.mrb[0].mxu0
  %v413 = vadd.f32 %v222, %v412
  %v414 = vpop.f32.mrb[0].mxu0
  %415 = vmatprep.mubr.f32.mxu0 0.0
  %416 = vmatmul.mubr.f32.gmra.mrb[0].mxu0 %v78
  %v417 = vpop.f32.mrb[0].mxu0
  %v418 = vadd.f32 %v227, %v417
  %v419 = vpop.f32.mrb[0].mxu0
  %420 = vmatprep.mubr.f32.mxu0 0.0
  %421 = vmatmul.mubr.f32.gmra.mrb[0].mxu0 %v81
  %v422 = vpop.f32.mrb[0].mxu0
  %v423 = vadd.f32 %v232, %v422
  %v424 = vpop.f32.mrb[0].mxu0
  %425 = vmatprep.mubr.f32.mxu0 0.0
  %426 = vmatmul.mubr.f32.gmra.mrb[0].mxu0 %v84
  %v427 = vpop.f32.mrb[0].mxu0
  %v428 = vadd.f32 %v237, %v427
  %v429 = vpop.f32.mrb[0].mxu0
  %430 = vmatprep.mubr.f32.mxu0 0.0
  %431 = vmatmul.mubr.f32.gmra.mrb[0].mxu0 %v87
  %v432 = vpop.f32.mrb[0].mxu0
  %v433 = vadd.f32 %v242, %v432
  %v434 = vpop.f32.mrb[0].mxu0
  %435 = vmatprep.mubr.f32.mxu0 0.0
  %436 = vmatmul.mubr.f32.gmra.mrb[0].mxu0 %v90
  %v437 = vpop.f32.mrb[0].mxu0
  %v438 = vadd.f32 %v247, %v437
  %v439 = vpop.f32.mrb[0].mxu0
  %440 = vmatprep.mubr.f32.mxu0 0.0
  %441 = vmatmul.mubr.f32.gmra.mrb[0].mxu0 %v93
  %v442 = vpop.f32.mrb[0].mxu0
  %v443 = vadd.f32 %v252, %v442
  %v444 = vpop.f32.mrb[0].mxu0
  %445 = vmatprep.mubr.f32.mxu0 0.0
  %446 = vmatmul.mubr.f32.gmra.mrb[0].mxu0 %v96
  %v447 = vpop.f32.mrb[0].mxu0
  %v448 = vadd.f32 %v257, %v447
  %v449 = vpop.f32.mrb[0].mxu0
  %450 = vmatprep.mubr.f32.mxu0 0.0
  %451 = vmatmul.mubr.f32.gmra.mrb[0].mxu0 %v99
  %v452 = vpop.f32.mrb[0].mxu0
  %v453 = vadd.f32 %v262, %v452
  %v454 = vpop.f32.mrb[0].mxu0
  %455 = vmatprep.mubr.f32.mxu0 0.0
  %456 = vmatmul.mubr.f32.gmra.mrb[0].mxu0 %v102
  %v457 = vpop.f32.mrb[0].mxu0
  %v458 = vadd.f32 %v267, %v457
  %v459 = vpop.f32.mrb[0].mxu0
  %460 = vmatprep.mubr.f32.mxu0 0.0
  %461 = vmatmul.mubr.f32.gmra.mrb[0].mxu0 %v105
  %v462 = vpop.f32.mrb[0].mxu0
  %v463 = vadd.f32 %v272, %v462
  %v464 = vpop.f32.mrb[0].mxu0
  %465 = vmatprep.mubr.f32.mxu0 0.0
  %466 = vmatmul.mubr.f32.gmra.mrb[0].mxu0 %v108
  %v467 = vpop.f32.mrb[0].mxu0
  %v468 = vadd.f32 %v277, %v467
  %v469 = vpop.f32.mrb[0].mxu0
  %470 = vmatprep.mubr.f32.mxu0 0.0
  %471 = vmatmul.mubr.f32.gmra.mrb[0].mxu0 %v111
  %v472 = vpop.f32.mrb[0].mxu0
  %v473 = vadd.f32 %v282, %v472
  %v474 = vpop.f32.mrb[0].mxu0
  %475 = vmatprep.mubr.f32.mxu0 0.0
  %476 = vmatmul.mubr.f32.gmra.mrb[0].mxu0 %v114
  %v477 = vpop.f32.mrb[0].mxu0
  %v478 = vadd.f32 %v287, %v477
  %v479 = vpop.f32.mrb[0].mxu0
  %480 = vmatprep.mubr.f32.mxu0 0.0
  %481 = vmatmul.mubr.f32.gmra.mrb[0].mxu0 %v117
  %v482 = vpop.f32.mrb[0].mxu0
  %v483 = vadd.f32 %v292, %v482
  %v484 = vpop.f32.mrb[0].mxu0
  %485 = vmatprep.mubr.f32.mxu0 0.0
  %486 = vmatmul.mubr.f32.gmra.mrb[0].mxu0 %v120
  %v487 = vpop.f32.mrb[0].mxu0
  %v488 = vadd.f32 %v297, %v487
  %v489 = vpop.f32.mrb[0].mxu0
  %490 = vmatprep.mubr.f32.mxu0 0.0
  %491 = vmatmul.mubr.f32.gmra.mrb[0].mxu0 %v123
  %v492 = vpop.f32.mrb[0].mxu0
  %v493 = vadd.f32 %v302, %v492
  %v494 = vpop.f32.mrb[0].mxu0
  %495 = vmatprep.mubr.f32.mxu0 0.0
  %496 = vmatmul.mubr.f32.gmra.mrb[0].mxu0 %v126
  %v497 = vpop.f32.mrb[0].mxu0
  %v498 = vadd.f32 %v307, %v497
  %v499 = vpop.f32.mrb[0].mxu0
  %500 = vmatprep.mubr.f32.mxu0 0.0
  %501 = vmatmul.mubr.f32.gmra.mrb[0].mxu0 %v129
  %v502 = vpop.f32.mrb[0].mxu0
  %v503 = vadd.f32 %v312, %v502
  %v504 = vpop.f32.mrb[0].mxu0
  %505 = vmatprep.mubr.f32.mxu0 0.0
  %506 = vmatmul.mubr.f32.gmra.mrb[0].mxu0 %v132
  %v507 = vpop.f32.mrb[0].mxu0
  %v508 = vadd.f32 %v317, %v507
  %v509 = vpop.f32.mrb[0].mxu0
  %510 = vmatprep.mubr.f32.mxu0 0.0
  %511 = vmatmul.mubr.f32.gmra.mrb[0].mxu0 %v135
  %v512 = vpop.f32.mrb[0].mxu0
  %v513 = vadd.f32 %v322, %v512
  %v514 = vpop.f32.mrb[0].mxu0
  %515 = vmatprep.mubr.f32.mxu0 0.0
  %516 = vmatmul.mubr.f32.gmra.mrb[0].mxu0 %v138
  %v517 = vpop.f32.mrb[0].mxu0
  %v518 = vadd.f32 %v327, %v517
  %v519 = vpop.f32.mrb[0].mxu0
  %520 = vmatprep.mubr.f32.mxu0 0.0
  %521 = vmatmul.mubr.f32.gmra.mrb[0].mxu0 %v141
  %v522 = vpop.f32.mrb[0].mxu0
  %v523 = vadd.f32 %v332, %v522
  %v524 = vpop.f32.mrb[0].mxu0
  %525 = vdwg.mxu0
  %s526 = scalar_lea.vmem %s2, 32
  %v527 = vld [vmem:[%s526] sm:$0xff]
  %v528 = vld [vmem:[%s526 + $0x8] sm:$0xff]
  %v529 = vld [vmem:[%s526 + $0x10] sm:$0xff]
  %v530 = vld [vmem:[%s526 + $0x18] sm:$0xf]
  %v532 = vsel %vm146, %v530, 0
  %534 = vmatprep.subr.mxu0 0.0
  %535 = vmatpush1.msra.mxu0 %v527
  %536 = vmatprep.subr.mxu0 0.0
  %537 = vmatpush1.msra.mxu0 %v528
  %538 = vmatprep.subr.mxu0 0.0
  %539 = vmatpush1.msra.mxu0 %v529
  %540 = vmatprep.subr.mxu0 0.0
  %541 = vmatpush1.msra.mxu0 %v532
  %542 = vmatprep.subr.mxu0 0.0
  %543 = vmatpush1.msra.mxu0 0.0
  %544 = vmatprep.subr.mxu0 0.0
  %545 = vmatpush1.msra.mxu0 0.0
  %546 = vmatprep.subr.mxu0 0.0
  %547 = vmatpush1.msra.mxu0 0.0
  %548 = vmatprep.subr.mxu0 0.0
  %549 = vmatpush1.msra.mxu0 0.0
  %550 = vmatprep.subr.mxu0 0.0
  %551 = vmatpush1.msra.mxu0 0.0
  %552 = vmatprep.subr.mxu0 0.0
  %553 = vmatpush1.msra.mxu0 0.0
  %554 = vmatprep.subr.mxu0 0.0
  %555 = vmatpush1.msra.mxu0 0.0
  %556 = vmatprep.subr.mxu0 0.0
  %557 = vmatpush1.msra.mxu0 0.0
  %558 = vmatprep.subr.mxu0 0.0
  %559 = vmatpush1.msra.mxu0 0.0
  %560 = vmatprep.subr.mxu0 0.0
  %561 = vmatpush1.msra.mxu0 0.0
  %562 = vmatprep.subr.mxu0 0.0
  %563 = vmatpush1.msra.mxu0 0.0
  %564 = vmatprep.subr.mxu0 0.0
  %565 = vmatpush1.msra.mxu0 0.0
  %566 = vmatprep.subr.mxu0 0.0
  %567 = vmatpush1.msra.mxu0 0.0
  %568 = vmatprep.subr.mxu0 0.0
  %569 = vmatpush1.msra.mxu0 0.0
  %570 = vmatprep.subr.mxu0 0.0
  %571 = vmatpush1.msra.mxu0 0.0
  %572 = vmatprep.subr.mxu0 0.0
  %573 = vmatpush1.msra.mxu0 0.0
  %574 = vmatprep.subr.mxu0 0.0
  %575 = vmatpush1.msra.mxu0 0.0
  %576 = vmatprep.subr.mxu0 0.0
  %577 = vmatpush1.msra.mxu0 0.0
  %578 = vmatprep.subr.mxu0 0.0
  %579 = vmatpush1.msra.mxu0 0.0
  %580 = vmatprep.subr.mxu0 0.0
  %581 = vmatpush1.msra.mxu0 0.0
  %582 = vmatprep.subr.mxu0 0.0
  %583 = vmatpush1.msra.mxu0 0.0
  %584 = vmatprep.subr.mxu0 0.0
  %585 = vmatpush1.msra.mxu0 0.0
  %586 = vmatprep.subr.mxu0 0.0
  %587 = vmatpush1.msra.mxu0 0.0
  %588 = vmatprep.subr.mxu0 0.0
  %589 = vmatpush1.msra.mxu0 0.0
  %590 = vmatprep.subr.mxu0 0.0
  %591 = vmatpush1.msra.mxu0 0.0
  %592 = vmatprep.subr.mxu0 0.0
  %593 = vmatpush1.msra.mxu0 0.0
  %594 = vmatprep.subr.mxu0 0.0
  %595 = vmatpush1.msra.mxu0 0.0
  %596 = vmatprep.subr.mxu0 0.0
  %597 = vmatpush1.msra.mxu0 0.0
  %598 = vmatprep.mubr.f32.mxu0 0.0
  %599 = vmatmul.mubr.f32.gmra.mrb[0].mxu0 %v75
  %v600 = vpop.f32.mrb[0].mxu0
  %v601 = vadd.f32 0.0, %v600
  %v602 = vpop.f32.mrb[0].mxu0
  %603 = vmatprep.mubr.f32.mxu0 0.0
  %604 = vmatmul.mubr.f32.gmra.mrb[0].mxu0 %v78
  %v605 = vpop.f32.mrb[0].mxu0
  %v606 = vadd.f32 0.0, %v605
  %v607 = vpop.f32.mrb[0].mxu0
  %608 = vmatprep.mubr.f32.mxu0 0.0
  %609 = vmatmul.mubr.f32.gmra.mrb[0].mxu0 %v81
  %v610 = vpop.f32.mrb[0].mxu0
  %v611 = vadd.f32 0.0, %v610
  %v612 = vpop.f32.mrb[0].mxu0
  %613 = vmatprep.mubr.f32.mxu0 0.0
  %614 = vmatmul.mubr.f32.gmra.mrb[0].mxu0 %v84
  %v615 = vpop.f32.mrb[0].mxu0
  %v616 = vadd.f32 0.0, %v615
  %v617 = vpop.f32.mrb[0].mxu0
  %618 = vmatprep.mubr.f32.mxu0 0.0
  %619 = vmatmul.mubr.f32.gmra.mrb[0].mxu0 %v87
  %v620 = vpop.f32.mrb[0].mxu0
  %v621 = vadd.f32 0.0, %v620
  %v622 = vpop.f32.mrb[0].mxu0
  %623 = vmatprep.mubr.f32.mxu0 0.0
  %624 = vmatmul.mubr.f32.gmra.mrb[0].mxu0 %v90
  %v625 = vpop.f32.mrb[0].mxu0
  %v626 = vadd.f32 0.0, %v625
  %v627 = vpop.f32.mrb[0].mxu0
  %628 = vmatprep.mubr.f32.mxu0 0.0
  %629 = vmatmul.mubr.f32.gmra.mrb[0].mxu0 %v93
  %v630 = vpop.f32.mrb[0].mxu0
  %v631 = vadd.f32 0.0, %v630
  %v632 = vpop.f32.mrb[0].mxu0
  %633 = vmatprep.mubr.f32.mxu0 0.0
  %634 = vmatmul.mubr.f32.gmra.mrb[0].mxu0 %v96
  %v635 = vpop.f32.mrb[0].mxu0
  %v636 = vadd.f32 0.0, %v635
  %v637 = vpop.f32.mrb[0].mxu0
  %638 = vmatprep.mubr.f32.mxu0 0.0
  %639 = vmatmul.mubr.f32.gmra.mrb[0].mxu0 %v99
  %v640 = vpop.f32.mrb[0].mxu0
  %v641 = vadd.f32 0.0, %v640
  %v642 = vpop.f32.mrb[0].mxu0
  %643 = vmatprep.mubr.f32.mxu0 0.0
  %644 = vmatmul.mubr.f32.gmra.mrb[0].mxu0 %v102
  %v645 = vpop.f32.mrb[0].mxu0
  %v646 = vadd.f32 0.0, %v645
  %v647 = vpop.f32.mrb[0].mxu0
  %648 = vmatprep.mubr.f32.mxu0 0.0
  %649 = vmatmul.mubr.f32.gmra.mrb[0].mxu0 %v105
  %v650 = vpop.f32.mrb[0].mxu0
  %v651 = vadd.f32 0.0, %v650
  %v652 = vpop.f32.mrb[0].mxu0
  %653 = vmatprep.mubr.f32.mxu0 0.0
  %654 = vmatmul.mubr.f32.gmra.mrb[0].mxu0 %v108
  %v655 = vpop.f32.mrb[0].mxu0
  %v656 = vadd.f32 0.0, %v655
  %v657 = vpop.f32.mrb[0].mxu0
  %658 = vmatprep.mubr.f32.mxu0 0.0
  %659 = vmatmul.mubr.f32.gmra.mrb[0].mxu0 %v111
  %v660 = vpop.f32.mrb[0].mxu0
  %v661 = vadd.f32 0.0, %v660
  %v662 = vpop.f32.mrb[0].mxu0
  %663 = vmatprep.mubr.f32.mxu0 0.0
  %664 = vmatmul.mubr.f32.gmra.mrb[0].mxu0 %v114
  %v665 = vpop.f32.mrb[0].mxu0
  %v666 = vadd.f32 0.0, %v665
  %v667 = vpop.f32.mrb[0].mxu0
  %668 = vmatprep.mubr.f32.mxu0 0.0
  %669 = vmatmul.mubr.f32.gmra.mrb[0].mxu0 %v117
  %v670 = vpop.f32.mrb[0].mxu0
  %v671 = vadd.f32 0.0, %v670
  %v672 = vpop.f32.mrb[0].mxu0
  %673 = vmatprep.mubr.f32.mxu0 0.0
  %674 = vmatmul.mubr.f32.gmra.mrb[0].mxu0 %v120
  %v675 = vpop.f32.mrb[0].mxu0
  %v676 = vadd.f32 0.0, %v675
  %v677 = vpop.f32.mrb[0].mxu0
  %678 = vmatprep.mubr.f32.mxu0 0.0
  %679 = vmatmul.mubr.f32.gmra.mrb[0].mxu0 %v123
  %v680 = vpop.f32.mrb[0].mxu0
  %v681 = vadd.f32 0.0, %v680
  %v682 = vpop.f32.mrb[0].mxu0
  %683 = vmatprep.mubr.f32.mxu0 0.0
  %684 = vmatmul.mubr.f32.gmra.mrb[0].mxu0 %v126
  %v685 = vpop.f32.mrb[0].mxu0
  %v686 = vadd.f32 0.0, %v685
  %v687 = vpop.f32.mrb[0].mxu0
  %688 = vmatprep.mubr.f32.mxu0 0.0
  %689 = vmatmul.mubr.f32.gmra.mrb[0].mxu0 %v129
  %v690 = vpop.f32.mrb[0].mxu0
  %v691 = vadd.f32 0.0, %v690
  %v692 = vpop.f32.mrb[0].mxu0
  %693 = vmatprep.mubr.f32.mxu0 0.0
  %694 = vmatmul.mubr.f32.gmra.mrb[0].mxu0 %v132
  %v695 = vpop.f32.mrb[0].mxu0
  %v696 = vadd.f32 0.0, %v695
  %v697 = vpop.f32.mrb[0].mxu0
  %698 = vmatprep.mubr.f32.mxu0 0.0
  %699 = vmatmul.mubr.f32.gmra.mrb[0].mxu0 %v135
  %v700 = vpop.f32.mrb[0].mxu0
  %v701 = vadd.f32 0.0, %v700
  %v702 = vpop.f32.mrb[0].mxu0
  %703 = vmatprep.mubr.f32.mxu0 0.0
  %704 = vmatmul.mubr.f32.gmra.mrb[0].mxu0 %v138
  %v705 = vpop.f32.mrb[0].mxu0
  %v706 = vadd.f32 0.0, %v705
  %v707 = vpop.f32.mrb[0].mxu0
  %708 = vmatprep.mubr.f32.mxu0 0.0
  %709 = vmatmul.mubr.f32.gmra.mrb[0].mxu0 %v141
  %v710 = vpop.f32.mrb[0].mxu0
  %v711 = vadd.f32 0.0, %v710
  %v712 = vpop.f32.mrb[0].mxu0
  %713 = vmatprep.mubr.f32.mxu0 0.0
  %714 = vmatmul.mubr.f32.gmra.mrb[0].mxu0 %v144
  %v715 = vpop.f32.mrb[0].mxu0
  %v716 = vadd.f32 0.0, %v715
  %v717 = vpop.f32.mrb[0].mxu0
  %718 = vdwg.mxu0
  %v720 = vsel %vm146, %v67, 0
  %722 = vmatprep.subr.mxu0 0.0
  %723 = vmatpush1.msra.mxu0 %v64
  %724 = vmatprep.subr.mxu0 0.0
  %725 = vmatpush1.msra.mxu0 %v65
  %726 = vmatprep.subr.mxu0 0.0
  %727 = vmatpush1.msra.mxu0 %v66
  %728 = vmatprep.subr.mxu0 0.0
  %729 = vmatpush1.msra.mxu0 %v720
  %730 = vmatprep.subr.mxu0 0.0
  %731 = vmatpush1.msra.mxu0 0.0
  %732 = vmatprep.subr.mxu0 0.0
  %733 = vmatpush1.msra.mxu0 0.0
  %734 = vmatprep.subr.mxu0 0.0
  %735 = vmatpush1.msra.mxu0 0.0
  %736 = vmatprep.subr.mxu0 0.0
  %737 = vmatpush1.msra.mxu0 0.0
  %738 = vmatprep.subr.mxu0 0.0
  %739 = vmatpush1.msra.mxu0 0.0
  %740 = vmatprep.subr.mxu0 0.0
  %741 = vmatpush1.msra.mxu0 0.0
  %742 = vmatprep.subr.mxu0 0.0
  %743 = vmatpush1.msra.mxu0 0.0
  %744 = vmatprep.subr.mxu0 0.0
  %745 = vmatpush1.msra.mxu0 0.0
  %746 = vmatprep.subr.mxu0 0.0
  %747 = vmatpush1.msra.mxu0 0.0
  %748 = vmatprep.subr.mxu0 0.0
  %749 = vmatpush1.msra.mxu0 0.0
  %750 = vmatprep.subr.mxu0 0.0
  %751 = vmatpush1.msra.mxu0 0.0
  %752 = vmatprep.subr.mxu0 0.0
  %753 = vmatpush1.msra.mxu0 0.0
  %754 = vmatprep.subr.mxu0 0.0
  %755 = vmatpush1.msra.mxu0 0.0
  %756 = vmatprep.subr.mxu0 0.0
  %757 = vmatpush1.msra.mxu0 0.0
  %758 = vmatprep.subr.mxu0 0.0
  %759 = vmatpush1.msra.mxu0 0.0
  %760 = vmatprep.subr.mxu0 0.0
  %761 = vmatpush1.msra.mxu0 0.0
  %762 = vmatprep.subr.mxu0 0.0
  %763 = vmatpush1.msra.mxu0 0.0
  %764 = vmatprep.subr.mxu0 0.0
  %765 = vmatpush1.msra.mxu0 0.0
  %766 = vmatprep.subr.mxu0 0.0
  %767 = vmatpush1.msra.mxu0 0.0
  %768 = vmatprep.subr.mxu0 0.0
  %769 = vmatpush1.msra.mxu0 0.0
  %770 = vmatprep.subr.mxu0 0.0
  %771 = vmatpush1.msra.mxu0 0.0
  %772 = vmatprep.subr.mxu0 0.0
  %773 = vmatpush1.msra.mxu0 0.0
  %774 = vmatprep.subr.mxu0 0.0
  %775 = vmatpush1.msra.mxu0 0.0
  %776 = vmatprep.subr.mxu0 0.0
  %777 = vmatpush1.msra.mxu0 0.0
  %778 = vmatprep.subr.mxu0 0.0
  %779 = vmatpush1.msra.mxu0 0.0
  %780 = vmatprep.subr.mxu0 0.0
  %781 = vmatpush1.msra.mxu0 0.0
  %782 = vmatprep.subr.mxu0 0.0
  %783 = vmatpush1.msra.mxu0 0.0
  %784 = vmatprep.subr.mxu0 0.0
  %785 = vmatpush1.msra.mxu0 0.0
  %786 = vmatprep.mubr.f32.mxu0 0.0
  %787 = vmatmul.mubr.f32.gmra.mrb[0].mxu0 %v336
  %v788 = vpop.f32.mrb[0].mxu0
  %v789 = vadd.f32 %v601, %v788
  %v790 = vpop.f32.mrb[0].mxu0
  %791 = vmatprep.mubr.f32.mxu0 0.0
  %792 = vmatmul.mubr.f32.gmra.mrb[0].mxu0 %v75
  %v793 = vpop.f32.mrb[0].mxu0
  %v794 = vadd.f32 %v606, %v793
  %v795 = vpop.f32.mrb[0].mxu0
  %796 = vmatprep.mubr.f32.mxu0 0.0
  %797 = vmatmul.mubr.f32.gmra.mrb[0].mxu0 %v78
  %v798 = vpop.f32.mrb[0].mxu0
  %v799 = vadd.f32 %v611, %v798
  %v800 = vpop.f32.mrb[0].mxu0
  %801 = vmatprep.mubr.f32.mxu0 0.0
  %802 = vmatmul.mubr.f32.gmra.mrb[0].mxu0 %v81
  %v803 = vpop.f32.mrb[0].mxu0
  %v804 = vadd.f32 %v616, %v803
  %v805 = vpop.f32.mrb[0].mxu0
  %806 = vmatprep.mubr.f32.mxu0 0.0
  %807 = vmatmul.mubr.f32.gmra.mrb[0].mxu0 %v84
  %v808 = vpop.f32.mrb[0].mxu0
  %v809 = vadd.f32 %v621, %v808
  %v810 = vpop.f32.mrb[0].mxu0
  %811 = vmatprep.mubr.f32.mxu0 0.0
  %812 = vmatmul.mubr.f32.gmra.mrb[0].mxu0 %v87
  %v813 = vpop.f32.mrb[0].mxu0
  %v814 = vadd.f32 %v626, %v813
  %v815 = vpop.f32.mrb[0].mxu0
  %816 = vmatprep.mubr.f32.mxu0 0.0
  %817 = vmatmul.mubr.f32.gmra.mrb[0].mxu0 %v90
  %v818 = vpop.f32.mrb[0].mxu0
  %v819 = vadd.f32 %v631, %v818
  %v820 = vpop.f32.mrb[0].mxu0
  %821 = vmatprep.mubr.f32.mxu0 0.0
  %822 = vmatmul.mubr.f32.gmra.mrb[0].mxu0 %v93
  %v823 = vpop.f32.mrb[0].mxu0
  %v824 = vadd.f32 %v636, %v823
  %v825 = vpop.f32.mrb[0].mxu0
  %826 = vmatprep.mubr.f32.mxu0 0.0
  %827 = vmatmul.mubr.f32.gmra.mrb[0].mxu0 %v96
  %v828 = vpop.f32.mrb[0].mxu0
  %v829 = vadd.f32 %v641, %v828
  %v830 = vpop.f32.mrb[0].mxu0
  %831 = vmatprep.mubr.f32.mxu0 0.0
  %832 = vmatmul.mubr.f32.gmra.mrb[0].mxu0 %v99
  %v833 = vpop.f32.mrb[0].mxu0
  %v834 = vadd.f32 %v646, %v833
  %v835 = vpop.f32.mrb[0].mxu0
  %836 = vmatprep.mubr.f32.mxu0 0.0
  %837 = vmatmul.mubr.f32.gmra.mrb[0].mxu0 %v102
  %v838 = vpop.f32.mrb[0].mxu0
  %v839 = vadd.f32 %v651, %v838
  %v840 = vpop.f32.mrb[0].mxu0
  %841 = vmatprep.mubr.f32.mxu0 0.0
  %842 = vmatmul.mubr.f32.gmra.mrb[0].mxu0 %v105
  %v843 = vpop.f32.mrb[0].mxu0
  %v844 = vadd.f32 %v656, %v843
  %v845 = vpop.f32.mrb[0].mxu0
  %846 = vmatprep.mubr.f32.mxu0 0.0
  %847 = vmatmul.mubr.f32.gmra.mrb[0].mxu0 %v108
  %v848 = vpop.f32.mrb[0].mxu0
  %v849 = vadd.f32 %v661, %v848
  %v850 = vpop.f32.mrb[0].mxu0
  %851 = vmatprep.mubr.f32.mxu0 0.0
  %852 = vmatmul.mubr.f32.gmra.mrb[0].mxu0 %v111
  %v853 = vpop.f32.mrb[0].mxu0
  %v854 = vadd.f32 %v666, %v853
  %v855 = vpop.f32.mrb[0].mxu0
  %856 = vmatprep.mubr.f32.mxu0 0.0
  %857 = vmatmul.mubr.f32.gmra.mrb[0].mxu0 %v114
  %v858 = vpop.f32.mrb[0].mxu0
  %v859 = vadd.f32 %v671, %v858
  %v860 = vpop.f32.mrb[0].mxu0
  %861 = vmatprep.mubr.f32.mxu0 0.0
  %862 = vmatmul.mubr.f32.gmra.mrb[0].mxu0 %v117
  %v863 = vpop.f32.mrb[0].mxu0
  %v864 = vadd.f32 %v676, %v863
  %v865 = vpop.f32.mrb[0].mxu0
  %866 = vmatprep.mubr.f32.mxu0 0.0
  %867 = vmatmul.mubr.f32.gmra.mrb[0].mxu0 %v120
  %v868 = vpop.f32.mrb[0].mxu0
  %v869 = vadd.f32 %v681, %v868
  %v870 = vpop.f32.mrb[0].mxu0
  %871 = vmatprep.mubr.f32.mxu0 0.0
  %872 = vmatmul.mubr.f32.gmra.mrb[0].mxu0 %v123
  %v873 = vpop.f32.mrb[0].mxu0
  %v874 = vadd.f32 %v686, %v873
  %v875 = vpop.f32.mrb[0].mxu0
  %876 = vmatprep.mubr.f32.mxu0 0.0
  %877 = vmatmul.mubr.f32.gmra.mrb[0].mxu0 %v126
  %v878 = vpop.f32.mrb[0].mxu0
  %v879 = vadd.f32 %v691, %v878
  %v880 = vpop.f32.mrb[0].mxu0
  %881 = vmatprep.mubr.f32.mxu0 0.0
  %882 = vmatmul.mubr.f32.gmra.mrb[0].mxu0 %v129
  %v883 = vpop.f32.mrb[0].mxu0
  %v884 = vadd.f32 %v696, %v883
  %v885 = vpop.f32.mrb[0].mxu0
  %886 = vmatprep.mubr.f32.mxu0 0.0
  %887 = vmatmul.mubr.f32.gmra.mrb[0].mxu0 %v132
  %v888 = vpop.f32.mrb[0].mxu0
  %v889 = vadd.f32 %v701, %v888
  %v890 = vpop.f32.mrb[0].mxu0
  %891 = vmatprep.mubr.f32.mxu0 0.0
  %892 = vmatmul.mubr.f32.gmra.mrb[0].mxu0 %v135
  %v893 = vpop.f32.mrb[0].mxu0
  %v894 = vadd.f32 %v706, %v893
  %v895 = vpop.f32.mrb[0].mxu0
  %896 = vmatprep.mubr.f32.mxu0 0.0
  %897 = vmatmul.mubr.f32.gmra.mrb[0].mxu0 %v138
  %v898 = vpop.f32.mrb[0].mxu0
  %v899 = vadd.f32 %v711, %v898
  %v900 = vpop.f32.mrb[0].mxu0
  %901 = vmatprep.mubr.f32.mxu0 0.0
  %902 = vmatmul.mubr.f32.gmra.mrb[0].mxu0 %v141
  %v903 = vpop.f32.mrb[0].mxu0
  %v904 = vadd.f32 %v716, %v903
  %v905 = vpop.f32.mrb[0].mxu0
  %906 = vdwg.mxu0
  %s907 = scalar_lea.vmem %s1, 64
  %v908 = vld [vmem:[%s907] sm:$0xff]
  %v909 = vld [vmem:[%s907 + $0x8] sm:$0xff]
  %v910 = vld [vmem:[%s907 + $0x10] sm:$0xff]
  %v911 = vld [vmem:[%s907 + $0x18] sm:$0xf]
  %v913 = vsel %vm73, %v57, 0
  %v916 = vsel %vm146, %v911, 0
  %918 = vmatprep.subr.mxu0 0.0
  %919 = vmatpush1.msra.mxu0 %v908
  %920 = vmatprep.subr.mxu0 0.0
  %921 = vmatpush1.msra.mxu0 %v909
  %922 = vmatprep.subr.mxu0 0.0
  %923 = vmatpush1.msra.mxu0 %v910
  %924 = vmatprep.subr.mxu0 0.0
  %925 = vmatpush1.msra.mxu0 %v916
  %926 = vmatprep.subr.mxu0 0.0
  %927 = vmatpush1.msra.mxu0 0.0
  %928 = vmatprep.subr.mxu0 0.0
  %929 = vmatpush1.msra.mxu0 0.0
  %930 = vmatprep.subr.mxu0 0.0
  %931 = vmatpush1.msra.mxu0 0.0
  %932 = vmatprep.subr.mxu0 0.0
  %933 = vmatpush1.msra.mxu0 0.0
  %934 = vmatprep.subr.mxu0 0.0
  %935 = vmatpush1.msra.mxu0 0.0
  %936 = vmatprep.subr.mxu0 0.0
  %937 = vmatpush1.msra.mxu0 0.0
  %938 = vmatprep.subr.mxu0 0.0
  %939 = vmatpush1.msra.mxu0 0.0
  %940 = vmatprep.subr.mxu0 0.0
  %941 = vmatpush1.msra.mxu0 0.0
  %942 = vmatprep.subr.mxu0 0.0
  %943 = vmatpush1.msra.mxu0 0.0
  %944 = vmatprep.subr.mxu0 0.0
  %945 = vmatpush1.msra.mxu0 0.0
  %946 = vmatprep.subr.mxu0 0.0
  %947 = vmatpush1.msra.mxu0 0.0
  %948 = vmatprep.subr.mxu0 0.0
  %949 = vmatpush1.msra.mxu0 0.0
  %950 = vmatprep.subr.mxu0 0.0
  %951 = vmatpush1.msra.mxu0 0.0
  %952 = vmatprep.subr.mxu0 0.0
  %953 = vmatpush1.msra.mxu0 0.0
  %954 = vmatprep.subr.mxu0 0.0
  %955 = vmatpush1.msra.mxu0 0.0
  %956 = vmatprep.subr.mxu0 0.0
  %957 = vmatpush1.msra.mxu0 0.0
  %958 = vmatprep.subr.mxu0 0.0
  %959 = vmatpush1.msra.mxu0 0.0
  %960 = vmatprep.subr.mxu0 0.0
  %961 = vmatpush1.msra.mxu0 0.0
  %962 = vmatprep.subr.mxu0 0.0
  %963 = vmatpush1.msra.mxu0 0.0
  %964 = vmatprep.subr.mxu0 0.0
  %965 = vmatpush1.msra.mxu0 0.0
  %966 = vmatprep.subr.mxu0 0.0
  %967 = vmatpush1.msra.mxu0 0.0
  %968 = vmatprep.subr.mxu0 0.0
  %969 = vmatpush1.msra.mxu0 0.0
  %970 = vmatprep.subr.mxu0 0.0
  %971 = vmatpush1.msra.mxu0 0.0
  %972 = vmatprep.subr.mxu0 0.0
  %973 = vmatpush1.msra.mxu0 0.0
  %974 = vmatprep.subr.mxu0 0.0
  %975 = vmatpush1.msra.mxu0 0.0
  %976 = vmatprep.subr.mxu0 0.0
  %977 = vmatpush1.msra.mxu0 0.0
  %978 = vmatprep.subr.mxu0 0.0
  %979 = vmatpush1.msra.mxu0 0.0
  %980 = vmatprep.subr.mxu0 0.0
  %981 = vmatpush1.msra.mxu0 0.0
  %982 = vmatprep.mubr.f32.mxu0 0.0
  %983 = vmatmul.mubr.f32.gmra.mrb[0].mxu0 %v78
  %v984 = vpop.f32.mrb[0].mxu0
  %v985 = vadd.f32 0.0, %v984
  %v986 = vpop.f32.mrb[0].mxu0
  %987 = vmatprep.mubr.f32.mxu0 0.0
  %988 = vmatmul.mubr.f32.gmra.mrb[0].mxu0 %v81
  %v989 = vpop.f32.mrb[0].mxu0
  %v990 = vadd.f32 0.0, %v989
  %v991 = vpop.f32.mrb[0].mxu0
  %992 = vmatprep.mubr.f32.mxu0 0.0
  %993 = vmatmul.mubr.f32.gmra.mrb[0].mxu0 %v84
  %v994 = vpop.f32.mrb[0].mxu0
  %v995 = vadd.f32 0.0, %v994
  %v996 = vpop.f32.mrb[0].mxu0
  %997 = vmatprep.mubr.f32.mxu0 0.0
  %998 = vmatmul.mubr.f32.gmra.mrb[0].mxu0 %v87
  %v999 = vpop.f32.mrb[0].mxu0
  %v1000 = vadd.f32 0.0, %v999
  %v1001 = vpop.f32.mrb[0].mxu0
  %1002 = vmatprep.mubr.f32.mxu0 0.0
  %1003 = vmatmul.mubr.f32.gmra.mrb[0].mxu0 %v90
  %v1004 = vpop.f32.mrb[0].mxu0
  %v1005 = vadd.f32 0.0, %v1004
  %v1006 = vpop.f32.mrb[0].mxu0
  %1007 = vmatprep.mubr.f32.mxu0 0.0
  %1008 = vmatmul.mubr.f32.gmra.mrb[0].mxu0 %v93
  %v1009 = vpop.f32.mrb[0].mxu0
  %v1010 = vadd.f32 0.0, %v1009
  %v1011 = vpop.f32.mrb[0].mxu0
  %1012 = vmatprep.mubr.f32.mxu0 0.0
  %1013 = vmatmul.mubr.f32.gmra.mrb[0].mxu0 %v96
  %v1014 = vpop.f32.mrb[0].mxu0
  %v1015 = vadd.f32 0.0, %v1014
  %v1016 = vpop.f32.mrb[0].mxu0
  %1017 = vmatprep.mubr.f32.mxu0 0.0
  %1018 = vmatmul.mubr.f32.gmra.mrb[0].mxu0 %v99
  %v1019 = vpop.f32.mrb[0].mxu0
  %v1020 = vadd.f32 0.0, %v1019
  %v1021 = vpop.f32.mrb[0].mxu0
  %1022 = vmatprep.mubr.f32.mxu0 0.0
  %1023 = vmatmul.mubr.f32.gmra.mrb[0].mxu0 %v102
  %v1024 = vpop.f32.mrb[0].mxu0
  %v1025 = vadd.f32 0.0, %v1024
  %v1026 = vpop.f32.mrb[0].mxu0
  %1027 = vmatprep.mubr.f32.mxu0 0.0
  %1028 = vmatmul.mubr.f32.gmra.mrb[0].mxu0 %v105
  %v1029 = vpop.f32.mrb[0].mxu0
  %v1030 = vadd.f32 0.0, %v1029
  %v1031 = vpop.f32.mrb[0].mxu0
  %1032 = vmatprep.mubr.f32.mxu0 0.0
  %1033 = vmatmul.mubr.f32.gmra.mrb[0].mxu0 %v108
  %v1034 = vpop.f32.mrb[0].mxu0
  %v1035 = vadd.f32 0.0, %v1034
  %v1036 = vpop.f32.mrb[0].mxu0
  %1037 = vmatprep.mubr.f32.mxu0 0.0
  %1038 = vmatmul.mubr.f32.gmra.mrb[0].mxu0 %v111
  %v1039 = vpop.f32.mrb[0].mxu0
  %v1040 = vadd.f32 0.0, %v1039
  %v1041 = vpop.f32.mrb[0].mxu0
  %1042 = vmatprep.mubr.f32.mxu0 0.0
  %1043 = vmatmul.mubr.f32.gmra.mrb[0].mxu0 %v114
  %v1044 = vpop.f32.mrb[0].mxu0
  %v1045 = vadd.f32 0.0, %v1044
  %v1046 = vpop.f32.mrb[0].mxu0
  %1047 = vmatprep.mubr.f32.mxu0 0.0
  %1048 = vmatmul.mubr.f32.gmra.mrb[0].mxu0 %v117
  %v1049 = vpop.f32.mrb[0].mxu0
  %v1050 = vadd.f32 0.0, %v1049
  %v1051 = vpop.f32.mrb[0].mxu0
  %1052 = vmatprep.mubr.f32.mxu0 0.0
  %1053 = vmatmul.mubr.f32.gmra.mrb[0].mxu0 %v120
  %v1054 = vpop.f32.mrb[0].mxu0
  %v1055 = vadd.f32 0.0, %v1054
  %v1056 = vpop.f32.mrb[0].mxu0
  %1057 = vmatprep.mubr.f32.mxu0 0.0
  %1058 = vmatmul.mubr.f32.gmra.mrb[0].mxu0 %v123
  %v1059 = vpop.f32.mrb[0].mxu0
  %v1060 = vadd.f32 0.0, %v1059
  %v1061 = vpop.f32.mrb[0].mxu0
  %1062 = vmatprep.mubr.f32.mxu0 0.0
  %1063 = vmatmul.mubr.f32.gmra.mrb[0].mxu0 %v126
  %v1064 = vpop.f32.mrb[0].mxu0
  %v1065 = vadd.f32 0.0, %v1064
  %v1066 = vpop.f32.mrb[0].mxu0
  %1067 = vmatprep.mubr.f32.mxu0 0.0
  %1068 = vmatmul.mubr.f32.gmra.mrb[0].mxu0 %v129
  %v1069 = vpop.f32.mrb[0].mxu0
  %v1070 = vadd.f32 0.0, %v1069
  %v1071 = vpop.f32.mrb[0].mxu0
  %1072 = vmatprep.mubr.f32.mxu0 0.0
  %1073 = vmatmul.mubr.f32.gmra.mrb[0].mxu0 %v132
  %v1074 = vpop.f32.mrb[0].mxu0
  %v1075 = vadd.f32 0.0, %v1074
  %v1076 = vpop.f32.mrb[0].mxu0
  %1077 = vmatprep.mubr.f32.mxu0 0.0
  %1078 = vmatmul.mubr.f32.gmra.mrb[0].mxu0 %v135
  %v1079 = vpop.f32.mrb[0].mxu0
  %v1080 = vadd.f32 0.0, %v1079
  %v1081 = vpop.f32.mrb[0].mxu0
  %1082 = vmatprep.mubr.f32.mxu0 0.0
  %1083 = vmatmul.mubr.f32.gmra.mrb[0].mxu0 %v138
  %v1084 = vpop.f32.mrb[0].mxu0
  %v1085 = vadd.f32 0.0, %v1084
  %v1086 = vpop.f32.mrb[0].mxu0
  %1087 = vmatprep.mubr.f32.mxu0 0.0
  %1088 = vmatmul.mubr.f32.gmra.mrb[0].mxu0 %v141
  %v1089 = vpop.f32.mrb[0].mxu0
  %v1090 = vadd.f32 0.0, %v1089
  %v1091 = vpop.f32.mrb[0].mxu0
  %1092 = vmatprep.mubr.f32.mxu0 0.0
  %1093 = vmatmul.mubr.f32.gmra.mrb[0].mxu0 %v144
  %v1094 = vpop.f32.mrb[0].mxu0
  %v1095 = vadd.f32 0.0, %v1094
  %v1096 = vpop.f32.mrb[0].mxu0
  %1097 = vmatprep.mubr.f32.mxu0 0.0
  %1098 = vmatmul.mubr.f32.gmra.mrb[0].mxu0 %v913
  %v1099 = vpop.f32.mrb[0].mxu0
  %v1100 = vadd.f32 0.0, %v1099
  %v1101 = vpop.f32.mrb[0].mxu0
  %1102 = vdwg.mxu0
  %v1103 = vadd.f32 %v408, %v985
  %v1104 = vadd.f32 %v413, %v990
  %v1105 = vadd.f32 %v418, %v995
  %v1106 = vadd.f32 %v423, %v1000
  %v1107 = vadd.f32 %v428, %v1005
  %v1108 = vadd.f32 %v433, %v1010
  %v1109 = vadd.f32 %v438, %v1015
  %v1110 = vadd.f32 %v443, %v1020
  %v1111 = vadd.f32 %v448, %v1025
  %v1112 = vadd.f32 %v453, %v1030
  %v1113 = vadd.f32 %v458, %v1035
  %v1114 = vadd.f32 %v463, %v1040
  %v1115 = vadd.f32 %v468, %v1045
  %v1116 = vadd.f32 %v473, %v1050
  %v1117 = vadd.f32 %v478, %v1055
  %v1118 = vadd.f32 %v483, %v1060
  %v1119 = vadd.f32 %v488, %v1065
  %v1120 = vadd.f32 %v493, %v1070
  %v1121 = vadd.f32 %v498, %v1075
  %v1122 = vadd.f32 %v503, %v1080
  %v1123 = vadd.f32 %v508, %v1085
  %v1124 = vadd.f32 %v513, %v1090
  %v1125 = vadd.f32 %v518, %v1095
  %v1126 = vadd.f32 %v523, %v1100
  %s1127 = scalar_lea.vmem %s2, 64
  %v1128 = vld [vmem:[%s1127] sm:$0xff]
  %v1129 = vld [vmem:[%s1127 + $0x8] sm:$0xff]
  %v1130 = vld [vmem:[%s1127 + $0x10] sm:$0xff]
  %v1131 = vld [vmem:[%s1127 + $0x18] sm:$0xf]
  %v1133 = vsel %vm146, %v1131, 0
  %1135 = vmatprep.subr.mxu0 0.0
  %1136 = vmatpush1.msra.mxu0 %v1128
  %1137 = vmatprep.subr.mxu0 0.0
  %1138 = vmatpush1.msra.mxu0 %v1129
  %1139 = vmatprep.subr.mxu0 0.0
  %1140 = vmatpush1.msra.mxu0 %v1130
  %1141 = vmatprep.subr.mxu0 0.0
  %1142 = vmatpush1.msra.mxu0 %v1133
  %1143 = vmatprep.subr.mxu0 0.0
  %1144 = vmatpush1.msra.mxu0 0.0
  %1145 = vmatprep.subr.mxu0 0.0
  %1146 = vmatpush1.msra.mxu0 0.0
  %1147 = vmatprep.subr.mxu0 0.0
  %1148 = vmatpush1.msra.mxu0 0.0
  %1149 = vmatprep.subr.mxu0 0.0
  %1150 = vmatpush1.msra.mxu0 0.0
  %1151 = vmatprep.subr.mxu0 0.0
  %1152 = vmatpush1.msra.mxu0 0.0
  %1153 = vmatprep.subr.mxu0 0.0
  %1154 = vmatpush1.msra.mxu0 0.0
  %1155 = vmatprep.subr.mxu0 0.0
  %1156 = vmatpush1.msra.mxu0 0.0
  %1157 = vmatprep.subr.mxu0 0.0
  %1158 = vmatpush1.msra.mxu0 0.0
  %1159 = vmatprep.subr.mxu0 0.0
  %1160 = vmatpush1.msra.mxu0 0.0
  %1161 = vmatprep.subr.mxu0 0.0
  %1162 = vmatpush1.msra.mxu0 0.0
  %1163 = vmatprep.subr.mxu0 0.0
  %1164 = vmatpush1.msra.mxu0 0.0
  %1165 = vmatprep.subr.mxu0 0.0
  %1166 = vmatpush1.msra.mxu0 0.0
  %1167 = vmatprep.subr.mxu0 0.0
  %1168 = vmatpush1.msra.mxu0 0.0
  %1169 = vmatprep.subr.mxu0 0.0
  %1170 = vmatpush1.msra.mxu0 0.0
  %1171 = vmatprep.subr.mxu0 0.0
  %1172 = vmatpush1.msra.mxu0 0.0
  %1173 = vmatprep.subr.mxu0 0.0
  %1174 = vmatpush1.msra.mxu0 0.0
  %1175 = vmatprep.subr.mxu0 0.0
  %1176 = vmatpush1.msra.mxu0 0.0
  %1177 = vmatprep.subr.mxu0 0.0
  %1178 = vmatpush1.msra.mxu0 0.0
  %1179 = vmatprep.subr.mxu0 0.0
  %1180 = vmatpush1.msra.mxu0 0.0
  %1181 = vmatprep.subr.mxu0 0.0
  %1182 = vmatpush1.msra.mxu0 0.0
  %1183 = vmatprep.subr.mxu0 0.0
  %1184 = vmatpush1.msra.mxu0 0.0
  %1185 = vmatprep.subr.mxu0 0.0
  %1186 = vmatpush1.msra.mxu0 0.0
  %1187 = vmatprep.subr.mxu0 0.0
  %1188 = vmatpush1.msra.mxu0 0.0
  %1189 = vmatprep.subr.mxu0 0.0
  %1190 = vmatpush1.msra.mxu0 0.0
  %1191 = vmatprep.subr.mxu0 0.0
  %1192 = vmatpush1.msra.mxu0 0.0
  %1193 = vmatprep.subr.mxu0 0.0
  %1194 = vmatpush1.msra.mxu0 0.0
  %1195 = vmatprep.subr.mxu0 0.0
  %1196 = vmatpush1.msra.mxu0 0.0
  %1197 = vmatprep.subr.mxu0 0.0
  %1198 = vmatpush1.msra.mxu0 0.0
  %1199 = vmatprep.mubr.f32.mxu0 0.0
  %1200 = vmatmul.mubr.f32.gmra.mrb[0].mxu0 %v78
  %v1201 = vpop.f32.mrb[0].mxu0
  %v1202 = vadd.f32 0.0, %v1201
  %v1203 = vpop.f32.mrb[0].mxu0
  %1204 = vmatprep.mubr.f32.mxu0 0.0
  %1205 = vmatmul.mubr.f32.gmra.mrb[0].mxu0 %v81
  %v1206 = vpop.f32.mrb[0].mxu0
  %v1207 = vadd.f32 0.0, %v1206
  %v1208 = vpop.f32.mrb[0].mxu0
  %1209 = vmatprep.mubr.f32.mxu0 0.0
  %1210 = vmatmul.mubr.f32.gmra.mrb[0].mxu0 %v84
  %v1211 = vpop.f32.mrb[0].mxu0
  %v1212 = vadd.f32 0.0, %v1211
  %v1213 = vpop.f32.mrb[0].mxu0
  %1214 = vmatprep.mubr.f32.mxu0 0.0
  %1215 = vmatmul.mubr.f32.gmra.mrb[0].mxu0 %v87
  %v1216 = vpop.f32.mrb[0].mxu0
  %v1217 = vadd.f32 0.0, %v1216
  %v1218 = vpop.f32.mrb[0].mxu0
  %1219 = vmatprep.mubr.f32.mxu0 0.0
  %1220 = vmatmul.mubr.f32.gmra.mrb[0].mxu0 %v90
  %v1221 = vpop.f32.mrb[0].mxu0
  %v1222 = vadd.f32 0.0, %v1221
  %v1223 = vpop.f32.mrb[0].mxu0
  %1224 = vmatprep.mubr.f32.mxu0 0.0
  %1225 = vmatmul.mubr.f32.gmra.mrb[0].mxu0 %v93
  %v1226 = vpop.f32.mrb[0].mxu0
  %v1227 = vadd.f32 0.0, %v1226
  %v1228 = vpop.f32.mrb[0].mxu0
  %1229 = vmatprep.mubr.f32.mxu0 0.0
  %1230 = vmatmul.mubr.f32.gmra.mrb[0].mxu0 %v96
  %v1231 = vpop.f32.mrb[0].mxu0
  %v1232 = vadd.f32 0.0, %v1231
  %v1233 = vpop.f32.mrb[0].mxu0
  %1234 = vmatprep.mubr.f32.mxu0 0.0
  %1235 = vmatmul.mubr.f32.gmra.mrb[0].mxu0 %v99
  %v1236 = vpop.f32.mrb[0].mxu0
  %v1237 = vadd.f32 0.0, %v1236
  %v1238 = vpop.f32.mrb[0].mxu0
  %1239 = vmatprep.mubr.f32.mxu0 0.0
  %1240 = vmatmul.mubr.f32.gmra.mrb[0].mxu0 %v102
  %v1241 = vpop.f32.mrb[0].mxu0
  %v1242 = vadd.f32 0.0, %v1241
  %v1243 = vpop.f32.mrb[0].mxu0
  %1244 = vmatprep.mubr.f32.mxu0 0.0
  %1245 = vmatmul.mubr.f32.gmra.mrb[0].mxu0 %v105
  %v1246 = vpop.f32.mrb[0].mxu0
  %v1247 = vadd.f32 0.0, %v1246
  %v1248 = vpop.f32.mrb[0].mxu0
  %1249 = vmatprep.mubr.f32.mxu0 0.0
  %1250 = vmatmul.mubr.f32.gmra.mrb[0].mxu0 %v108
  %v1251 = vpop.f32.mrb[0].mxu0
  %v1252 = vadd.f32 0.0, %v1251
  %v1253 = vpop.f32.mrb[0].mxu0
  %1254 = vmatprep.mubr.f32.mxu0 0.0
  %1255 = vmatmul.mubr.f32.gmra.mrb[0].mxu0 %v111
  %v1256 = vpop.f32.mrb[0].mxu0
  %v1257 = vadd.f32 0.0, %v1256
  %v1258 = vpop.f32.mrb[0].mxu0
  %1259 = vmatprep.mubr.f32.mxu0 0.0
  %1260 = vmatmul.mubr.f32.gmra.mrb[0].mxu0 %v114
  %v1261 = vpop.f32.mrb[0].mxu0
  %v1262 = vadd.f32 0.0, %v1261
  %v1263 = vpop.f32.mrb[0].mxu0
  %1264 = vmatprep.mubr.f32.mxu0 0.0
  %1265 = vmatmul.mubr.f32.gmra.mrb[0].mxu0 %v117
  %v1266 = vpop.f32.mrb[0].mxu0
  %v1267 = vadd.f32 0.0, %v1266
  %v1268 = vpop.f32.mrb[0].mxu0
  %1269 = vmatprep.mubr.f32.mxu0 0.0
  %1270 = vmatmul.mubr.f32.gmra.mrb[0].mxu0 %v120
  %v1271 = vpop.f32.mrb[0].mxu0
  %v1272 = vadd.f32 0.0, %v1271
  %v1273 = vpop.f32.mrb[0].mxu0
  %1274 = vmatprep.mubr.f32.mxu0 0.0
  %1275 = vmatmul.mubr.f32.gmra.mrb[0].mxu0 %v123
  %v1276 = vpop.f32.mrb[0].mxu0
  %v1277 = vadd.f32 0.0, %v1276
  %v1278 = vpop.f32.mrb[0].mxu0
  %1279 = vmatprep.mubr.f32.mxu0 0.0
  %1280 = vmatmul.mubr.f32.gmra.mrb[0].mxu0 %v126
  %v1281 = vpop.f32.mrb[0].mxu0
  %v1282 = vadd.f32 0.0, %v1281
  %v1283 = vpop.f32.mrb[0].mxu0
  %1284 = vmatprep.mubr.f32.mxu0 0.0
  %1285 = vmatmul.mubr.f32.gmra.mrb[0].mxu0 %v129
  %v1286 = vpop.f32.mrb[0].mxu0
  %v1287 = vadd.f32 0.0, %v1286
  %v1288 = vpop.f32.mrb[0].mxu0
  %1289 = vmatprep.mubr.f32.mxu0 0.0
  %1290 = vmatmul.mubr.f32.gmra.mrb[0].mxu0 %v132
  %v1291 = vpop.f32.mrb[0].mxu0
  %v1292 = vadd.f32 0.0, %v1291
  %v1293 = vpop.f32.mrb[0].mxu0
  %1294 = vmatprep.mubr.f32.mxu0 0.0
  %1295 = vmatmul.mubr.f32.gmra.mrb[0].mxu0 %v135
  %v1296 = vpop.f32.mrb[0].mxu0
  %v1297 = vadd.f32 0.0, %v1296
  %v1298 = vpop.f32.mrb[0].mxu0
  %1299 = vmatprep.mubr.f32.mxu0 0.0
  %1300 = vmatmul.mubr.f32.gmra.mrb[0].mxu0 %v138
  %v1301 = vpop.f32.mrb[0].mxu0
  %v1302 = vadd.f32 0.0, %v1301
  %v1303 = vpop.f32.mrb[0].mxu0
  %1304 = vmatprep.mubr.f32.mxu0 0.0
  %1305 = vmatmul.mubr.f32.gmra.mrb[0].mxu0 %v141
  %v1306 = vpop.f32.mrb[0].mxu0
  %v1307 = vadd.f32 0.0, %v1306
  %v1308 = vpop.f32.mrb[0].mxu0
  %1309 = vmatprep.mubr.f32.mxu0 0.0
  %1310 = vmatmul.mubr.f32.gmra.mrb[0].mxu0 %v144
  %v1311 = vpop.f32.mrb[0].mxu0
  %v1312 = vadd.f32 0.0, %v1311
  %v1313 = vpop.f32.mrb[0].mxu0
  %1314 = vmatprep.mubr.f32.mxu0 0.0
  %1315 = vmatmul.mubr.f32.gmra.mrb[0].mxu0 %v913
  %v1316 = vpop.f32.mrb[0].mxu0
  %v1317 = vadd.f32 0.0, %v1316
  %v1318 = vpop.f32.mrb[0].mxu0
  %1319 = vdwg.mxu0
  %v1320 = vadd.f32 %v789, %v1202
  %v1321 = vadd.f32 %v794, %v1207
  %v1322 = vadd.f32 %v799, %v1212
  %v1323 = vadd.f32 %v804, %v1217
  %v1324 = vadd.f32 %v809, %v1222
  %v1325 = vadd.f32 %v814, %v1227
  %v1326 = vadd.f32 %v819, %v1232
  %v1327 = vadd.f32 %v824, %v1237
  %v1328 = vadd.f32 %v829, %v1242
  %v1329 = vadd.f32 %v834, %v1247
  %v1330 = vadd.f32 %v839, %v1252
  %v1331 = vadd.f32 %v844, %v1257
  %v1332 = vadd.f32 %v849, %v1262
  %v1333 = vadd.f32 %v854, %v1267
  %v1334 = vadd.f32 %v859, %v1272
  %v1335 = vadd.f32 %v864, %v1277
  %v1336 = vadd.f32 %v869, %v1282
  %v1337 = vadd.f32 %v874, %v1287
  %v1338 = vadd.f32 %v879, %v1292
  %v1339 = vadd.f32 %v884, %v1297
  %v1340 = vadd.f32 %v889, %v1302
  %v1341 = vadd.f32 %v894, %v1307
  %v1342 = vadd.f32 %v899, %v1312
  %v1343 = vadd.f32 %v904, %v1317
  %s1344 = scalar_lea.vmem %s1, 96
  %v1345 = vld [vmem:[%s1344] sm:$0xff]
  %v1346 = vld [vmem:[%s1344 + $0x8] sm:$0xff]
  %v1347 = vld [vmem:[%s1344 + $0x10] sm:$0xff]
  %v1348 = vld [vmem:[%s1344 + $0x18] sm:$0xf]
  %v1350 = vsel %vm73, %v58, 0
  %v1353 = vsel %vm146, %v1348, 0
  %1355 = vmatprep.subr.mxu0 0.0
  %1356 = vmatpush1.msra.mxu0 %v1345
  %1357 = vmatprep.subr.mxu0 0.0
  %1358 = vmatpush1.msra.mxu0 %v1346
  %1359 = vmatprep.subr.mxu0 0.0
  %1360 = vmatpush1.msra.mxu0 %v1347
  %1361 = vmatprep.subr.mxu0 0.0
  %1362 = vmatpush1.msra.mxu0 %v1353
  %1363 = vmatprep.subr.mxu0 0.0
  %1364 = vmatpush1.msra.mxu0 0.0
  %1365 = vmatprep.subr.mxu0 0.0
  %1366 = vmatpush1.msra.mxu0 0.0
  %1367 = vmatprep.subr.mxu0 0.0
  %1368 = vmatpush1.msra.mxu0 0.0
  %1369 = vmatprep.subr.mxu0 0.0
  %1370 = vmatpush1.msra.mxu0 0.0
  %1371 = vmatprep.subr.mxu0 0.0
  %1372 = vmatpush1.msra.mxu0 0.0
  %1373 = vmatprep.subr.mxu0 0.0
  %1374 = vmatpush1.msra.mxu0 0.0
  %1375 = vmatprep.subr.mxu0 0.0
  %1376 = vmatpush1.msra.mxu0 0.0
  %1377 = vmatprep.subr.mxu0 0.0
  %1378 = vmatpush1.msra.mxu0 0.0
  %1379 = vmatprep.subr.mxu0 0.0
  %1380 = vmatpush1.msra.mxu0 0.0
  %1381 = vmatprep.subr.mxu0 0.0
  %1382 = vmatpush1.msra.mxu0 0.0
  %1383 = vmatprep.subr.mxu0 0.0
  %1384 = vmatpush1.msra.mxu0 0.0
  %1385 = vmatprep.subr.mxu0 0.0
  %1386 = vmatpush1.msra.mxu0 0.0
  %1387 = vmatprep.subr.mxu0 0.0
  %1388 = vmatpush1.msra.mxu0 0.0
  %1389 = vmatprep.subr.mxu0 0.0
  %1390 = vmatpush1.msra.mxu0 0.0
  %1391 = vmatprep.subr.mxu0 0.0
  %1392 = vmatpush1.msra.mxu0 0.0
  %1393 = vmatprep.subr.mxu0 0.0
  %1394 = vmatpush1.msra.mxu0 0.0
  %1395 = vmatprep.subr.mxu0 0.0
  %1396 = vmatpush1.msra.mxu0 0.0
  %1397 = vmatprep.subr.mxu0 0.0
  %1398 = vmatpush1.msra.mxu0 0.0
  %1399 = vmatprep.subr.mxu0 0.0
  %1400 = vmatpush1.msra.mxu0 0.0
  %1401 = vmatprep.subr.mxu0 0.0
  %1402 = vmatpush1.msra.mxu0 0.0
  %1403 = vmatprep.subr.mxu0 0.0
  %1404 = vmatpush1.msra.mxu0 0.0
  %1405 = vmatprep.subr.mxu0 0.0
  %1406 = vmatpush1.msra.mxu0 0.0
  %1407 = vmatprep.subr.mxu0 0.0
  %1408 = vmatpush1.msra.mxu0 0.0
  %1409 = vmatprep.subr.mxu0 0.0
  %1410 = vmatpush1.msra.mxu0 0.0
  %1411 = vmatprep.subr.mxu0 0.0
  %1412 = vmatpush1.msra.mxu0 0.0
  %1413 = vmatprep.subr.mxu0 0.0
  %1414 = vmatpush1.msra.mxu0 0.0
  %1415 = vmatprep.subr.mxu0 0.0
  %1416 = vmatpush1.msra.mxu0 0.0
  %1417 = vmatprep.subr.mxu0 0.0
  %1418 = vmatpush1.msra.mxu0 0.0
  %1419 = vmatprep.mubr.f32.mxu0 0.0
  %1420 = vmatmul.mubr.f32.gmra.mrb[0].mxu0 %v81
  %v1421 = vpop.f32.mrb[0].mxu0
  %v1422 = vadd.f32 0.0, %v1421
  %v1423 = vpop.f32.mrb[0].mxu0
  %1424 = vmatprep.mubr.f32.mxu0 0.0
  %1425 = vmatmul.mubr.f32.gmra.mrb[0].mxu0 %v84
  %v1426 = vpop.f32.mrb[0].mxu0
  %v1427 = vadd.f32 0.0, %v1426
  %v1428 = vpop.f32.mrb[0].mxu0
  %1429 = vmatprep.mubr.f32.mxu0 0.0
  %1430 = vmatmul.mubr.f32.gmra.mrb[0].mxu0 %v87
  %v1431 = vpop.f32.mrb[0].mxu0
  %v1432 = vadd.f32 0.0, %v1431
  %v1433 = vpop.f32.mrb[0].mxu0
  %1434 = vmatprep.mubr.f32.mxu0 0.0
  %1435 = vmatmul.mubr.f32.gmra.mrb[0].mxu0 %v90
  %v1436 = vpop.f32.mrb[0].mxu0
  %v1437 = vadd.f32 0.0, %v1436
  %v1438 = vpop.f32.mrb[0].mxu0
  %1439 = vmatprep.mubr.f32.mxu0 0.0
  %1440 = vmatmul.mubr.f32.gmra.mrb[0].mxu0 %v93
  %v1441 = vpop.f32.mrb[0].mxu0
  %v1442 = vadd.f32 0.0, %v1441
  %v1443 = vpop.f32.mrb[0].mxu0
  %1444 = vmatprep.mubr.f32.mxu0 0.0
  %1445 = vmatmul.mubr.f32.gmra.mrb[0].mxu0 %v96
  %v1446 = vpop.f32.mrb[0].mxu0
  %v1447 = vadd.f32 0.0, %v1446
  %v1448 = vpop.f32.mrb[0].mxu0
  %1449 = vmatprep.mubr.f32.mxu0 0.0
  %1450 = vmatmul.mubr.f32.gmra.mrb[0].mxu0 %v99
  %v1451 = vpop.f32.mrb[0].mxu0
  %v1452 = vadd.f32 0.0, %v1451
  %v1453 = vpop.f32.mrb[0].mxu0
  %1454 = vmatprep.mubr.f32.mxu0 0.0
  %1455 = vmatmul.mubr.f32.gmra.mrb[0].mxu0 %v102
  %v1456 = vpop.f32.mrb[0].mxu0
  %v1457 = vadd.f32 0.0, %v1456
  %v1458 = vpop.f32.mrb[0].mxu0
  %1459 = vmatprep.mubr.f32.mxu0 0.0
  %1460 = vmatmul.mubr.f32.gmra.mrb[0].mxu0 %v105
  %v1461 = vpop.f32.mrb[0].mxu0
  %v1462 = vadd.f32 0.0, %v1461
  %v1463 = vpop.f32.mrb[0].mxu0
  %1464 = vmatprep.mubr.f32.mxu0 0.0
  %1465 = vmatmul.mubr.f32.gmra.mrb[0].mxu0 %v108
  %v1466 = vpop.f32.mrb[0].mxu0
  %v1467 = vadd.f32 0.0, %v1466
  %v1468 = vpop.f32.mrb[0].mxu0
  %1469 = vmatprep.mubr.f32.mxu0 0.0
  %1470 = vmatmul.mubr.f32.gmra.mrb[0].mxu0 %v111
  %v1471 = vpop.f32.mrb[0].mxu0
  %v1472 = vadd.f32 0.0, %v1471
  %v1473 = vpop.f32.mrb[0].mxu0
  %1474 = vmatprep.mubr.f32.mxu0 0.0
  %1475 = vmatmul.mubr.f32.gmra.mrb[0].mxu0 %v114
  %v1476 = vpop.f32.mrb[0].mxu0
  %v1477 = vadd.f32 0.0, %v1476
  %v1478 = vpop.f32.mrb[0].mxu0
  %1479 = vmatprep.mubr.f32.mxu0 0.0
  %1480 = vmatmul.mubr.f32.gmra.mrb[0].mxu0 %v117
  %v1481 = vpop.f32.mrb[0].mxu0
  %v1482 = vadd.f32 0.0, %v1481
  %v1483 = vpop.f32.mrb[0].mxu0
  %1484 = vmatprep.mubr.f32.mxu0 0.0
  %1485 = vmatmul.mubr.f32.gmra.mrb[0].mxu0 %v120
  %v1486 = vpop.f32.mrb[0].mxu0
  %v1487 = vadd.f32 0.0, %v1486
  %v1488 = vpop.f32.mrb[0].mxu0
  %1489 = vmatprep.mubr.f32.mxu0 0.0
  %1490 = vmatmul.mubr.f32.gmra.mrb[0].mxu0 %v123
  %v1491 = vpop.f32.mrb[0].mxu0
  %v1492 = vadd.f32 0.0, %v1491
  %v1493 = vpop.f32.mrb[0].mxu0
  %1494 = vmatprep.mubr.f32.mxu0 0.0
  %1495 = vmatmul.mubr.f32.gmra.mrb[0].mxu0 %v126
  %v1496 = vpop.f32.mrb[0].mxu0
  %v1497 = vadd.f32 0.0, %v1496
  %v1498 = vpop.f32.mrb[0].mxu0
  %1499 = vmatprep.mubr.f32.mxu0 0.0
  %1500 = vmatmul.mubr.f32.gmra.mrb[0].mxu0 %v129
  %v1501 = vpop.f32.mrb[0].mxu0
  %v1502 = vadd.f32 0.0, %v1501
  %v1503 = vpop.f32.mrb[0].mxu0
  %1504 = vmatprep.mubr.f32.mxu0 0.0
  %1505 = vmatmul.mubr.f32.gmra.mrb[0].mxu0 %v132
  %v1506 = vpop.f32.mrb[0].mxu0
  %v1507 = vadd.f32 0.0, %v1506
  %v1508 = vpop.f32.mrb[0].mxu0
  %1509 = vmatprep.mubr.f32.mxu0 0.0
  %1510 = vmatmul.mubr.f32.gmra.mrb[0].mxu0 %v135
  %v1511 = vpop.f32.mrb[0].mxu0
  %v1512 = vadd.f32 0.0, %v1511
  %v1513 = vpop.f32.mrb[0].mxu0
  %1514 = vmatprep.mubr.f32.mxu0 0.0
  %1515 = vmatmul.mubr.f32.gmra.mrb[0].mxu0 %v138
  %v1516 = vpop.f32.mrb[0].mxu0
  %v1517 = vadd.f32 0.0, %v1516
  %v1518 = vpop.f32.mrb[0].mxu0
  %1519 = vmatprep.mubr.f32.mxu0 0.0
  %1520 = vmatmul.mubr.f32.gmra.mrb[0].mxu0 %v141
  %v1521 = vpop.f32.mrb[0].mxu0
  %v1522 = vadd.f32 0.0, %v1521
  %v1523 = vpop.f32.mrb[0].mxu0
  %1524 = vmatprep.mubr.f32.mxu0 0.0
  %1525 = vmatmul.mubr.f32.gmra.mrb[0].mxu0 %v144
  %v1526 = vpop.f32.mrb[0].mxu0
  %v1527 = vadd.f32 0.0, %v1526
  %v1528 = vpop.f32.mrb[0].mxu0
  %1529 = vmatprep.mubr.f32.mxu0 0.0
  %1530 = vmatmul.mubr.f32.gmra.mrb[0].mxu0 %v913
  %v1531 = vpop.f32.mrb[0].mxu0
  %v1532 = vadd.f32 0.0, %v1531
  %v1533 = vpop.f32.mrb[0].mxu0
  %1534 = vmatprep.mubr.f32.mxu0 0.0
  %1535 = vmatmul.mubr.f32.gmra.mrb[0].mxu0 %v1350
  %v1536 = vpop.f32.mrb[0].mxu0
  %v1537 = vadd.f32 0.0, %v1536
  %v1538 = vpop.f32.mrb[0].mxu0
  %1539 = vdwg.mxu0
  %v1540 = vadd.f32 %v1103, %v1422
  %v1541 = vadd.f32 %v1104, %v1427
  %v1542 = vadd.f32 %v1105, %v1432
  %v1543 = vadd.f32 %v1106, %v1437
  %v1544 = vadd.f32 %v1107, %v1442
  %v1545 = vadd.f32 %v1108, %v1447
  %v1546 = vadd.f32 %v1109, %v1452
  %v1547 = vadd.f32 %v1110, %v1457
  %v1548 = vadd.f32 %v1111, %v1462
  %v1549 = vadd.f32 %v1112, %v1467
  %v1550 = vadd.f32 %v1113, %v1472
  %v1551 = vadd.f32 %v1114, %v1477
  %v1552 = vadd.f32 %v1115, %v1482
  %v1553 = vadd.f32 %v1116, %v1487
  %v1554 = vadd.f32 %v1117, %v1492
  %v1555 = vadd.f32 %v1118, %v1497
  %v1556 = vadd.f32 %v1119, %v1502
  %v1557 = vadd.f32 %v1120, %v1507
  %v1558 = vadd.f32 %v1121, %v1512
  %v1559 = vadd.f32 %v1122, %v1517
  %v1560 = vadd.f32 %v1123, %v1522
  %v1561 = vadd.f32 %v1124, %v1527
  %v1562 = vadd.f32 %v1125, %v1532
  %v1563 = vadd.f32 %v1126, %v1537
  %s1564 = scalar_lea.vmem %s2, 96
  %v1565 = vld [vmem:[%s1564] sm:$0xff]
  %v1566 = vld [vmem:[%s1564 + $0x8] sm:$0xff]
  %v1567 = vld [vmem:[%s1564 + $0x10] sm:$0xff]
  %v1568 = vld [vmem:[%s1564 + $0x18] sm:$0xf]
  %v1570 = vsel %vm146, %v1568, 0
  %1572 = vmatprep.subr.mxu0 0.0
  %1573 = vmatpush1.msra.mxu0 %v1565
  %1574 = vmatprep.subr.mxu0 0.0
  %1575 = vmatpush1.msra.mxu0 %v1566
  %1576 = vmatprep.subr.mxu0 0.0
  %1577 = vmatpush1.msra.mxu0 %v1567
  %1578 = vmatprep.subr.mxu0 0.0
  %1579 = vmatpush1.msra.mxu0 %v1570
  %1580 = vmatprep.subr.mxu0 0.0
  %1581 = vmatpush1.msra.mxu0 0.0
  %1582 = vmatprep.subr.mxu0 0.0
  %1583 = vmatpush1.msra.mxu0 0.0
  %1584 = vmatprep.subr.mxu0 0.0
  %1585 = vmatpush1.msra.mxu0 0.0
  %1586 = vmatprep.subr.mxu0 0.0
  %1587 = vmatpush1.msra.mxu0 0.0
  %1588 = vmatprep.subr.mxu0 0.0
  %1589 = vmatpush1.msra.mxu0 0.0
  %1590 = vmatprep.subr.mxu0 0.0
  %1591 = vmatpush1.msra.mxu0 0.0
  %1592 = vmatprep.subr.mxu0 0.0
  %1593 = vmatpush1.msra.mxu0 0.0
  %1594 = vmatprep.subr.mxu0 0.0
  %1595 = vmatpush1.msra.mxu0 0.0
  %1596 = vmatprep.subr.mxu0 0.0
  %1597 = vmatpush1.msra.mxu0 0.0
  %1598 = vmatprep.subr.mxu0 0.0
  %1599 = vmatpush1.msra.mxu0 0.0
  %1600 = vmatprep.subr.mxu0 0.0
  %1601 = vmatpush1.msra.mxu0 0.0
  %1602 = vmatprep.subr.mxu0 0.0
  %1603 = vmatpush1.msra.mxu0 0.0
  %1604 = vmatprep.subr.mxu0 0.0
  %1605 = vmatpush1.msra.mxu0 0.0
  %1606 = vmatprep.subr.mxu0 0.0
  %1607 = vmatpush1.msra.mxu0 0.0
  %1608 = vmatprep.subr.mxu0 0.0
  %1609 = vmatpush1.msra.mxu0 0.0
  %1610 = vmatprep.subr.mxu0 0.0
  %1611 = vmatpush1.msra.mxu0 0.0
  %1612 = vmatprep.subr.mxu0 0.0
  %1613 = vmatpush1.msra.mxu0 0.0
  %1614 = vmatprep.subr.mxu0 0.0
  %1615 = vmatpush1.msra.mxu0 0.0
  %1616 = vmatprep.subr.mxu0 0.0
  %1617 = vmatpush1.msra.mxu0 0.0
  %1618 = vmatprep.subr.mxu0 0.0
  %1619 = vmatpush1.msra.mxu0 0.0
  %1620 = vmatprep.subr.mxu0 0.0
  %1621 = vmatpush1.msra.mxu0 0.0
  %1622 = vmatprep.subr.mxu0 0.0
  %1623 = vmatpush1.msra.mxu0 0.0
  %1624 = vmatprep.subr.mxu0 0.0
  %1625 = vmatpush1.msra.mxu0 0.0
  %1626 = vmatprep.subr.mxu0 0.0
  %1627 = vmatpush1.msra.mxu0 0.0
  %1628 = vmatprep.subr.mxu0 0.0
  %1629 = vmatpush1.msra.mxu0 0.0
  %1630 = vmatprep.subr.mxu0 0.0
  %1631 = vmatpush1.msra.mxu0 0.0
  %1632 = vmatprep.subr.mxu0 0.0
  %1633 = vmatpush1.msra.mxu0 0.0
  %1634 = vmatprep.subr.mxu0 0.0
  %1635 = vmatpush1.msra.mxu0 0.0
  %1636 = vmatprep.mubr.f32.mxu0 0.0
  %1637 = vmatmul.mubr.f32.gmra.mrb[0].mxu0 %v81
  %v1638 = vpop.f32.mrb[0].mxu0
  %v1639 = vadd.f32 0.0, %v1638
  %v1640 = vpop.f32.mrb[0].mxu0
  %1641 = vmatprep.mubr.f32.mxu0 0.0
  %1642 = vmatmul.mubr.f32.gmra.mrb[0].mxu0 %v84
  %v1643 = vpop.f32.mrb[0].mxu0
  %v1644 = vadd.f32 0.0, %v1643
  %v1645 = vpop.f32.mrb[0].mxu0
  %1646 = vmatprep.mubr.f32.mxu0 0.0
  %1647 = vmatmul.mubr.f32.gmra.mrb[0].mxu0 %v87
  %v1648 = vpop.f32.mrb[0].mxu0
  %v1649 = vadd.f32 0.0, %v1648
  %v1650 = vpop.f32.mrb[0].mxu0
  %1651 = vmatprep.mubr.f32.mxu0 0.0
  %1652 = vmatmul.mubr.f32.gmra.mrb[0].mxu0 %v90
  %v1653 = vpop.f32.mrb[0].mxu0
  %v1654 = vadd.f32 0.0, %v1653
  %v1655 = vpop.f32.mrb[0].mxu0
  %1656 = vmatprep.mubr.f32.mxu0 0.0
  %1657 = vmatmul.mubr.f32.gmra.mrb[0].mxu0 %v93
  %v1658 = vpop.f32.mrb[0].mxu0
  %v1659 = vadd.f32 0.0, %v1658
  %v1660 = vpop.f32.mrb[0].mxu0
  %1661 = vmatprep.mubr.f32.mxu0 0.0
  %1662 = vmatmul.mubr.f32.gmra.mrb[0].mxu0 %v96
  %v1663 = vpop.f32.mrb[0].mxu0
  %v1664 = vadd.f32 0.0, %v1663
  %v1665 = vpop.f32.mrb[0].mxu0
  %1666 = vmatprep.mubr.f32.mxu0 0.0
  %1667 = vmatmul.mubr.f32.gmra.mrb[0].mxu0 %v99
  %v1668 = vpop.f32.mrb[0].mxu0
  %v1669 = vadd.f32 0.0, %v1668
  %v1670 = vpop.f32.mrb[0].mxu0
  %1671 = vmatprep.mubr.f32.mxu0 0.0
  %1672 = vmatmul.mubr.f32.gmra.mrb[0].mxu0 %v102
  %v1673 = vpop.f32.mrb[0].mxu0
  %v1674 = vadd.f32 0.0, %v1673
  %v1675 = vpop.f32.mrb[0].mxu0
  %1676 = vmatprep.mubr.f32.mxu0 0.0
  %1677 = vmatmul.mubr.f32.gmra.mrb[0].mxu0 %v105
  %v1678 = vpop.f32.mrb[0].mxu0
  %v1679 = vadd.f32 0.0, %v1678
  %v1680 = vpop.f32.mrb[0].mxu0
  %1681 = vmatprep.mubr.f32.mxu0 0.0
  %1682 = vmatmul.mubr.f32.gmra.mrb[0].mxu0 %v108
  %v1683 = vpop.f32.mrb[0].mxu0
  %v1684 = vadd.f32 0.0, %v1683
  %v1685 = vpop.f32.mrb[0].mxu0
  %1686 = vmatprep.mubr.f32.mxu0 0.0
  %1687 = vmatmul.mubr.f32.gmra.mrb[0].mxu0 %v111
  %v1688 = vpop.f32.mrb[0].mxu0
  %v1689 = vadd.f32 0.0, %v1688
  %v1690 = vpop.f32.mrb[0].mxu0
  %1691 = vmatprep.mubr.f32.mxu0 0.0
  %1692 = vmatmul.mubr.f32.gmra.mrb[0].mxu0 %v114
  %v1693 = vpop.f32.mrb[0].mxu0
  %v1694 = vadd.f32 0.0, %v1693
  %v1695 = vpop.f32.mrb[0].mxu0
  %1696 = vmatprep.mubr.f32.mxu0 0.0
  %1697 = vmatmul.mubr.f32.gmra.mrb[0].mxu0 %v117
  %v1698 = vpop.f32.mrb[0].mxu0
  %v1699 = vadd.f32 0.0, %v1698
  %v1700 = vpop.f32.mrb[0].mxu0
  %1701 = vmatprep.mubr.f32.mxu0 0.0
  %1702 = vmatmul.mubr.f32.gmra.mrb[0].mxu0 %v120
  %v1703 = vpop.f32.mrb[0].mxu0
  %v1704 = vadd.f32 0.0, %v1703
  %v1705 = vpop.f32.mrb[0].mxu0
  %1706 = vmatprep.mubr.f32.mxu0 0.0
  %1707 = vmatmul.mubr.f32.gmra.mrb[0].mxu0 %v123
  %v1708 = vpop.f32.mrb[0].mxu0
  %v1709 = vadd.f32 0.0, %v1708
  %v1710 = vpop.f32.mrb[0].mxu0
  %1711 = vmatprep.mubr.f32.mxu0 0.0
  %1712 = vmatmul.mubr.f32.gmra.mrb[0].mxu0 %v126
  %v1713 = vpop.f32.mrb[0].mxu0
  %v1714 = vadd.f32 0.0, %v1713
  %v1715 = vpop.f32.mrb[0].mxu0
  %1716 = vmatprep.mubr.f32.mxu0 0.0
  %1717 = vmatmul.mubr.f32.gmra.mrb[0].mxu0 %v129
  %v1718 = vpop.f32.mrb[0].mxu0
  %v1719 = vadd.f32 0.0, %v1718
  %v1720 = vpop.f32.mrb[0].mxu0
  %1721 = vmatprep.mubr.f32.mxu0 0.0
  %1722 = vmatmul.mubr.f32.gmra.mrb[0].mxu0 %v132
  %v1723 = vpop.f32.mrb[0].mxu0
  %v1724 = vadd.f32 0.0, %v1723
  %v1725 = vpop.f32.mrb[0].mxu0
  %1726 = vmatprep.mubr.f32.mxu0 0.0
  %1727 = vmatmul.mubr.f32.gmra.mrb[0].mxu0 %v135
  %v1728 = vpop.f32.mrb[0].mxu0
  %v1729 = vadd.f32 0.0, %v1728
  %v1730 = vpop.f32.mrb[0].mxu0
  %1731 = vmatprep.mubr.f32.mxu0 0.0
  %1732 = vmatmul.mubr.f32.gmra.mrb[0].mxu0 %v138
  %v1733 = vpop.f32.mrb[0].mxu0
  %v1734 = vadd.f32 0.0, %v1733
  %v1735 = vpop.f32.mrb[0].mxu0
  %1736 = vmatprep.mubr.f32.mxu0 0.0
  %1737 = vmatmul.mubr.f32.gmra.mrb[0].mxu0 %v141
  %v1738 = vpop.f32.mrb[0].mxu0
  %v1739 = vadd.f32 0.0, %v1738
  %v1740 = vpop.f32.mrb[0].mxu0
  %1741 = vmatprep.mubr.f32.mxu0 0.0
  %1742 = vmatmul.mubr.f32.gmra.mrb[0].mxu0 %v144
  %v1743 = vpop.f32.mrb[0].mxu0
  %v1744 = vadd.f32 0.0, %v1743
  %v1745 = vpop.f32.mrb[0].mxu0
  %1746 = vmatprep.mubr.f32.mxu0 0.0
  %1747 = vmatmul.mubr.f32.gmra.mrb[0].mxu0 %v913
  %v1748 = vpop.f32.mrb[0].mxu0
  %v1749 = vadd.f32 0.0, %v1748
  %v1750 = vpop.f32.mrb[0].mxu0
  %1751 = vmatprep.mubr.f32.mxu0 0.0
  %1752 = vmatmul.mubr.f32.gmra.mrb[0].mxu0 %v1350
  %v1753 = vpop.f32.mrb[0].mxu0
  %v1754 = vadd.f32 0.0, %v1753
  %v1755 = vpop.f32.mrb[0].mxu0
  %1756 = vdwg.mxu0
  %v1757 = vadd.f32 %v1320, %v1639
  %v1758 = vadd.f32 %v1321, %v1644
  %v1759 = vadd.f32 %v1322, %v1649
  %v1760 = vadd.f32 %v1323, %v1654
  %v1761 = vadd.f32 %v1324, %v1659
  %v1762 = vadd.f32 %v1325, %v1664
  %v1763 = vadd.f32 %v1326, %v1669
  %v1764 = vadd.f32 %v1327, %v1674
  %v1765 = vadd.f32 %v1328, %v1679
  %v1766 = vadd.f32 %v1329, %v1684
  %v1767 = vadd.f32 %v1330, %v1689
  %v1768 = vadd.f32 %v1331, %v1694
  %v1769 = vadd.f32 %v1332, %v1699
  %v1770 = vadd.f32 %v1333, %v1704
  %v1771 = vadd.f32 %v1334, %v1709
  %v1772 = vadd.f32 %v1335, %v1714
  %v1773 = vadd.f32 %v1336, %v1719
  %v1774 = vadd.f32 %v1337, %v1724
  %v1775 = vadd.f32 %v1338, %v1729
  %v1776 = vadd.f32 %v1339, %v1734
  %v1777 = vadd.f32 %v1340, %v1739
  %v1778 = vadd.f32 %v1341, %v1744
  %v1779 = vadd.f32 %v1342, %v1749
  %v1780 = vadd.f32 %v1343, %v1754
  %s1781 = scalar_lea.vmem %s1, 128
  %v1782 = vld [vmem:[%s1781] sm:$0xff]
  %v1783 = vld [vmem:[%s1781 + $0x8] sm:$0xff]
  %v1784 = vld [vmem:[%s1781 + $0x10] sm:$0xff]
  %v1785 = vld [vmem:[%s1781 + $0x18] sm:$0xf]
  %v1787 = vsel %vm73, %v59, 0
  %v1790 = vsel %vm146, %v1785, 0
  %1792 = vmatprep.subr.mxu0 0.0
  %1793 = vmatpush1.msra.mxu0 %v1782
  %1794 = vmatprep.subr.mxu0 0.0
  %1795 = vmatpush1.msra.mxu0 %v1783
  %1796 = vmatprep.subr.mxu0 0.0
  %1797 = vmatpush1.msra.mxu0 %v1784
  %1798 = vmatprep.subr.mxu0 0.0
  %1799 = vmatpush1.msra.mxu0 %v1790
  %1800 = vmatprep.subr.mxu0 0.0
  %1801 = vmatpush1.msra.mxu0 0.0
  %1802 = vmatprep.subr.mxu0 0.0
  %1803 = vmatpush1.msra.mxu0 0.0
  %1804 = vmatprep.subr.mxu0 0.0
  %1805 = vmatpush1.msra.mxu0 0.0
  %1806 = vmatprep.subr.mxu0 0.0
  %1807 = vmatpush1.msra.mxu0 0.0
  %1808 = vmatprep.subr.mxu0 0.0
  %1809 = vmatpush1.msra.mxu0 0.0
  %1810 = vmatprep.subr.mxu0 0.0
  %1811 = vmatpush1.msra.mxu0 0.0
  %1812 = vmatprep.subr.mxu0 0.0
  %1813 = vmatpush1.msra.mxu0 0.0
  %1814 = vmatprep.subr.mxu0 0.0
  %1815 = vmatpush1.msra.mxu0 0.0
  %1816 = vmatprep.subr.mxu0 0.0
  %1817 = vmatpush1.msra.mxu0 0.0
  %1818 = vmatprep.subr.mxu0 0.0
  %1819 = vmatpush1.msra.mxu0 0.0
  %1820 = vmatprep.subr.mxu0 0.0
  %1821 = vmatpush1.msra.mxu0 0.0
  %1822 = vmatprep.subr.mxu0 0.0
  %1823 = vmatpush1.msra.mxu0 0.0
  %1824 = vmatprep.subr.mxu0 0.0
  %1825 = vmatpush1.msra.mxu0 0.0
  %1826 = vmatprep.subr.mxu0 0.0
  %1827 = vmatpush1.msra.mxu0 0.0
  %1828 = vmatprep.subr.mxu0 0.0
  %1829 = vmatpush1.msra.mxu0 0.0
  %1830 = vmatprep.subr.mxu0 0.0
  %1831 = vmatpush1.msra.mxu0 0.0
  %1832 = vmatprep.subr.mxu0 0.0
  %1833 = vmatpush1.msra.mxu0 0.0
  %1834 = vmatprep.subr.mxu0 0.0
  %1835 = vmatpush1.msra.mxu0 0.0
  %1836 = vmatprep.subr.mxu0 0.0
  %1837 = vmatpush1.msra.mxu0 0.0
  %1838 = vmatprep.subr.mxu0 0.0
  %1839 = vmatpush1.msra.mxu0 0.0
  %1840 = vmatprep.subr.mxu0 0.0
  %1841 = vmatpush1.msra.mxu0 0.0
  %1842 = vmatprep.subr.mxu0 0.0
  %1843 = vmatpush1.msra.mxu0 0.0
  %1844 = vmatprep.subr.mxu0 0.0
  %1845 = vmatpush1.msra.mxu0 0.0
  %1846 = vmatprep.subr.mxu0 0.0
  %1847 = vmatpush1.msra.mxu0 0.0
  %1848 = vmatprep.subr.mxu0 0.0
  %1849 = vmatpush1.msra.mxu0 0.0
  %1850 = vmatprep.subr.mxu0 0.0
  %1851 = vmatpush1.msra.mxu0 0.0
  %1852 = vmatprep.subr.mxu0 0.0
  %1853 = vmatpush1.msra.mxu0 0.0
  %1854 = vmatprep.subr.mxu0 0.0
  %1855 = vmatpush1.msra.mxu0 0.0
  %1856 = vmatprep.mubr.f32.mxu0 0.0
  %1857 = vmatmul.mubr.f32.gmra.mrb[0].mxu0 %v84
  %v1858 = vpop.f32.mrb[0].mxu0
  %v1859 = vadd.f32 0.0, %v1858
  %v1860 = vpop.f32.mrb[0].mxu0
  %1861 = vmatprep.mubr.f32.mxu0 0.0
  %1862 = vmatmul.mubr.f32.gmra.mrb[0].mxu0 %v87
  %v1863 = vpop.f32.mrb[0].mxu0
  %v1864 = vadd.f32 0.0, %v1863
  %v1865 = vpop.f32.mrb[0].mxu0
  %1866 = vmatprep.mubr.f32.mxu0 0.0
  %1867 = vmatmul.mubr.f32.gmra.mrb[0].mxu0 %v90
  %v1868 = vpop.f32.mrb[0].mxu0
  %v1869 = vadd.f32 0.0, %v1868
  %v1870 = vpop.f32.mrb[0].mxu0
  %1871 = vmatprep.mubr.f32.mxu0 0.0
  %1872 = vmatmul.mubr.f32.gmra.mrb[0].mxu0 %v93
  %v1873 = vpop.f32.mrb[0].mxu0
  %v1874 = vadd.f32 0.0, %v1873
  %v1875 = vpop.f32.mrb[0].mxu0
  %1876 = vmatprep.mubr.f32.mxu0 0.0
  %1877 = vmatmul.mubr.f32.gmra.mrb[0].mxu0 %v96
  %v1878 = vpop.f32.mrb[0].mxu0
  %v1879 = vadd.f32 0.0, %v1878
  %v1880 = vpop.f32.mrb[0].mxu0
  %1881 = vmatprep.mubr.f32.mxu0 0.0
  %1882 = vmatmul.mubr.f32.gmra.mrb[0].mxu0 %v99
  %v1883 = vpop.f32.mrb[0].mxu0
  %v1884 = vadd.f32 0.0, %v1883
  %v1885 = vpop.f32.mrb[0].mxu0
  %1886 = vmatprep.mubr.f32.mxu0 0.0
  %1887 = vmatmul.mubr.f32.gmra.mrb[0].mxu0 %v102
  %v1888 = vpop.f32.mrb[0].mxu0
  %v1889 = vadd.f32 0.0, %v1888
  %v1890 = vpop.f32.mrb[0].mxu0
  %1891 = vmatprep.mubr.f32.mxu0 0.0
  %1892 = vmatmul.mubr.f32.gmra.mrb[0].mxu0 %v105
  %v1893 = vpop.f32.mrb[0].mxu0
  %v1894 = vadd.f32 0.0, %v1893
  %v1895 = vpop.f32.mrb[0].mxu0
  %1896 = vmatprep.mubr.f32.mxu0 0.0
  %1897 = vmatmul.mubr.f32.gmra.mrb[0].mxu0 %v108
  %v1898 = vpop.f32.mrb[0].mxu0
  %v1899 = vadd.f32 0.0, %v1898
  %v1900 = vpop.f32.mrb[0].mxu0
  %1901 = vmatprep.mubr.f32.mxu0 0.0
  %1902 = vmatmul.mubr.f32.gmra.mrb[0].mxu0 %v111
  %v1903 = vpop.f32.mrb[0].mxu0
  %v1904 = vadd.f32 0.0, %v1903
  %v1905 = vpop.f32.mrb[0].mxu0
  %1906 = vmatprep.mubr.f32.mxu0 0.0
  %1907 = vmatmul.mubr.f32.gmra.mrb[0].mxu0 %v114
  %v1908 = vpop.f32.mrb[0].mxu0
  %v1909 = vadd.f32 0.0, %v1908
  %v1910 = vpop.f32.mrb[0].mxu0
  %1911 = vmatprep.mubr.f32.mxu0 0.0
  %1912 = vmatmul.mubr.f32.gmra.mrb[0].mxu0 %v117
  %v1913 = vpop.f32.mrb[0].mxu0
  %v1914 = vadd.f32 0.0, %v1913
  %v1915 = vpop.f32.mrb[0].mxu0
  %1916 = vmatprep.mubr.f32.mxu0 0.0
  %1917 = vmatmul.mubr.f32.gmra.mrb[0].mxu0 %v120
  %v1918 = vpop.f32.mrb[0].mxu0
  %v1919 = vadd.f32 0.0, %v1918
  %v1920 = vpop.f32.mrb[0].mxu0
  %1921 = vmatprep.mubr.f32.mxu0 0.0
  %1922 = vmatmul.mubr.f32.gmra.mrb[0].mxu0 %v123
  %v1923 = vpop.f32.mrb[0].mxu0
  %v1924 = vadd.f32 0.0, %v1923
  %v1925 = vpop.f32.mrb[0].mxu0
  %1926 = vmatprep.mubr.f32.mxu0 0.0
  %1927 = vmatmul.mubr.f32.gmra.mrb[0].mxu0 %v126
  %v1928 = vpop.f32.mrb[0].mxu0
  %v1929 = vadd.f32 0.0, %v1928
  %v1930 = vpop.f32.mrb[0].mxu0
  %1931 = vmatprep.mubr.f32.mxu0 0.0
  %1932 = vmatmul.mubr.f32.gmra.mrb[0].mxu0 %v129
  %v1933 = vpop.f32.mrb[0].mxu0
  %v1934 = vadd.f32 0.0, %v1933
  %v1935 = vpop.f32.mrb[0].mxu0
  %1936 = vmatprep.mubr.f32.mxu0 0.0
  %1937 = vmatmul.mubr.f32.gmra.mrb[0].mxu0 %v132
  %v1938 = vpop.f32.mrb[0].mxu0
  %v1939 = vadd.f32 0.0, %v1938
  %v1940 = vpop.f32.mrb[0].mxu0
  %1941 = vmatprep.mubr.f32.mxu0 0.0
  %1942 = vmatmul.mubr.f32.gmra.mrb[0].mxu0 %v135
  %v1943 = vpop.f32.mrb[0].mxu0
  %v1944 = vadd.f32 0.0, %v1943
  %v1945 = vpop.f32.mrb[0].mxu0
  %1946 = vmatprep.mubr.f32.mxu0 0.0
  %1947 = vmatmul.mubr.f32.gmra.mrb[0].mxu0 %v138
  %v1948 = vpop.f32.mrb[0].mxu0
  %v1949 = vadd.f32 0.0, %v1948
  %v1950 = vpop.f32.mrb[0].mxu0
  %1951 = vmatprep.mubr.f32.mxu0 0.0
  %1952 = vmatmul.mubr.f32.gmra.mrb[0].mxu0 %v141
  %v1953 = vpop.f32.mrb[0].mxu0
  %v1954 = vadd.f32 0.0, %v1953
  %v1955 = vpop.f32.mrb[0].mxu0
  %1956 = vmatprep.mubr.f32.mxu0 0.0
  %1957 = vmatmul.mubr.f32.gmra.mrb[0].mxu0 %v144
  %v1958 = vpop.f32.mrb[0].mxu0
  %v1959 = vadd.f32 0.0, %v1958
  %v1960 = vpop.f32.mrb[0].mxu0
  %1961 = vmatprep.mubr.f32.mxu0 0.0
  %1962 = vmatmul.mubr.f32.gmra.mrb[0].mxu0 %v913
  %v1963 = vpop.f32.mrb[0].mxu0
  %v1964 = vadd.f32 0.0, %v1963
  %v1965 = vpop.f32.mrb[0].mxu0
  %1966 = vmatprep.mubr.f32.mxu0 0.0
  %1967 = vmatmul.mubr.f32.gmra.mrb[0].mxu0 %v1350
  %v1968 = vpop.f32.mrb[0].mxu0
  %v1969 = vadd.f32 0.0, %v1968
  %v1970 = vpop.f32.mrb[0].mxu0
  %1971 = vmatprep.mubr.f32.mxu0 0.0
  %1972 = vmatmul.mubr.f32.gmra.mrb[0].mxu0 %v1787
  %v1973 = vpop.f32.mrb[0].mxu0
  %v1974 = vadd.f32 0.0, %v1973
  %v1975 = vpop.f32.mrb[0].mxu0
  %1976 = vdwg.mxu0
  %v1977 = vadd.f32 %v1540, %v1859
  %v1978 = vadd.f32 %v1541, %v1864
  %v1979 = vadd.f32 %v1542, %v1869
  %v1980 = vadd.f32 %v1543, %v1874
  %v1981 = vadd.f32 %v1544, %v1879
  %v1982 = vadd.f32 %v1545, %v1884
  %v1983 = vadd.f32 %v1546, %v1889
  %v1984 = vadd.f32 %v1547, %v1894
  %v1985 = vadd.f32 %v1548, %v1899
  %v1986 = vadd.f32 %v1549, %v1904
  %v1987 = vadd.f32 %v1550, %v1909
  %v1988 = vadd.f32 %v1551, %v1914
  %v1989 = vadd.f32 %v1552, %v1919
  %v1990 = vadd.f32 %v1553, %v1924
  %v1991 = vadd.f32 %v1554, %v1929
  %v1992 = vadd.f32 %v1555, %v1934
  %v1993 = vadd.f32 %v1556, %v1939
  %v1994 = vadd.f32 %v1557, %v1944
  %v1995 = vadd.f32 %v1558, %v1949
  %v1996 = vadd.f32 %v1559, %v1954
  %v1997 = vadd.f32 %v1560, %v1959
  %v1998 = vadd.f32 %v1561, %v1964
  %v1999 = vadd.f32 %v1562, %v1969
  %v2000 = vadd.f32 %v1563, %v1974
  %s2001 = scalar_lea.vmem %s2, 128
  %v2002 = vld [vmem:[%s2001] sm:$0xff]
  %v2003 = vld [vmem:[%s2001 + $0x8] sm:$0xff]
  %v2004 = vld [vmem:[%s2001 + $0x10] sm:$0xff]
  %v2005 = vld [vmem:[%s2001 + $0x18] sm:$0xf]
  %v2007 = vsel %vm146, %v2005, 0
  %2009 = vmatprep.subr.mxu0 0.0
  %2010 = vmatpush1.msra.mxu0 %v2002
  %2011 = vmatprep.subr.mxu0 0.0
  %2012 = vmatpush1.msra.mxu0 %v2003
  %2013 = vmatprep.subr.mxu0 0.0
  %2014 = vmatpush1.msra.mxu0 %v2004
  %2015 = vmatprep.subr.mxu0 0.0
  %2016 = vmatpush1.msra.mxu0 %v2007
  %2017 = vmatprep.subr.mxu0 0.0
  %2018 = vmatpush1.msra.mxu0 0.0
  %2019 = vmatprep.subr.mxu0 0.0
  %2020 = vmatpush1.msra.mxu0 0.0
  %2021 = vmatprep.subr.mxu0 0.0
  %2022 = vmatpush1.msra.mxu0 0.0
  %2023 = vmatprep.subr.mxu0 0.0
  %2024 = vmatpush1.msra.mxu0 0.0
  %2025 = vmatprep.subr.mxu0 0.0
  %2026 = vmatpush1.msra.mxu0 0.0
  %2027 = vmatprep.subr.mxu0 0.0
  %2028 = vmatpush1.msra.mxu0 0.0
  %2029 = vmatprep.subr.mxu0 0.0
  %2030 = vmatpush1.msra.mxu0 0.0
  %2031 = vmatprep.subr.mxu0 0.0
  %2032 = vmatpush1.msra.mxu0 0.0
  %2033 = vmatprep.subr.mxu0 0.0
  %2034 = vmatpush1.msra.mxu0 0.0
  %2035 = vmatprep.subr.mxu0 0.0
  %2036 = vmatpush1.msra.mxu0 0.0
  %2037 = vmatprep.subr.mxu0 0.0
  %2038 = vmatpush1.msra.mxu0 0.0
  %2039 = vmatprep.subr.mxu0 0.0
  %2040 = vmatpush1.msra.mxu0 0.0
  %2041 = vmatprep.subr.mxu0 0.0
  %2042 = vmatpush1.msra.mxu0 0.0
  %2043 = vmatprep.subr.mxu0 0.0
  %2044 = vmatpush1.msra.mxu0 0.0
  %2045 = vmatprep.subr.mxu0 0.0
  %2046 = vmatpush1.msra.mxu0 0.0
  %2047 = vmatprep.subr.mxu0 0.0
  %2048 = vmatpush1.msra.mxu0 0.0
  %2049 = vmatprep.subr.mxu0 0.0
  %2050 = vmatpush1.msra.mxu0 0.0
  %2051 = vmatprep.subr.mxu0 0.0
  %2052 = vmatpush1.msra.mxu0 0.0
  %2053 = vmatprep.subr.mxu0 0.0
  %2054 = vmatpush1.msra.mxu0 0.0
  %2055 = vmatprep.subr.mxu0 0.0
  %2056 = vmatpush1.msra.mxu0 0.0
  %2057 = vmatprep.subr.mxu0 0.0
  %2058 = vmatpush1.msra.mxu0 0.0
  %2059 = vmatprep.subr.mxu0 0.0
  %2060 = vmatpush1.msra.mxu0 0.0
  %2061 = vmatprep.subr.mxu0 0.0
  %2062 = vmatpush1.msra.mxu0 0.0
  %2063 = vmatprep.subr.mxu0 0.0
  %2064 = vmatpush1.msra.mxu0 0.0
  %2065 = vmatprep.subr.mxu0 0.0
  %2066 = vmatpush1.msra.mxu0 0.0
  %2067 = vmatprep.subr.mxu0 0.0
  %2068 = vmatpush1.msra.mxu0 0.0
  %2069 = vmatprep.subr.mxu0 0.0
  %2070 = vmatpush1.msra.mxu0 0.0
  %2071 = vmatprep.subr.mxu0 0.0
  %2072 = vmatpush1.msra.mxu0 0.0
  %2073 = vmatprep.mubr.f32.mxu0 0.0
  %2074 = vmatmul.mubr.f32.gmra.mrb[0].mxu0 %v84
  %v2075 = vpop.f32.mrb[0].mxu0
  %v2076 = vadd.f32 0.0, %v2075
  %v2077 = vpop.f32.mrb[0].mxu0
  %2078 = vmatprep.mubr.f32.mxu0 0.0
  %2079 = vmatmul.mubr.f32.gmra.mrb[0].mxu0 %v87
  %v2080 = vpop.f32.mrb[0].mxu0
  %v2081 = vadd.f32 0.0, %v2080
  %v2082 = vpop.f32.mrb[0].mxu0
  %2083 = vmatprep.mubr.f32.mxu0 0.0
  %2084 = vmatmul.mubr.f32.gmra.mrb[0].mxu0 %v90
  %v2085 = vpop.f32.mrb[0].mxu0
  %v2086 = vadd.f32 0.0, %v2085
  %v2087 = vpop.f32.mrb[0].mxu0
  %2088 = vmatprep.mubr.f32.mxu0 0.0
  %2089 = vmatmul.mubr.f32.gmra.mrb[0].mxu0 %v93
  %v2090 = vpop.f32.mrb[0].mxu0
  %v2091 = vadd.f32 0.0, %v2090
  %v2092 = vpop.f32.mrb[0].mxu0
  %2093 = vmatprep.mubr.f32.mxu0 0.0
  %2094 = vmatmul.mubr.f32.gmra.mrb[0].mxu0 %v96
  %v2095 = vpop.f32.mrb[0].mxu0
  %v2096 = vadd.f32 0.0, %v2095
  %v2097 = vpop.f32.mrb[0].mxu0
  %2098 = vmatprep.mubr.f32.mxu0 0.0
  %2099 = vmatmul.mubr.f32.gmra.mrb[0].mxu0 %v99
  %v2100 = vpop.f32.mrb[0].mxu0
  %v2101 = vadd.f32 0.0, %v2100
  %v2102 = vpop.f32.mrb[0].mxu0
  %2103 = vmatprep.mubr.f32.mxu0 0.0
  %2104 = vmatmul.mubr.f32.gmra.mrb[0].mxu0 %v102
  %v2105 = vpop.f32.mrb[0].mxu0
  %v2106 = vadd.f32 0.0, %v2105
  %v2107 = vpop.f32.mrb[0].mxu0
  %2108 = vmatprep.mubr.f32.mxu0 0.0
  %2109 = vmatmul.mubr.f32.gmra.mrb[0].mxu0 %v105
  %v2110 = vpop.f32.mrb[0].mxu0
  %v2111 = vadd.f32 0.0, %v2110
  %v2112 = vpop.f32.mrb[0].mxu0
  %2113 = vmatprep.mubr.f32.mxu0 0.0
  %2114 = vmatmul.mubr.f32.gmra.mrb[0].mxu0 %v108
  %v2115 = vpop.f32.mrb[0].mxu0
  %v2116 = vadd.f32 0.0, %v2115
  %v2117 = vpop.f32.mrb[0].mxu0
  %2118 = vmatprep.mubr.f32.mxu0 0.0
  %2119 = vmatmul.mubr.f32.gmra.mrb[0].mxu0 %v111
  %v2120 = vpop.f32.mrb[0].mxu0
  %v2121 = vadd.f32 0.0, %v2120
  %v2122 = vpop.f32.mrb[0].mxu0
  %2123 = vmatprep.mubr.f32.mxu0 0.0
  %2124 = vmatmul.mubr.f32.gmra.mrb[0].mxu0 %v114
  %v2125 = vpop.f32.mrb[0].mxu0
  %v2126 = vadd.f32 0.0, %v2125
  %v2127 = vpop.f32.mrb[0].mxu0
  %2128 = vmatprep.mubr.f32.mxu0 0.0
  %2129 = vmatmul.mubr.f32.gmra.mrb[0].mxu0 %v117
  %v2130 = vpop.f32.mrb[0].mxu0
  %v2131 = vadd.f32 0.0, %v2130
  %v2132 = vpop.f32.mrb[0].mxu0
  %2133 = vmatprep.mubr.f32.mxu0 0.0
  %2134 = vmatmul.mubr.f32.gmra.mrb[0].mxu0 %v120
  %v2135 = vpop.f32.mrb[0].mxu0
  %v2136 = vadd.f32 0.0, %v2135
  %v2137 = vpop.f32.mrb[0].mxu0
  %2138 = vmatprep.mubr.f32.mxu0 0.0
  %2139 = vmatmul.mubr.f32.gmra.mrb[0].mxu0 %v123
  %v2140 = vpop.f32.mrb[0].mxu0
  %v2141 = vadd.f32 0.0, %v2140
  %v2142 = vpop.f32.mrb[0].mxu0
  %2143 = vmatprep.mubr.f32.mxu0 0.0
  %2144 = vmatmul.mubr.f32.gmra.mrb[0].mxu0 %v126
  %v2145 = vpop.f32.mrb[0].mxu0
  %v2146 = vadd.f32 0.0, %v2145
  %v2147 = vpop.f32.mrb[0].mxu0
  %2148 = vmatprep.mubr.f32.mxu0 0.0
  %2149 = vmatmul.mubr.f32.gmra.mrb[0].mxu0 %v129
  %v2150 = vpop.f32.mrb[0].mxu0
  %v2151 = vadd.f32 0.0, %v2150
  %v2152 = vpop.f32.mrb[0].mxu0
  %2153 = vmatprep.mubr.f32.mxu0 0.0
  %2154 = vmatmul.mubr.f32.gmra.mrb[0].mxu0 %v132
  %v2155 = vpop.f32.mrb[0].mxu0
  %v2156 = vadd.f32 0.0, %v2155
  %v2157 = vpop.f32.mrb[0].mxu0
  %2158 = vmatprep.mubr.f32.mxu0 0.0
  %2159 = vmatmul.mubr.f32.gmra.mrb[0].mxu0 %v135
  %v2160 = vpop.f32.mrb[0].mxu0
  %v2161 = vadd.f32 0.0, %v2160
  %v2162 = vpop.f32.mrb[0].mxu0
  %2163 = vmatprep.mubr.f32.mxu0 0.0
  %2164 = vmatmul.mubr.f32.gmra.mrb[0].mxu0 %v138
  %v2165 = vpop.f32.mrb[0].mxu0
  %v2166 = vadd.f32 0.0, %v2165
  %v2167 = vpop.f32.mrb[0].mxu0
  %2168 = vmatprep.mubr.f32.mxu0 0.0
  %2169 = vmatmul.mubr.f32.gmra.mrb[0].mxu0 %v141
  %v2170 = vpop.f32.mrb[0].mxu0
  %v2171 = vadd.f32 0.0, %v2170
  %v2172 = vpop.f32.mrb[0].mxu0
  %2173 = vmatprep.mubr.f32.mxu0 0.0
  %2174 = vmatmul.mubr.f32.gmra.mrb[0].mxu0 %v144
  %v2175 = vpop.f32.mrb[0].mxu0
  %v2176 = vadd.f32 0.0, %v2175
  %v2177 = vpop.f32.mrb[0].mxu0
  %2178 = vmatprep.mubr.f32.mxu0 0.0
  %2179 = vmatmul.mubr.f32.gmra.mrb[0].mxu0 %v913
  %v2180 = vpop.f32.mrb[0].mxu0
  %v2181 = vadd.f32 0.0, %v2180
  %v2182 = vpop.f32.mrb[0].mxu0
  %2183 = vmatprep.mubr.f32.mxu0 0.0
  %2184 = vmatmul.mubr.f32.gmra.mrb[0].mxu0 %v1350
  %v2185 = vpop.f32.mrb[0].mxu0
  %v2186 = vadd.f32 0.0, %v2185
  %v2187 = vpop.f32.mrb[0].mxu0
  %2188 = vmatprep.mubr.f32.mxu0 0.0
  %2189 = vmatmul.mubr.f32.gmra.mrb[0].mxu0 %v1787
  %v2190 = vpop.f32.mrb[0].mxu0
  %v2191 = vadd.f32 0.0, %v2190
  %v2192 = vpop.f32.mrb[0].mxu0
  %2193 = vdwg.mxu0
  %v2194 = vadd.f32 %v1757, %v2076
  %v2195 = vadd.f32 %v1758, %v2081
  %v2196 = vadd.f32 %v1759, %v2086
  %v2197 = vadd.f32 %v1760, %v2091
  %v2198 = vadd.f32 %v1761, %v2096
  %v2199 = vadd.f32 %v1762, %v2101
  %v2200 = vadd.f32 %v1763, %v2106
  %v2201 = vadd.f32 %v1764, %v2111
  %v2202 = vadd.f32 %v1765, %v2116
  %v2203 = vadd.f32 %v1766, %v2121
  %v2204 = vadd.f32 %v1767, %v2126
  %v2205 = vadd.f32 %v1768, %v2131
  %v2206 = vadd.f32 %v1769, %v2136
  %v2207 = vadd.f32 %v1770, %v2141
  %v2208 = vadd.f32 %v1771, %v2146
  %v2209 = vadd.f32 %v1772, %v2151
  %v2210 = vadd.f32 %v1773, %v2156
  %v2211 = vadd.f32 %v1774, %v2161
  %v2212 = vadd.f32 %v1775, %v2166
  %v2213 = vadd.f32 %v1776, %v2171
  %v2214 = vadd.f32 %v1777, %v2176
  %v2215 = vadd.f32 %v1778, %v2181
  %v2216 = vadd.f32 %v1779, %v2186
  %v2217 = vadd.f32 %v1780, %v2191
  %v2218 = vmax.f32 %v1977, %v2194
  %v2219 = vmax.f32 %v1978, %v2195
  %v2220 = vmax.f32 %v1979, %v2196
  %v2221 = vmax.f32 %v1980, %v2197
  %v2222 = vmax.f32 %v1981, %v2198
  %v2223 = vmax.f32 %v1982, %v2199
  %v2224 = vmax.f32 %v1983, %v2200
  %v2225 = vmax.f32 %v1984, %v2201
  %v2226 = vmax.f32 %v1985, %v2202
  %v2227 = vmax.f32 %v1986, %v2203
  %v2228 = vmax.f32 %v1987, %v2204
  %v2229 = vmax.f32 %v1988, %v2205
  %v2230 = vmax.f32 %v1989, %v2206
  %v2231 = vmax.f32 %v1990, %v2207
  %v2232 = vmax.f32 %v1991, %v2208
  %v2233 = vmax.f32 %v1992, %v2209
  %v2234 = vmax.f32 %v1993, %v2210
  %v2235 = vmax.f32 %v1994, %v2211
  %v2236 = vmax.f32 %v1995, %v2212
  %v2237 = vmax.f32 %v1996, %v2213
  %v2238 = vmax.f32 %v1997, %v2214
  %v2239 = vmax.f32 %v1998, %v2215
  %v2240 = vmax.f32 %v1999, %v2216
  %v2241 = vmax.f32 %v2000, %v2217
  %v2242 = vld [vmem:[%s3] sm:$0x1]
  %v2244 = vlaneseq
  %v2245 = vshrl.u32 %v2244, 7
  %v2246 = vsub.s32 0, %v2245
  %v2247 = vrot.slane %v2242, %v2246
  %v2249 = vadd.f32 %v2218, %v2247
  %v2250 = vadd.f32 %v2219, %v2247
  %v2251 = vadd.f32 %v2220, %v2247
  %v2252 = vadd.f32 %v2221, %v2247
  %v2253 = vadd.f32 %v2222, %v2247
  %v2254 = vadd.f32 %v2223, %v2247
  %v2255 = vadd.f32 %v2224, %v2247
  %v2256 = vadd.f32 %v2225, %v2247
  %v2257 = vadd.f32 %v2226, %v2247
  %v2258 = vadd.f32 %v2227, %v2247
  %v2259 = vadd.f32 %v2228, %v2247
  %v2260 = vadd.f32 %v2229, %v2247
  %v2261 = vadd.f32 %v2230, %v2247
  %v2262 = vadd.f32 %v2231, %v2247
  %v2263 = vadd.f32 %v2232, %v2247
  %v2264 = vadd.f32 %v2233, %v2247
  %v2265 = vadd.f32 %v2234, %v2247
  %v2266 = vadd.f32 %v2235, %v2247
  %v2267 = vadd.f32 %v2236, %v2247
  %v2268 = vadd.f32 %v2237, %v2247
  %v2269 = vadd.f32 %v2238, %v2247
  %v2270 = vadd.f32 %v2239, %v2247
  %v2271 = vadd.f32 %v2240, %v2247
  %v2272 = vadd.f32 %v2241, %v2247
  %v2273 = vmax.f32 %v2249, %v2250
  %v2274 = vmax.f32 %v2251, %v2252
  %v2275 = vmax.f32 %v2253, %v2254
  %v2276 = vmax.f32 %v2255, %v2256
  %v2277 = vmax.f32 %v2257, %v2258
  %v2278 = vmax.f32 %v2259, %v2260
  %v2279 = vmax.f32 %v2261, %v2262
  %v2280 = vmax.f32 %v2263, %v2264
  %v2281 = vmax.f32 %v2265, %v2266
  %v2282 = vmax.f32 %v2267, %v2268
  %v2283 = vmax.f32 %v2269, %v2270
  %v2284 = vmax.f32 %v2271, %v2272
  %v2285 = vmax.f32 %v2273, 0.0
  %v2286 = vmax.f32 %v2274, 0.0
  %v2287 = vmax.f32 %v2275, 0.0
  %v2288 = vmax.f32 %v2276, 0.0
  %v2289 = vmax.f32 %v2277, 0.0
  %v2290 = vmax.f32 %v2278, 0.0
  %v2291 = vmax.f32 %v2279, 0.0
  %v2292 = vmax.f32 %v2280, 0.0
  %v2293 = vmax.f32 %v2281, 0.0
  %v2294 = vmax.f32 %v2282, 0.0
  %v2295 = vmax.f32 %v2283, 0.0
  %v2296 = vmax.f32 %v2284, 0.0
  %v2297 = vld [vmem:[%s4] sm:$0xff]
  %v2298 = vld [vmem:[%s4 + $0x8] sm:$0xff]
  %v2299 = vld [vmem:[%s4 + $0x10] sm:$0xff]
  %v2300 = vld [vmem:[%s4 + $0x18] sm:$0xff]
  %v2301 = vld [vmem:[%s4 + $0x20] sm:$0xff]
  %v2302 = vld [vmem:[%s4 + $0x28] sm:$0xff]
  %v2303 = vld [vmem:[%s4 + $0x30] sm:$0xff]
  %v2304 = vld [vmem:[%s4 + $0x38] sm:$0xff]
  %v2305 = vld [vmem:[%s4 + $0x40] sm:$0xff]
  %v2306 = vld [vmem:[%s4 + $0x48] sm:$0xff]
  %v2307 = vld [vmem:[%s4 + $0x50] sm:$0xff]
  %v2308 = vld [vmem:[%s4 + $0x58] sm:$0xff]
  %v2309 = vld [vmem:[%s4 + $0x60] sm:$0xff]
  %v2310 = vld [vmem:[%s4 + $0x68] sm:$0xff]
  %v2311 = vld [vmem:[%s4 + $0x70] sm:$0xff]
  %v2312 = vld [vmem:[%s5] sm:$0xff]
  %v2313 = vld [vmem:[%s5 + $0x8] sm:$0xff]
  %v2314 = vld [vmem:[%s5 + $0x10] sm:$0xff]
  %v2315 = vld [vmem:[%s5 + $0x18] sm:$0xff]
  %v2316 = vld [vmem:[%s5 + $0x20] sm:$0xff]
  %v2317 = vld [vmem:[%s5 + $0x28] sm:$0xff]
  %v2318 = vld [vmem:[%s5 + $0x30] sm:$0xff]
  %v2319 = vld [vmem:[%s5 + $0x38] sm:$0xff]
  %v2320 = vld [vmem:[%s5 + $0x40] sm:$0xff]
  %v2321 = vld [vmem:[%s5 + $0x48] sm:$0xff]
  %v2322 = vld [vmem:[%s5 + $0x50] sm:$0xff]
  %v2323 = vld [vmem:[%s5 + $0x58] sm:$0xff]
  %v2324 = vld [vmem:[%s5 + $0x60] sm:$0xff]
  %v2325 = vld [vmem:[%s5 + $0x68] sm:$0xff]
  %v2326 = vld [vmem:[%s5 + $0x70] sm:$0xff]
  %s2327 = scalar_lea.vmem %s4, 120
  %v2328 = vld [vmem:[%s2327] sm:$0xff]
  %v2329 = vld [vmem:[%s2327 + $0x8] sm:$0xff]
  %v2330 = vld [vmem:[%s2327 + $0x10] sm:$0xff]
  %v2331 = vld [vmem:[%s2327 + $0x18] sm:$0xff]
  %v2332 = vld [vmem:[%s2327 + $0x20] sm:$0xff]
  %v2333 = vld [vmem:[%s2327 + $0x28] sm:$0xff]
  %v2334 = vld [vmem:[%s2327 + $0x30] sm:$0xff]
  %v2335 = vld [vmem:[%s2327 + $0x38] sm:$0xff]
  %v2336 = vld [vmem:[%s2327 + $0x40] sm:$0xff]
  %v2337 = vld [vmem:[%s2327 + $0x48] sm:$0xff]
  %v2338 = vld [vmem:[%s2327 + $0x50] sm:$0xff]
  %v2339 = vld [vmem:[%s2327 + $0x58] sm:$0xff]
  %v2340 = vld [vmem:[%s2327 + $0x60] sm:$0xff]
  %v2341 = vld [vmem:[%s2327 + $0x68] sm:$0xff]
  %v2342 = vld [vmem:[%s2327 + $0x70] sm:$0xff]
  %vm2343 = vcmask 982016
  %v2345 = vsel %vm2343, %v2286, 0
  %v2348 = vsel %vm2343, %v2287, 0
  %v2351 = vsel %vm2343, %v2288, 0
  %v2354 = vsel %vm2343, %v2289, 0
  %v2357 = vsel %vm2343, %v2290, 0
  %v2360 = vsel %vm2343, %v2291, 0
  %v2363 = vsel %vm2343, %v2292, 0
  %v2366 = vsel %vm2343, %v2293, 0
  %2368 = vmatprep.subr.mxu0 0.0
  %2369 = vmatpush1.msra.mxu0 %v2328
  %2370 = vmatprep.subr.mxu0 0.0
  %2371 = vmatpush1.msra.mxu0 %v2329
  %2372 = vmatprep.subr.mxu0 0.0
  %2373 = vmatpush1.msra.mxu0 %v2330
  %2374 = vmatprep.subr.mxu0 0.0
  %2375 = vmatpush1.msra.mxu0 %v2331
  %2376 = vmatprep.subr.mxu0 0.0
  %2377 = vmatpush1.msra.mxu0 %v2332
  %2378 = vmatprep.subr.mxu0 0.0
  %2379 = vmatpush1.msra.mxu0 %v2333
  %2380 = vmatprep.subr.mxu0 0.0
  %2381 = vmatpush1.msra.mxu0 %v2334
  %2382 = vmatprep.subr.mxu0 0.0
  %2383 = vmatpush1.msra.mxu0 %v2335
  %2384 = vmatprep.subr.mxu0 0.0
  %2385 = vmatpush1.msra.mxu0 %v2336
  %2386 = vmatprep.subr.mxu0 0.0
  %2387 = vmatpush1.msra.mxu0 %v2337
  %2388 = vmatprep.subr.mxu0 0.0
  %2389 = vmatpush1.msra.mxu0 %v2338
  %2390 = vmatprep.subr.mxu0 0.0
  %2391 = vmatpush1.msra.mxu0 %v2339
  %2392 = vmatprep.subr.mxu0 0.0
  %2393 = vmatpush1.msra.mxu0 %v2340
  %2394 = vmatprep.subr.mxu0 0.0
  %2395 = vmatpush1.msra.mxu0 %v2341
  %2396 = vmatprep.subr.mxu0 0.0
  %2397 = vmatpush1.msra.mxu0 %v2342
  %2398 = vmatprep.subr.mxu0 0.0
  %2399 = vmatpush1.msra.mxu0 0.0
  %2400 = vmatprep.subr.mxu0 0.0
  %2401 = vmatpush1.msra.mxu0 0.0
  %2402 = vmatprep.subr.mxu0 0.0
  %2403 = vmatpush1.msra.mxu0 0.0
  %2404 = vmatprep.subr.mxu0 0.0
  %2405 = vmatpush1.msra.mxu0 0.0
  %2406 = vmatprep.subr.mxu0 0.0
  %2407 = vmatpush1.msra.mxu0 0.0
  %2408 = vmatprep.subr.mxu0 0.0
  %2409 = vmatpush1.msra.mxu0 0.0
  %2410 = vmatprep.subr.mxu0 0.0
  %2411 = vmatpush1.msra.mxu0 0.0
  %2412 = vmatprep.subr.mxu0 0.0
  %2413 = vmatpush1.msra.mxu0 0.0
  %2414 = vmatprep.subr.mxu0 0.0
  %2415 = vmatpush1.msra.mxu0 0.0
  %2416 = vmatprep.subr.mxu0 0.0
  %2417 = vmatpush1.msra.mxu0 0.0
  %2418 = vmatprep.subr.mxu0 0.0
  %2419 = vmatpush1.msra.mxu0 0.0
  %2420 = vmatprep.subr.mxu0 0.0
  %2421 = vmatpush1.msra.mxu0 0.0
  %2422 = vmatprep.subr.mxu0 0.0
  %2423 = vmatpush1.msra.mxu0 0.0
  %2424 = vmatprep.subr.mxu0 0.0
  %2425 = vmatpush1.msra.mxu0 0.0
  %2426 = vmatprep.subr.mxu0 0.0
  %2427 = vmatpush1.msra.mxu0 0.0
  %2428 = vmatprep.subr.mxu0 0.0
  %2429 = vmatpush1.msra.mxu0 0.0
  %2430 = vmatprep.subr.mxu0 0.0
  %2431 = vmatpush1.msra.mxu0 0.0
  %2432 = vmatprep.mubr.f32.mxu0 0.0
  %2433 = vmatmul.mubr.f32.gmra.mrb[0].mxu0 %v2345
  %v2434 = vpop.f32.mrb[0].mxu0
  %v2435 = vadd.f32 0.0, %v2434
  %v2436 = vpop.f32.mrb[0].mxu0
  %2437 = vmatprep.mubr.f32.mxu0 0.0
  %2438 = vmatmul.mubr.f32.gmra.mrb[0].mxu0 %v2348
  %v2439 = vpop.f32.mrb[0].mxu0
  %v2440 = vadd.f32 0.0, %v2439
  %v2441 = vpop.f32.mrb[0].mxu0
  %2442 = vmatprep.mubr.f32.mxu0 0.0
  %2443 = vmatmul.mubr.f32.gmra.mrb[0].mxu0 %v2351
  %v2444 = vpop.f32.mrb[0].mxu0
  %v2445 = vadd.f32 0.0, %v2444
  %v2446 = vpop.f32.mrb[0].mxu0
  %2447 = vmatprep.mubr.f32.mxu0 0.0
  %2448 = vmatmul.mubr.f32.gmra.mrb[0].mxu0 %v2354
  %v2449 = vpop.f32.mrb[0].mxu0
  %v2450 = vadd.f32 0.0, %v2449
  %v2451 = vpop.f32.mrb[0].mxu0
  %2452 = vmatprep.mubr.f32.mxu0 0.0
  %2453 = vmatmul.mubr.f32.gmra.mrb[0].mxu0 %v2357
  %v2454 = vpop.f32.mrb[0].mxu0
  %v2455 = vadd.f32 0.0, %v2454
  %v2456 = vpop.f32.mrb[0].mxu0
  %2457 = vmatprep.mubr.f32.mxu0 0.0
  %2458 = vmatmul.mubr.f32.gmra.mrb[0].mxu0 %v2360
  %v2459 = vpop.f32.mrb[0].mxu0
  %v2460 = vadd.f32 0.0, %v2459
  %v2461 = vpop.f32.mrb[0].mxu0
  %2462 = vmatprep.mubr.f32.mxu0 0.0
  %2463 = vmatmul.mubr.f32.gmra.mrb[0].mxu0 %v2363
  %v2464 = vpop.f32.mrb[0].mxu0
  %v2465 = vadd.f32 0.0, %v2464
  %v2466 = vpop.f32.mrb[0].mxu0
  %2467 = vmatprep.mubr.f32.mxu0 0.0
  %2468 = vmatmul.mubr.f32.gmra.mrb[0].mxu0 %v2366
  %v2469 = vpop.f32.mrb[0].mxu0
  %v2470 = vadd.f32 0.0, %v2469
  %v2471 = vpop.f32.mrb[0].mxu0
  %2472 = vdwg.mxu0
  %v2474 = vsel %vm2343, %v2285, 0
  %2476 = vmatprep.subr.mxu0 0.0
  %2477 = vmatpush1.msra.mxu0 %v2297
  %2478 = vmatprep.subr.mxu0 0.0
  %2479 = vmatpush1.msra.mxu0 %v2298
  %2480 = vmatprep.subr.mxu0 0.0
  %2481 = vmatpush1.msra.mxu0 %v2299
  %2482 = vmatprep.subr.mxu0 0.0
  %2483 = vmatpush1.msra.mxu0 %v2300
  %2484 = vmatprep.subr.mxu0 0.0
  %2485 = vmatpush1.msra.mxu0 %v2301
  %2486 = vmatprep.subr.mxu0 0.0
  %2487 = vmatpush1.msra.mxu0 %v2302
  %2488 = vmatprep.subr.mxu0 0.0
  %2489 = vmatpush1.msra.mxu0 %v2303
  %2490 = vmatprep.subr.mxu0 0.0
  %2491 = vmatpush1.msra.mxu0 %v2304
  %2492 = vmatprep.subr.mxu0 0.0
  %2493 = vmatpush1.msra.mxu0 %v2305
  %2494 = vmatprep.subr.mxu0 0.0
  %2495 = vmatpush1.msra.mxu0 %v2306
  %2496 = vmatprep.subr.mxu0 0.0
  %2497 = vmatpush1.msra.mxu0 %v2307
  %2498 = vmatprep.subr.mxu0 0.0
  %2499 = vmatpush1.msra.mxu0 %v2308
  %2500 = vmatprep.subr.mxu0 0.0
  %2501 = vmatpush1.msra.mxu0 %v2309
  %2502 = vmatprep.subr.mxu0 0.0
  %2503 = vmatpush1.msra.mxu0 %v2310
  %2504 = vmatprep.subr.mxu0 0.0
  %2505 = vmatpush1.msra.mxu0 %v2311
  %2506 = vmatprep.subr.mxu0 0.0
  %2507 = vmatpush1.msra.mxu0 0.0
  %2508 = vmatprep.subr.mxu0 0.0
  %2509 = vmatpush1.msra.mxu0 0.0
  %2510 = vmatprep.subr.mxu0 0.0
  %2511 = vmatpush1.msra.mxu0 0.0
  %2512 = vmatprep.subr.mxu0 0.0
  %2513 = vmatpush1.msra.mxu0 0.0
  %2514 = vmatprep.subr.mxu0 0.0
  %2515 = vmatpush1.msra.mxu0 0.0
  %2516 = vmatprep.subr.mxu0 0.0
  %2517 = vmatpush1.msra.mxu0 0.0
  %2518 = vmatprep.subr.mxu0 0.0
  %2519 = vmatpush1.msra.mxu0 0.0
  %2520 = vmatprep.subr.mxu0 0.0
  %2521 = vmatpush1.msra.mxu0 0.0
  %2522 = vmatprep.subr.mxu0 0.0
  %2523 = vmatpush1.msra.mxu0 0.0
  %2524 = vmatprep.subr.mxu0 0.0
  %2525 = vmatpush1.msra.mxu0 0.0
  %2526 = vmatprep.subr.mxu0 0.0
  %2527 = vmatpush1.msra.mxu0 0.0
  %2528 = vmatprep.subr.mxu0 0.0
  %2529 = vmatpush1.msra.mxu0 0.0
  %2530 = vmatprep.subr.mxu0 0.0
  %2531 = vmatpush1.msra.mxu0 0.0
  %2532 = vmatprep.subr.mxu0 0.0
  %2533 = vmatpush1.msra.mxu0 0.0
  %2534 = vmatprep.subr.mxu0 0.0
  %2535 = vmatpush1.msra.mxu0 0.0
  %2536 = vmatprep.subr.mxu0 0.0
  %2537 = vmatpush1.msra.mxu0 0.0
  %2538 = vmatprep.subr.mxu0 0.0
  %2539 = vmatpush1.msra.mxu0 0.0
  %2540 = vmatprep.mubr.f32.mxu0 0.0
  %2541 = vmatmul.mubr.f32.gmra.mrb[0].mxu0 %v2474
  %v2542 = vpop.f32.mrb[0].mxu0
  %v2543 = vadd.f32 %v2435, %v2542
  %v2544 = vpop.f32.mrb[0].mxu0
  %2545 = vmatprep.mubr.f32.mxu0 0.0
  %2546 = vmatmul.mubr.f32.gmra.mrb[0].mxu0 %v2345
  %v2547 = vpop.f32.mrb[0].mxu0
  %v2548 = vadd.f32 %v2440, %v2547
  %v2549 = vpop.f32.mrb[0].mxu0
  %2550 = vmatprep.mubr.f32.mxu0 0.0
  %2551 = vmatmul.mubr.f32.gmra.mrb[0].mxu0 %v2348
  %v2552 = vpop.f32.mrb[0].mxu0
  %v2553 = vadd.f32 %v2445, %v2552
  %v2554 = vpop.f32.mrb[0].mxu0
  %2555 = vmatprep.mubr.f32.mxu0 0.0
  %2556 = vmatmul.mubr.f32.gmra.mrb[0].mxu0 %v2351
  %v2557 = vpop.f32.mrb[0].mxu0
  %v2558 = vadd.f32 %v2450, %v2557
  %v2559 = vpop.f32.mrb[0].mxu0
  %2560 = vmatprep.mubr.f32.mxu0 0.0
  %2561 = vmatmul.mubr.f32.gmra.mrb[0].mxu0 %v2354
  %v2562 = vpop.f32.mrb[0].mxu0
  %v2563 = vadd.f32 %v2455, %v2562
  %v2564 = vpop.f32.mrb[0].mxu0
  %2565 = vmatprep.mubr.f32.mxu0 0.0
  %2566 = vmatmul.mubr.f32.gmra.mrb[0].mxu0 %v2357
  %v2567 = vpop.f32.mrb[0].mxu0
  %v2568 = vadd.f32 %v2460, %v2567
  %v2569 = vpop.f32.mrb[0].mxu0
  %2570 = vmatprep.mubr.f32.mxu0 0.0
  %2571 = vmatmul.mubr.f32.gmra.mrb[0].mxu0 %v2360
  %v2572 = vpop.f32.mrb[0].mxu0
  %v2573 = vadd.f32 %v2465, %v2572
  %v2574 = vpop.f32.mrb[0].mxu0
  %2575 = vmatprep.mubr.f32.mxu0 0.0
  %2576 = vmatmul.mubr.f32.gmra.mrb[0].mxu0 %v2363
  %v2577 = vpop.f32.mrb[0].mxu0
  %v2578 = vadd.f32 %v2470, %v2577
  %v2579 = vpop.f32.mrb[0].mxu0
  %2580 = vdwg.mxu0
  %s2581 = scalar_lea.vmem %s5, 120
  %v2582 = vld [vmem:[%s2581] sm:$0xff]
  %v2583 = vld [vmem:[%s2581 + $0x8] sm:$0xff]
  %v2584 = vld [vmem:[%s2581 + $0x10] sm:$0xff]
  %v2585 = vld [vmem:[%s2581 + $0x18] sm:$0xff]
  %v2586 = vld [vmem:[%s2581 + $0x20] sm:$0xff]
  %v2587 = vld [vmem:[%s2581 + $0x28] sm:$0xff]
  %v2588 = vld [vmem:[%s2581 + $0x30] sm:$0xff]
  %v2589 = vld [vmem:[%s2581 + $0x38] sm:$0xff]
  %v2590 = vld [vmem:[%s2581 + $0x40] sm:$0xff]
  %v2591 = vld [vmem:[%s2581 + $0x48] sm:$0xff]
  %v2592 = vld [vmem:[%s2581 + $0x50] sm:$0xff]
  %v2593 = vld [vmem:[%s2581 + $0x58] sm:$0xff]
  %v2594 = vld [vmem:[%s2581 + $0x60] sm:$0xff]
  %v2595 = vld [vmem:[%s2581 + $0x68] sm:$0xff]
  %v2596 = vld [vmem:[%s2581 + $0x70] sm:$0xff]
  %2597 = vmatprep.subr.mxu0 0.0
  %2598 = vmatpush1.msra.mxu0 %v2582
  %2599 = vmatprep.subr.mxu0 0.0
  %2600 = vmatpush1.msra.mxu0 %v2583
  %2601 = vmatprep.subr.mxu0 0.0
  %2602 = vmatpush1.msra.mxu0 %v2584
  %2603 = vmatprep.subr.mxu0 0.0
  %2604 = vmatpush1.msra.mxu0 %v2585
  %2605 = vmatprep.subr.mxu0 0.0
  %2606 = vmatpush1.msra.mxu0 %v2586
  %2607 = vmatprep.subr.mxu0 0.0
  %2608 = vmatpush1.msra.mxu0 %v2587
  %2609 = vmatprep.subr.mxu0 0.0
  %2610 = vmatpush1.msra.mxu0 %v2588
  %2611 = vmatprep.subr.mxu0 0.0
  %2612 = vmatpush1.msra.mxu0 %v2589
  %2613 = vmatprep.subr.mxu0 0.0
  %2614 = vmatpush1.msra.mxu0 %v2590
  %2615 = vmatprep.subr.mxu0 0.0
  %2616 = vmatpush1.msra.mxu0 %v2591
  %2617 = vmatprep.subr.mxu0 0.0
  %2618 = vmatpush1.msra.mxu0 %v2592
  %2619 = vmatprep.subr.mxu0 0.0
  %2620 = vmatpush1.msra.mxu0 %v2593
  %2621 = vmatprep.subr.mxu0 0.0
  %2622 = vmatpush1.msra.mxu0 %v2594
  %2623 = vmatprep.subr.mxu0 0.0
  %2624 = vmatpush1.msra.mxu0 %v2595
  %2625 = vmatprep.subr.mxu0 0.0
  %2626 = vmatpush1.msra.mxu0 %v2596
  %2627 = vmatprep.subr.mxu0 0.0
  %2628 = vmatpush1.msra.mxu0 0.0
  %2629 = vmatprep.subr.mxu0 0.0
  %2630 = vmatpush1.msra.mxu0 0.0
  %2631 = vmatprep.subr.mxu0 0.0
  %2632 = vmatpush1.msra.mxu0 0.0
  %2633 = vmatprep.subr.mxu0 0.0
  %2634 = vmatpush1.msra.mxu0 0.0
  %2635 = vmatprep.subr.mxu0 0.0
  %2636 = vmatpush1.msra.mxu0 0.0
  %2637 = vmatprep.subr.mxu0 0.0
  %2638 = vmatpush1.msra.mxu0 0.0
  %2639 = vmatprep.subr.mxu0 0.0
  %2640 = vmatpush1.msra.mxu0 0.0
  %2641 = vmatprep.subr.mxu0 0.0
  %2642 = vmatpush1.msra.mxu0 0.0
  %2643 = vmatprep.subr.mxu0 0.0
  %2644 = vmatpush1.msra.mxu0 0.0
  %2645 = vmatprep.subr.mxu0 0.0
  %2646 = vmatpush1.msra.mxu0 0.0
  %2647 = vmatprep.subr.mxu0 0.0
  %2648 = vmatpush1.msra.mxu0 0.0
  %2649 = vmatprep.subr.mxu0 0.0
  %2650 = vmatpush1.msra.mxu0 0.0
  %2651 = vmatprep.subr.mxu0 0.0
  %2652 = vmatpush1.msra.mxu0 0.0
  %2653 = vmatprep.subr.mxu0 0.0
  %2654 = vmatpush1.msra.mxu0 0.0
  %2655 = vmatprep.subr.mxu0 0.0
  %2656 = vmatpush1.msra.mxu0 0.0
  %2657 = vmatprep.subr.mxu0 0.0
  %2658 = vmatpush1.msra.mxu0 0.0
  %2659 = vmatprep.subr.mxu0 0.0
  %2660 = vmatpush1.msra.mxu0 0.0
  %2661 = vmatprep.mubr.f32.mxu0 0.0
  %2662 = vmatmul.mubr.f32.gmra.mrb[0].mxu0 %v2345
  %v2663 = vpop.f32.mrb[0].mxu0
  %v2664 = vadd.f32 0.0, %v2663
  %v2665 = vpop.f32.mrb[0].mxu0
  %2666 = vmatprep.mubr.f32.mxu0 0.0
  %2667 = vmatmul.mubr.f32.gmra.mrb[0].mxu0 %v2348
  %v2668 = vpop.f32.mrb[0].mxu0
  %v2669 = vadd.f32 0.0, %v2668
  %v2670 = vpop.f32.mrb[0].mxu0
  %2671 = vmatprep.mubr.f32.mxu0 0.0
  %2672 = vmatmul.mubr.f32.gmra.mrb[0].mxu0 %v2351
  %v2673 = vpop.f32.mrb[0].mxu0
  %v2674 = vadd.f32 0.0, %v2673
  %v2675 = vpop.f32.mrb[0].mxu0
  %2676 = vmatprep.mubr.f32.mxu0 0.0
  %2677 = vmatmul.mubr.f32.gmra.mrb[0].mxu0 %v2354
  %v2678 = vpop.f32.mrb[0].mxu0
  %v2679 = vadd.f32 0.0, %v2678
  %v2680 = vpop.f32.mrb[0].mxu0
  %2681 = vmatprep.mubr.f32.mxu0 0.0
  %2682 = vmatmul.mubr.f32.gmra.mrb[0].mxu0 %v2357
  %v2683 = vpop.f32.mrb[0].mxu0
  %v2684 = vadd.f32 0.0, %v2683
  %v2685 = vpop.f32.mrb[0].mxu0
  %2686 = vmatprep.mubr.f32.mxu0 0.0
  %2687 = vmatmul.mubr.f32.gmra.mrb[0].mxu0 %v2360
  %v2688 = vpop.f32.mrb[0].mxu0
  %v2689 = vadd.f32 0.0, %v2688
  %v2690 = vpop.f32.mrb[0].mxu0
  %2691 = vmatprep.mubr.f32.mxu0 0.0
  %2692 = vmatmul.mubr.f32.gmra.mrb[0].mxu0 %v2363
  %v2693 = vpop.f32.mrb[0].mxu0
  %v2694 = vadd.f32 0.0, %v2693
  %v2695 = vpop.f32.mrb[0].mxu0
  %2696 = vmatprep.mubr.f32.mxu0 0.0
  %2697 = vmatmul.mubr.f32.gmra.mrb[0].mxu0 %v2366
  %v2698 = vpop.f32.mrb[0].mxu0
  %v2699 = vadd.f32 0.0, %v2698
  %v2700 = vpop.f32.mrb[0].mxu0
  %2701 = vdwg.mxu0
  %2702 = vmatprep.subr.mxu0 0.0
  %2703 = vmatpush1.msra.mxu0 %v2312
  %2704 = vmatprep.subr.mxu0 0.0
  %2705 = vmatpush1.msra.mxu0 %v2313
  %2706 = vmatprep.subr.mxu0 0.0
  %2707 = vmatpush1.msra.mxu0 %v2314
  %2708 = vmatprep.subr.mxu0 0.0
  %2709 = vmatpush1.msra.mxu0 %v2315
  %2710 = vmatprep.subr.mxu0 0.0
  %2711 = vmatpush1.msra.mxu0 %v2316
  %2712 = vmatprep.subr.mxu0 0.0
  %2713 = vmatpush1.msra.mxu0 %v2317
  %2714 = vmatprep.subr.mxu0 0.0
  %2715 = vmatpush1.msra.mxu0 %v2318
  %2716 = vmatprep.subr.mxu0 0.0
  %2717 = vmatpush1.msra.mxu0 %v2319
  %2718 = vmatprep.subr.mxu0 0.0
  %2719 = vmatpush1.msra.mxu0 %v2320
  %2720 = vmatprep.subr.mxu0 0.0
  %2721 = vmatpush1.msra.mxu0 %v2321
  %2722 = vmatprep.subr.mxu0 0.0
  %2723 = vmatpush1.msra.mxu0 %v2322
  %2724 = vmatprep.subr.mxu0 0.0
  %2725 = vmatpush1.msra.mxu0 %v2323
  %2726 = vmatprep.subr.mxu0 0.0
  %2727 = vmatpush1.msra.mxu0 %v2324
  %2728 = vmatprep.subr.mxu0 0.0
  %2729 = vmatpush1.msra.mxu0 %v2325
  %2730 = vmatprep.subr.mxu0 0.0
  %2731 = vmatpush1.msra.mxu0 %v2326
  %2732 = vmatprep.subr.mxu0 0.0
  %2733 = vmatpush1.msra.mxu0 0.0
  %2734 = vmatprep.subr.mxu0 0.0
  %2735 = vmatpush1.msra.mxu0 0.0
  %2736 = vmatprep.subr.mxu0 0.0
  %2737 = vmatpush1.msra.mxu0 0.0
  %2738 = vmatprep.subr.mxu0 0.0
  %2739 = vmatpush1.msra.mxu0 0.0
  %2740 = vmatprep.subr.mxu0 0.0
  %2741 = vmatpush1.msra.mxu0 0.0
  %2742 = vmatprep.subr.mxu0 0.0
  %2743 = vmatpush1.msra.mxu0 0.0
  %2744 = vmatprep.subr.mxu0 0.0
  %2745 = vmatpush1.msra.mxu0 0.0
  %2746 = vmatprep.subr.mxu0 0.0
  %2747 = vmatpush1.msra.mxu0 0.0
  %2748 = vmatprep.subr.mxu0 0.0
  %2749 = vmatpush1.msra.mxu0 0.0
  %2750 = vmatprep.subr.mxu0 0.0
  %2751 = vmatpush1.msra.mxu0 0.0
  %2752 = vmatprep.subr.mxu0 0.0
  %2753 = vmatpush1.msra.mxu0 0.0
  %2754 = vmatprep.subr.mxu0 0.0
  %2755 = vmatpush1.msra.mxu0 0.0
  %2756 = vmatprep.subr.mxu0 0.0
  %2757 = vmatpush1.msra.mxu0 0.0
  %2758 = vmatprep.subr.mxu0 0.0
  %2759 = vmatpush1.msra.mxu0 0.0
  %2760 = vmatprep.subr.mxu0 0.0
  %2761 = vmatpush1.msra.mxu0 0.0
  %2762 = vmatprep.subr.mxu0 0.0
  %2763 = vmatpush1.msra.mxu0 0.0
  %2764 = vmatprep.subr.mxu0 0.0
  %2765 = vmatpush1.msra.mxu0 0.0
  %2766 = vmatprep.mubr.f32.mxu0 0.0
  %2767 = vmatmul.mubr.f32.gmra.mrb[0].mxu0 %v2474
  %v2768 = vpop.f32.mrb[0].mxu0
  %v2769 = vadd.f32 %v2664, %v2768
  %v2770 = vpop.f32.mrb[0].mxu0
  %2771 = vmatprep.mubr.f32.mxu0 0.0
  %2772 = vmatmul.mubr.f32.gmra.mrb[0].mxu0 %v2345
  %v2773 = vpop.f32.mrb[0].mxu0
  %v2774 = vadd.f32 %v2669, %v2773
  %v2775 = vpop.f32.mrb[0].mxu0
  %2776 = vmatprep.mubr.f32.mxu0 0.0
  %2777 = vmatmul.mubr.f32.gmra.mrb[0].mxu0 %v2348
  %v2778 = vpop.f32.mrb[0].mxu0
  %v2779 = vadd.f32 %v2674, %v2778
  %v2780 = vpop.f32.mrb[0].mxu0
  %2781 = vmatprep.mubr.f32.mxu0 0.0
  %2782 = vmatmul.mubr.f32.gmra.mrb[0].mxu0 %v2351
  %v2783 = vpop.f32.mrb[0].mxu0
  %v2784 = vadd.f32 %v2679, %v2783
  %v2785 = vpop.f32.mrb[0].mxu0
  %2786 = vmatprep.mubr.f32.mxu0 0.0
  %2787 = vmatmul.mubr.f32.gmra.mrb[0].mxu0 %v2354
  %v2788 = vpop.f32.mrb[0].mxu0
  %v2789 = vadd.f32 %v2684, %v2788
  %v2790 = vpop.f32.mrb[0].mxu0
  %2791 = vmatprep.mubr.f32.mxu0 0.0
  %2792 = vmatmul.mubr.f32.gmra.mrb[0].mxu0 %v2357
  %v2793 = vpop.f32.mrb[0].mxu0
  %v2794 = vadd.f32 %v2689, %v2793
  %v2795 = vpop.f32.mrb[0].mxu0
  %2796 = vmatprep.mubr.f32.mxu0 0.0
  %2797 = vmatmul.mubr.f32.gmra.mrb[0].mxu0 %v2360
  %v2798 = vpop.f32.mrb[0].mxu0
  %v2799 = vadd.f32 %v2694, %v2798
  %v2800 = vpop.f32.mrb[0].mxu0
  %2801 = vmatprep.mubr.f32.mxu0 0.0
  %2802 = vmatmul.mubr.f32.gmra.mrb[0].mxu0 %v2363
  %v2803 = vpop.f32.mrb[0].mxu0
  %v2804 = vadd.f32 %v2699, %v2803
  %v2805 = vpop.f32.mrb[0].mxu0
  %2806 = vdwg.mxu0
  %s2807 = scalar_lea.vmem %s4, 240
  %v2808 = vld [vmem:[%s2807] sm:$0xff]
  %v2809 = vld [vmem:[%s2807 + $0x8] sm:$0xff]
  %v2810 = vld [vmem:[%s2807 + $0x10] sm:$0xff]
  %v2811 = vld [vmem:[%s2807 + $0x18] sm:$0xff]
  %v2812 = vld [vmem:[%s2807 + $0x20] sm:$0xff]
  %v2813 = vld [vmem:[%s2807 + $0x28] sm:$0xff]
  %v2814 = vld [vmem:[%s2807 + $0x30] sm:$0xff]
  %v2815 = vld [vmem:[%s2807 + $0x38] sm:$0xff]
  %v2816 = vld [vmem:[%s2807 + $0x40] sm:$0xff]
  %v2817 = vld [vmem:[%s2807 + $0x48] sm:$0xff]
  %v2818 = vld [vmem:[%s2807 + $0x50] sm:$0xff]
  %v2819 = vld [vmem:[%s2807 + $0x58] sm:$0xff]
  %v2820 = vld [vmem:[%s2807 + $0x60] sm:$0xff]
  %v2821 = vld [vmem:[%s2807 + $0x68] sm:$0xff]
  %v2822 = vld [vmem:[%s2807 + $0x70] sm:$0xff]
  %v2824 = vsel %vm2343, %v2294, 0
  %2826 = vmatprep.subr.mxu0 0.0
  %2827 = vmatpush1.msra.mxu0 %v2808
  %2828 = vmatprep.subr.mxu0 0.0
  %2829 = vmatpush1.msra.mxu0 %v2809
  %2830 = vmatprep.subr.mxu0 0.0
  %2831 = vmatpush1.msra.mxu0 %v2810
  %2832 = vmatprep.subr.mxu0 0.0
  %2833 = vmatpush1.msra.mxu0 %v2811
  %2834 = vmatprep.subr.mxu0 0.0
  %2835 = vmatpush1.msra.mxu0 %v2812
  %2836 = vmatprep.subr.mxu0 0.0
  %2837 = vmatpush1.msra.mxu0 %v2813
  %2838 = vmatprep.subr.mxu0 0.0
  %2839 = vmatpush1.msra.mxu0 %v2814
  %2840 = vmatprep.subr.mxu0 0.0
  %2841 = vmatpush1.msra.mxu0 %v2815
  %2842 = vmatprep.subr.mxu0 0.0
  %2843 = vmatpush1.msra.mxu0 %v2816
  %2844 = vmatprep.subr.mxu0 0.0
  %2845 = vmatpush1.msra.mxu0 %v2817
  %2846 = vmatprep.subr.mxu0 0.0
  %2847 = vmatpush1.msra.mxu0 %v2818
  %2848 = vmatprep.subr.mxu0 0.0
  %2849 = vmatpush1.msra.mxu0 %v2819
  %2850 = vmatprep.subr.mxu0 0.0
  %2851 = vmatpush1.msra.mxu0 %v2820
  %2852 = vmatprep.subr.mxu0 0.0
  %2853 = vmatpush1.msra.mxu0 %v2821
  %2854 = vmatprep.subr.mxu0 0.0
  %2855 = vmatpush1.msra.mxu0 %v2822
  %2856 = vmatprep.subr.mxu0 0.0
  %2857 = vmatpush1.msra.mxu0 0.0
  %2858 = vmatprep.subr.mxu0 0.0
  %2859 = vmatpush1.msra.mxu0 0.0
  %2860 = vmatprep.subr.mxu0 0.0
  %2861 = vmatpush1.msra.mxu0 0.0
  %2862 = vmatprep.subr.mxu0 0.0
  %2863 = vmatpush1.msra.mxu0 0.0
  %2864 = vmatprep.subr.mxu0 0.0
  %2865 = vmatpush1.msra.mxu0 0.0
  %2866 = vmatprep.subr.mxu0 0.0
  %2867 = vmatpush1.msra.mxu0 0.0
  %2868 = vmatprep.subr.mxu0 0.0
  %2869 = vmatpush1.msra.mxu0 0.0
  %2870 = vmatprep.subr.mxu0 0.0
  %2871 = vmatpush1.msra.mxu0 0.0
  %2872 = vmatprep.subr.mxu0 0.0
  %2873 = vmatpush1.msra.mxu0 0.0
  %2874 = vmatprep.subr.mxu0 0.0
  %2875 = vmatpush1.msra.mxu0 0.0
  %2876 = vmatprep.subr.mxu0 0.0
  %2877 = vmatpush1.msra.mxu0 0.0
  %2878 = vmatprep.subr.mxu0 0.0
  %2879 = vmatpush1.msra.mxu0 0.0
  %2880 = vmatprep.subr.mxu0 0.0
  %2881 = vmatpush1.msra.mxu0 0.0
  %2882 = vmatprep.subr.mxu0 0.0
  %2883 = vmatpush1.msra.mxu0 0.0
  %2884 = vmatprep.subr.mxu0 0.0
  %2885 = vmatpush1.msra.mxu0 0.0
  %2886 = vmatprep.subr.mxu0 0.0
  %2887 = vmatpush1.msra.mxu0 0.0
  %2888 = vmatprep.subr.mxu0 0.0
  %2889 = vmatpush1.msra.mxu0 0.0
  %2890 = vmatprep.mubr.f32.mxu0 0.0
  %2891 = vmatmul.mubr.f32.gmra.mrb[0].mxu0 %v2348
  %v2892 = vpop.f32.mrb[0].mxu0
  %v2893 = vadd.f32 0.0, %v2892
  %v2894 = vpop.f32.mrb[0].mxu0
  %2895 = vmatprep.mubr.f32.mxu0 0.0
  %2896 = vmatmul.mubr.f32.gmra.mrb[0].mxu0 %v2351
  %v2897 = vpop.f32.mrb[0].mxu0
  %v2898 = vadd.f32 0.0, %v2897
  %v2899 = vpop.f32.mrb[0].mxu0
  %2900 = vmatprep.mubr.f32.mxu0 0.0
  %2901 = vmatmul.mubr.f32.gmra.mrb[0].mxu0 %v2354
  %v2902 = vpop.f32.mrb[0].mxu0
  %v2903 = vadd.f32 0.0, %v2902
  %v2904 = vpop.f32.mrb[0].mxu0
  %2905 = vmatprep.mubr.f32.mxu0 0.0
  %2906 = vmatmul.mubr.f32.gmra.mrb[0].mxu0 %v2357
  %v2907 = vpop.f32.mrb[0].mxu0
  %v2908 = vadd.f32 0.0, %v2907
  %v2909 = vpop.f32.mrb[0].mxu0
  %2910 = vmatprep.mubr.f32.mxu0 0.0
  %2911 = vmatmul.mubr.f32.gmra.mrb[0].mxu0 %v2360
  %v2912 = vpop.f32.mrb[0].mxu0
  %v2913 = vadd.f32 0.0, %v2912
  %v2914 = vpop.f32.mrb[0].mxu0
  %2915 = vmatprep.mubr.f32.mxu0 0.0
  %2916 = vmatmul.mubr.f32.gmra.mrb[0].mxu0 %v2363
  %v2917 = vpop.f32.mrb[0].mxu0
  %v2918 = vadd.f32 0.0, %v2917
  %v2919 = vpop.f32.mrb[0].mxu0
  %2920 = vmatprep.mubr.f32.mxu0 0.0
  %2921 = vmatmul.mubr.f32.gmra.mrb[0].mxu0 %v2366
  %v2922 = vpop.f32.mrb[0].mxu0
  %v2923 = vadd.f32 0.0, %v2922
  %v2924 = vpop.f32.mrb[0].mxu0
  %2925 = vmatprep.mubr.f32.mxu0 0.0
  %2926 = vmatmul.mubr.f32.gmra.mrb[0].mxu0 %v2824
  %v2927 = vpop.f32.mrb[0].mxu0
  %v2928 = vadd.f32 0.0, %v2927
  %v2929 = vpop.f32.mrb[0].mxu0
  %2930 = vdwg.mxu0
  %v2931 = vadd.f32 %v2543, %v2893
  %v2932 = vadd.f32 %v2548, %v2898
  %v2933 = vadd.f32 %v2553, %v2903
  %v2934 = vadd.f32 %v2558, %v2908
  %v2935 = vadd.f32 %v2563, %v2913
  %v2936 = vadd.f32 %v2568, %v2918
  %v2937 = vadd.f32 %v2573, %v2923
  %v2938 = vadd.f32 %v2578, %v2928
  %s2939 = scalar_lea.vmem %s5, 240
  %v2940 = vld [vmem:[%s2939] sm:$0xff]
  %v2941 = vld [vmem:[%s2939 + $0x8] sm:$0xff]
  %v2942 = vld [vmem:[%s2939 + $0x10] sm:$0xff]
  %v2943 = vld [vmem:[%s2939 + $0x18] sm:$0xff]
  %v2944 = vld [vmem:[%s2939 + $0x20] sm:$0xff]
  %v2945 = vld [vmem:[%s2939 + $0x28] sm:$0xff]
  %v2946 = vld [vmem:[%s2939 + $0x30] sm:$0xff]
  %v2947 = vld [vmem:[%s2939 + $0x38] sm:$0xff]
  %v2948 = vld [vmem:[%s2939 + $0x40] sm:$0xff]
  %v2949 = vld [vmem:[%s2939 + $0x48] sm:$0xff]
  %v2950 = vld [vmem:[%s2939 + $0x50] sm:$0xff]
  %v2951 = vld [vmem:[%s2939 + $0x58] sm:$0xff]
  %v2952 = vld [vmem:[%s2939 + $0x60] sm:$0xff]
  %v2953 = vld [vmem:[%s2939 + $0x68] sm:$0xff]
  %v2954 = vld [vmem:[%s2939 + $0x70] sm:$0xff]
  %2955 = vmatprep.subr.mxu0 0.0
  %2956 = vmatpush1.msra.mxu0 %v2940
  %2957 = vmatprep.subr.mxu0 0.0
  %2958 = vmatpush1.msra.mxu0 %v2941
  %2959 = vmatprep.subr.mxu0 0.0
  %2960 = vmatpush1.msra.mxu0 %v2942
  %2961 = vmatprep.subr.mxu0 0.0
  %2962 = vmatpush1.msra.mxu0 %v2943
  %2963 = vmatprep.subr.mxu0 0.0
  %2964 = vmatpush1.msra.mxu0 %v2944
  %2965 = vmatprep.subr.mxu0 0.0
  %2966 = vmatpush1.msra.mxu0 %v2945
  %2967 = vmatprep.subr.mxu0 0.0
  %2968 = vmatpush1.msra.mxu0 %v2946
  %2969 = vmatprep.subr.mxu0 0.0
  %2970 = vmatpush1.msra.mxu0 %v2947
  %2971 = vmatprep.subr.mxu0 0.0
  %2972 = vmatpush1.msra.mxu0 %v2948
  %2973 = vmatprep.subr.mxu0 0.0
  %2974 = vmatpush1.msra.mxu0 %v2949
  %2975 = vmatprep.subr.mxu0 0.0
  %2976 = vmatpush1.msra.mxu0 %v2950
  %2977 = vmatprep.subr.mxu0 0.0
  %2978 = vmatpush1.msra.mxu0 %v2951
  %2979 = vmatprep.subr.mxu0 0.0
  %2980 = vmatpush1.msra.mxu0 %v2952
  %2981 = vmatprep.subr.mxu0 0.0
  %2982 = vmatpush1.msra.mxu0 %v2953
  %2983 = vmatprep.subr.mxu0 0.0
  %2984 = vmatpush1.msra.mxu0 %v2954
  %2985 = vmatprep.subr.mxu0 0.0
  %2986 = vmatpush1.msra.mxu0 0.0
  %2987 = vmatprep.subr.mxu0 0.0
  %2988 = vmatpush1.msra.mxu0 0.0
  %2989 = vmatprep.subr.mxu0 0.0
  %2990 = vmatpush1.msra.mxu0 0.0
  %2991 = vmatprep.subr.mxu0 0.0
  %2992 = vmatpush1.msra.mxu0 0.0
  %2993 = vmatprep.subr.mxu0 0.0
  %2994 = vmatpush1.msra.mxu0 0.0
  %2995 = vmatprep.subr.mxu0 0.0
  %2996 = vmatpush1.msra.mxu0 0.0
  %2997 = vmatprep.subr.mxu0 0.0
  %2998 = vmatpush1.msra.mxu0 0.0
  %2999 = vmatprep.subr.mxu0 0.0
  %3000 = vmatpush1.msra.mxu0 0.0
  %3001 = vmatprep.subr.mxu0 0.0
  %3002 = vmatpush1.msra.mxu0 0.0
  %3003 = vmatprep.subr.mxu0 0.0
  %3004 = vmatpush1.msra.mxu0 0.0
  %3005 = vmatprep.subr.mxu0 0.0
  %3006 = vmatpush1.msra.mxu0 0.0
  %3007 = vmatprep.subr.mxu0 0.0
  %3008 = vmatpush1.msra.mxu0 0.0
  %3009 = vmatprep.subr.mxu0 0.0
  %3010 = vmatpush1.msra.mxu0 0.0
  %3011 = vmatprep.subr.mxu0 0.0
  %3012 = vmatpush1.msra.mxu0 0.0
  %3013 = vmatprep.subr.mxu0 0.0
  %3014 = vmatpush1.msra.mxu0 0.0
  %3015 = vmatprep.subr.mxu0 0.0
  %3016 = vmatpush1.msra.mxu0 0.0
  %3017 = vmatprep.subr.mxu0 0.0
  %3018 = vmatpush1.msra.mxu0 0.0
  %3019 = vmatprep.mubr.f32.mxu0 0.0
  %3020 = vmatmul.mubr.f32.gmra.mrb[0].mxu0 %v2348
  %v3021 = vpop.f32.mrb[0].mxu0
  %v3022 = vadd.f32 0.0, %v3021
  %v3023 = vpop.f32.mrb[0].mxu0
  %3024 = vmatprep.mubr.f32.mxu0 0.0
  %3025 = vmatmul.mubr.f32.gmra.mrb[0].mxu0 %v2351
  %v3026 = vpop.f32.mrb[0].mxu0
  %v3027 = vadd.f32 0.0, %v3026
  %v3028 = vpop.f32.mrb[0].mxu0
  %3029 = vmatprep.mubr.f32.mxu0 0.0
  %3030 = vmatmul.mubr.f32.gmra.mrb[0].mxu0 %v2354
  %v3031 = vpop.f32.mrb[0].mxu0
  %v3032 = vadd.f32 0.0, %v3031
  %v3033 = vpop.f32.mrb[0].mxu0
  %3034 = vmatprep.mubr.f32.mxu0 0.0
  %3035 = vmatmul.mubr.f32.gmra.mrb[0].mxu0 %v2357
  %v3036 = vpop.f32.mrb[0].mxu0
  %v3037 = vadd.f32 0.0, %v3036
  %v3038 = vpop.f32.mrb[0].mxu0
  %3039 = vmatprep.mubr.f32.mxu0 0.0
  %3040 = vmatmul.mubr.f32.gmra.mrb[0].mxu0 %v2360
  %v3041 = vpop.f32.mrb[0].mxu0
  %v3042 = vadd.f32 0.0, %v3041
  %v3043 = vpop.f32.mrb[0].mxu0
  %3044 = vmatprep.mubr.f32.mxu0 0.0
  %3045 = vmatmul.mubr.f32.gmra.mrb[0].mxu0 %v2363
  %v3046 = vpop.f32.mrb[0].mxu0
  %v3047 = vadd.f32 0.0, %v3046
  %v3048 = vpop.f32.mrb[0].mxu0
  %3049 = vmatprep.mubr.f32.mxu0 0.0
  %3050 = vmatmul.mubr.f32.gmra.mrb[0].mxu0 %v2366
  %v3051 = vpop.f32.mrb[0].mxu0
  %v3052 = vadd.f32 0.0, %v3051
  %v3053 = vpop.f32.mrb[0].mxu0
  %3054 = vmatprep.mubr.f32.mxu0 0.0
  %3055 = vmatmul.mubr.f32.gmra.mrb[0].mxu0 %v2824
  %v3056 = vpop.f32.mrb[0].mxu0
  %v3057 = vadd.f32 0.0, %v3056
  %v3058 = vpop.f32.mrb[0].mxu0
  %3059 = vdwg.mxu0
  %v3060 = vadd.f32 %v2769, %v3022
  %v3061 = vadd.f32 %v2774, %v3027
  %v3062 = vadd.f32 %v2779, %v3032
  %v3063 = vadd.f32 %v2784, %v3037
  %v3064 = vadd.f32 %v2789, %v3042
  %v3065 = vadd.f32 %v2794, %v3047
  %v3066 = vadd.f32 %v2799, %v3052
  %v3067 = vadd.f32 %v2804, %v3057
  %s3068 = scalar_lea.vmem %s4, 360
  %v3069 = vld [vmem:[%s3068] sm:$0xff]
  %v3070 = vld [vmem:[%s3068 + $0x8] sm:$0xff]
  %v3071 = vld [vmem:[%s3068 + $0x10] sm:$0xff]
  %v3072 = vld [vmem:[%s3068 + $0x18] sm:$0xff]
  %v3073 = vld [vmem:[%s3068 + $0x20] sm:$0xff]
  %v3074 = vld [vmem:[%s3068 + $0x28] sm:$0xff]
  %v3075 = vld [vmem:[%s3068 + $0x30] sm:$0xff]
  %v3076 = vld [vmem:[%s3068 + $0x38] sm:$0xff]
  %v3077 = vld [vmem:[%s3068 + $0x40] sm:$0xff]
  %v3078 = vld [vmem:[%s3068 + $0x48] sm:$0xff]
  %v3079 = vld [vmem:[%s3068 + $0x50] sm:$0xff]
  %v3080 = vld [vmem:[%s3068 + $0x58] sm:$0xff]
  %v3081 = vld [vmem:[%s3068 + $0x60] sm:$0xff]
  %v3082 = vld [vmem:[%s3068 + $0x68] sm:$0xff]
  %v3083 = vld [vmem:[%s3068 + $0x70] sm:$0xff]
  %v3085 = vsel %vm2343, %v2295, 0
  %3087 = vmatprep.subr.mxu0 0.0
  %3088 = vmatpush1.msra.mxu0 %v3069
  %3089 = vmatprep.subr.mxu0 0.0
  %3090 = vmatpush1.msra.mxu0 %v3070
  %3091 = vmatprep.subr.mxu0 0.0
  %3092 = vmatpush1.msra.mxu0 %v3071
  %3093 = vmatprep.subr.mxu0 0.0
  %3094 = vmatpush1.msra.mxu0 %v3072
  %3095 = vmatprep.subr.mxu0 0.0
  %3096 = vmatpush1.msra.mxu0 %v3073
  %3097 = vmatprep.subr.mxu0 0.0
  %3098 = vmatpush1.msra.mxu0 %v3074
  %3099 = vmatprep.subr.mxu0 0.0
  %3100 = vmatpush1.msra.mxu0 %v3075
  %3101 = vmatprep.subr.mxu0 0.0
  %3102 = vmatpush1.msra.mxu0 %v3076
  %3103 = vmatprep.subr.mxu0 0.0
  %3104 = vmatpush1.msra.mxu0 %v3077
  %3105 = vmatprep.subr.mxu0 0.0
  %3106 = vmatpush1.msra.mxu0 %v3078
  %3107 = vmatprep.subr.mxu0 0.0
  %3108 = vmatpush1.msra.mxu0 %v3079
  %3109 = vmatprep.subr.mxu0 0.0
  %3110 = vmatpush1.msra.mxu0 %v3080
  %3111 = vmatprep.subr.mxu0 0.0
  %3112 = vmatpush1.msra.mxu0 %v3081
  %3113 = vmatprep.subr.mxu0 0.0
  %3114 = vmatpush1.msra.mxu0 %v3082
  %3115 = vmatprep.subr.mxu0 0.0
  %3116 = vmatpush1.msra.mxu0 %v3083
  %3117 = vmatprep.subr.mxu0 0.0
  %3118 = vmatpush1.msra.mxu0 0.0
  %3119 = vmatprep.subr.mxu0 0.0
  %3120 = vmatpush1.msra.mxu0 0.0
  %3121 = vmatprep.subr.mxu0 0.0
  %3122 = vmatpush1.msra.mxu0 0.0
  %3123 = vmatprep.subr.mxu0 0.0
  %3124 = vmatpush1.msra.mxu0 0.0
  %3125 = vmatprep.subr.mxu0 0.0
  %3126 = vmatpush1.msra.mxu0 0.0
  %3127 = vmatprep.subr.mxu0 0.0
  %3128 = vmatpush1.msra.mxu0 0.0
  %3129 = vmatprep.subr.mxu0 0.0
  %3130 = vmatpush1.msra.mxu0 0.0
  %3131 = vmatprep.subr.mxu0 0.0
  %3132 = vmatpush1.msra.mxu0 0.0
  %3133 = vmatprep.subr.mxu0 0.0
  %3134 = vmatpush1.msra.mxu0 0.0
  %3135 = vmatprep.subr.mxu0 0.0
  %3136 = vmatpush1.msra.mxu0 0.0
  %3137 = vmatprep.subr.mxu0 0.0
  %3138 = vmatpush1.msra.mxu0 0.0
  %3139 = vmatprep.subr.mxu0 0.0
  %3140 = vmatpush1.msra.mxu0 0.0
  %3141 = vmatprep.subr.mxu0 0.0
  %3142 = vmatpush1.msra.mxu0 0.0
  %3143 = vmatprep.subr.mxu0 0.0
  %3144 = vmatpush1.msra.mxu0 0.0
  %3145 = vmatprep.subr.mxu0 0.0
  %3146 = vmatpush1.msra.mxu0 0.0
  %3147 = vmatprep.subr.mxu0 0.0
  %3148 = vmatpush1.msra.mxu0 0.0
  %3149 = vmatprep.subr.mxu0 0.0
  %3150 = vmatpush1.msra.mxu0 0.0
  %3151 = vmatprep.mubr.f32.mxu0 0.0
  %3152 = vmatmul.mubr.f32.gmra.mrb[0].mxu0 %v2351
  %v3153 = vpop.f32.mrb[0].mxu0
  %v3154 = vadd.f32 0.0, %v3153
  %v3155 = vpop.f32.mrb[0].mxu0
  %3156 = vmatprep.mubr.f32.mxu0 0.0
  %3157 = vmatmul.mubr.f32.gmra.mrb[0].mxu0 %v2354
  %v3158 = vpop.f32.mrb[0].mxu0
  %v3159 = vadd.f32 0.0, %v3158
  %v3160 = vpop.f32.mrb[0].mxu0
  %3161 = vmatprep.mubr.f32.mxu0 0.0
  %3162 = vmatmul.mubr.f32.gmra.mrb[0].mxu0 %v2357
  %v3163 = vpop.f32.mrb[0].mxu0
  %v3164 = vadd.f32 0.0, %v3163
  %v3165 = vpop.f32.mrb[0].mxu0
  %3166 = vmatprep.mubr.f32.mxu0 0.0
  %3167 = vmatmul.mubr.f32.gmra.mrb[0].mxu0 %v2360
  %v3168 = vpop.f32.mrb[0].mxu0
  %v3169 = vadd.f32 0.0, %v3168
  %v3170 = vpop.f32.mrb[0].mxu0
  %3171 = vmatprep.mubr.f32.mxu0 0.0
  %3172 = vmatmul.mubr.f32.gmra.mrb[0].mxu0 %v2363
  %v3173 = vpop.f32.mrb[0].mxu0
  %v3174 = vadd.f32 0.0, %v3173
  %v3175 = vpop.f32.mrb[0].mxu0
  %3176 = vmatprep.mubr.f32.mxu0 0.0
  %3177 = vmatmul.mubr.f32.gmra.mrb[0].mxu0 %v2366
  %v3178 = vpop.f32.mrb[0].mxu0
  %v3179 = vadd.f32 0.0, %v3178
  %v3180 = vpop.f32.mrb[0].mxu0
  %3181 = vmatprep.mubr.f32.mxu0 0.0
  %3182 = vmatmul.mubr.f32.gmra.mrb[0].mxu0 %v2824
  %v3183 = vpop.f32.mrb[0].mxu0
  %v3184 = vadd.f32 0.0, %v3183
  %v3185 = vpop.f32.mrb[0].mxu0
  %3186 = vmatprep.mubr.f32.mxu0 0.0
  %3187 = vmatmul.mubr.f32.gmra.mrb[0].mxu0 %v3085
  %v3188 = vpop.f32.mrb[0].mxu0
  %v3189 = vadd.f32 0.0, %v3188
  %v3190 = vpop.f32.mrb[0].mxu0
  %3191 = vdwg.mxu0
  %v3192 = vadd.f32 %v2931, %v3154
  %v3193 = vadd.f32 %v2932, %v3159
  %v3194 = vadd.f32 %v2933, %v3164
  %v3195 = vadd.f32 %v2934, %v3169
  %v3196 = vadd.f32 %v2935, %v3174
  %v3197 = vadd.f32 %v2936, %v3179
  %v3198 = vadd.f32 %v2937, %v3184
  %v3199 = vadd.f32 %v2938, %v3189
  %s3200 = scalar_lea.vmem %s5, 360
  %v3201 = vld [vmem:[%s3200] sm:$0xff]
  %v3202 = vld [vmem:[%s3200 + $0x8] sm:$0xff]
  %v3203 = vld [vmem:[%s3200 + $0x10] sm:$0xff]
  %v3204 = vld [vmem:[%s3200 + $0x18] sm:$0xff]
  %v3205 = vld [vmem:[%s3200 + $0x20] sm:$0xff]
  %v3206 = vld [vmem:[%s3200 + $0x28] sm:$0xff]
  %v3207 = vld [vmem:[%s3200 + $0x30] sm:$0xff]
  %v3208 = vld [vmem:[%s3200 + $0x38] sm:$0xff]
  %v3209 = vld [vmem:[%s3200 + $0x40] sm:$0xff]
  %v3210 = vld [vmem:[%s3200 + $0x48] sm:$0xff]
  %v3211 = vld [vmem:[%s3200 + $0x50] sm:$0xff]
  %v3212 = vld [vmem:[%s3200 + $0x58] sm:$0xff]
  %v3213 = vld [vmem:[%s3200 + $0x60] sm:$0xff]
  %v3214 = vld [vmem:[%s3200 + $0x68] sm:$0xff]
  %v3215 = vld [vmem:[%s3200 + $0x70] sm:$0xff]
  %3216 = vmatprep.subr.mxu0 0.0
  %3217 = vmatpush1.msra.mxu0 %v3201
  %3218 = vmatprep.subr.mxu0 0.0
  %3219 = vmatpush1.msra.mxu0 %v3202
  %3220 = vmatprep.subr.mxu0 0.0
  %3221 = vmatpush1.msra.mxu0 %v3203
  %3222 = vmatprep.subr.mxu0 0.0
  %3223 = vmatpush1.msra.mxu0 %v3204
  %3224 = vmatprep.subr.mxu0 0.0
  %3225 = vmatpush1.msra.mxu0 %v3205
  %3226 = vmatprep.subr.mxu0 0.0
  %3227 = vmatpush1.msra.mxu0 %v3206
  %3228 = vmatprep.subr.mxu0 0.0
  %3229 = vmatpush1.msra.mxu0 %v3207
  %3230 = vmatprep.subr.mxu0 0.0
  %3231 = vmatpush1.msra.mxu0 %v3208
  %3232 = vmatprep.subr.mxu0 0.0
  %3233 = vmatpush1.msra.mxu0 %v3209
  %3234 = vmatprep.subr.mxu0 0.0
  %3235 = vmatpush1.msra.mxu0 %v3210
  %3236 = vmatprep.subr.mxu0 0.0
  %3237 = vmatpush1.msra.mxu0 %v3211
  %3238 = vmatprep.subr.mxu0 0.0
  %3239 = vmatpush1.msra.mxu0 %v3212
  %3240 = vmatprep.subr.mxu0 0.0
  %3241 = vmatpush1.msra.mxu0 %v3213
  %3242 = vmatprep.subr.mxu0 0.0
  %3243 = vmatpush1.msra.mxu0 %v3214
  %3244 = vmatprep.subr.mxu0 0.0
  %3245 = vmatpush1.msra.mxu0 %v3215
  %3246 = vmatprep.subr.mxu0 0.0
  %3247 = vmatpush1.msra.mxu0 0.0
  %3248 = vmatprep.subr.mxu0 0.0
  %3249 = vmatpush1.msra.mxu0 0.0
  %3250 = vmatprep.subr.mxu0 0.0
  %3251 = vmatpush1.msra.mxu0 0.0
  %3252 = vmatprep.subr.mxu0 0.0
  %3253 = vmatpush1.msra.mxu0 0.0
  %3254 = vmatprep.subr.mxu0 0.0
  %3255 = vmatpush1.msra.mxu0 0.0
  %3256 = vmatprep.subr.mxu0 0.0
  %3257 = vmatpush1.msra.mxu0 0.0
  %3258 = vmatprep.subr.mxu0 0.0
  %3259 = vmatpush1.msra.mxu0 0.0
  %3260 = vmatprep.subr.mxu0 0.0
  %3261 = vmatpush1.msra.mxu0 0.0
  %3262 = vmatprep.subr.mxu0 0.0
  %3263 = vmatpush1.msra.mxu0 0.0
  %3264 = vmatprep.subr.mxu0 0.0
  %3265 = vmatpush1.msra.mxu0 0.0
  %3266 = vmatprep.subr.mxu0 0.0
  %3267 = vmatpush1.msra.mxu0 0.0
  %3268 = vmatprep.subr.mxu0 0.0
  %3269 = vmatpush1.msra.mxu0 0.0
  %3270 = vmatprep.subr.mxu0 0.0
  %3271 = vmatpush1.msra.mxu0 0.0
  %3272 = vmatprep.subr.mxu0 0.0
  %3273 = vmatpush1.msra.mxu0 0.0
  %3274 = vmatprep.subr.mxu0 0.0
  %3275 = vmatpush1.msra.mxu0 0.0
  %3276 = vmatprep.subr.mxu0 0.0
  %3277 = vmatpush1.msra.mxu0 0.0
  %3278 = vmatprep.subr.mxu0 0.0
  %3279 = vmatpush1.msra.mxu0 0.0
  %3280 = vmatprep.mubr.f32.mxu0 0.0
  %3281 = vmatmul.mubr.f32.gmra.mrb[0].mxu0 %v2351
  %v3282 = vpop.f32.mrb[0].mxu0
  %v3283 = vadd.f32 0.0, %v3282
  %v3284 = vpop.f32.mrb[0].mxu0
  %3285 = vmatprep.mubr.f32.mxu0 0.0
  %3286 = vmatmul.mubr.f32.gmra.mrb[0].mxu0 %v2354
  %v3287 = vpop.f32.mrb[0].mxu0
  %v3288 = vadd.f32 0.0, %v3287
  %v3289 = vpop.f32.mrb[0].mxu0
  %3290 = vmatprep.mubr.f32.mxu0 0.0
  %3291 = vmatmul.mubr.f32.gmra.mrb[0].mxu0 %v2357
  %v3292 = vpop.f32.mrb[0].mxu0
  %v3293 = vadd.f32 0.0, %v3292
  %v3294 = vpop.f32.mrb[0].mxu0
  %3295 = vmatprep.mubr.f32.mxu0 0.0
  %3296 = vmatmul.mubr.f32.gmra.mrb[0].mxu0 %v2360
  %v3297 = vpop.f32.mrb[0].mxu0
  %v3298 = vadd.f32 0.0, %v3297
  %v3299 = vpop.f32.mrb[0].mxu0
  %3300 = vmatprep.mubr.f32.mxu0 0.0
  %3301 = vmatmul.mubr.f32.gmra.mrb[0].mxu0 %v2363
  %v3302 = vpop.f32.mrb[0].mxu0
  %v3303 = vadd.f32 0.0, %v3302
  %v3304 = vpop.f32.mrb[0].mxu0
  %3305 = vmatprep.mubr.f32.mxu0 0.0
  %3306 = vmatmul.mubr.f32.gmra.mrb[0].mxu0 %v2366
  %v3307 = vpop.f32.mrb[0].mxu0
  %v3308 = vadd.f32 0.0, %v3307
  %v3309 = vpop.f32.mrb[0].mxu0
  %3310 = vmatprep.mubr.f32.mxu0 0.0
  %3311 = vmatmul.mubr.f32.gmra.mrb[0].mxu0 %v2824
  %v3312 = vpop.f32.mrb[0].mxu0
  %v3313 = vadd.f32 0.0, %v3312
  %v3314 = vpop.f32.mrb[0].mxu0
  %3315 = vmatprep.mubr.f32.mxu0 0.0
  %3316 = vmatmul.mubr.f32.gmra.mrb[0].mxu0 %v3085
  %v3317 = vpop.f32.mrb[0].mxu0
  %v3318 = vadd.f32 0.0, %v3317
  %v3319 = vpop.f32.mrb[0].mxu0
  %3320 = vdwg.mxu0
  %v3321 = vadd.f32 %v3060, %v3283
  %v3322 = vadd.f32 %v3061, %v3288
  %v3323 = vadd.f32 %v3062, %v3293
  %v3324 = vadd.f32 %v3063, %v3298
  %v3325 = vadd.f32 %v3064, %v3303
  %v3326 = vadd.f32 %v3065, %v3308
  %v3327 = vadd.f32 %v3066, %v3313
  %v3328 = vadd.f32 %v3067, %v3318
  %s3329 = scalar_lea.vmem %s4, 480
  %v3330 = vld [vmem:[%s3329] sm:$0xff]
  %v3331 = vld [vmem:[%s3329 + $0x8] sm:$0xff]
  %v3332 = vld [vmem:[%s3329 + $0x10] sm:$0xff]
  %v3333 = vld [vmem:[%s3329 + $0x18] sm:$0xff]
  %v3334 = vld [vmem:[%s3329 + $0x20] sm:$0xff]
  %v3335 = vld [vmem:[%s3329 + $0x28] sm:$0xff]
  %v3336 = vld [vmem:[%s3329 + $0x30] sm:$0xff]
  %v3337 = vld [vmem:[%s3329 + $0x38] sm:$0xff]
  %v3338 = vld [vmem:[%s3329 + $0x40] sm:$0xff]
  %v3339 = vld [vmem:[%s3329 + $0x48] sm:$0xff]
  %v3340 = vld [vmem:[%s3329 + $0x50] sm:$0xff]
  %v3341 = vld [vmem:[%s3329 + $0x58] sm:$0xff]
  %v3342 = vld [vmem:[%s3329 + $0x60] sm:$0xff]
  %v3343 = vld [vmem:[%s3329 + $0x68] sm:$0xff]
  %v3344 = vld [vmem:[%s3329 + $0x70] sm:$0xff]
  %v3346 = vsel %vm2343, %v2296, 0
  %3348 = vmatprep.subr.mxu0 0.0
  %3349 = vmatpush1.msra.mxu0 %v3330
  %3350 = vmatprep.subr.mxu0 0.0
  %3351 = vmatpush1.msra.mxu0 %v3331
  %3352 = vmatprep.subr.mxu0 0.0
  %3353 = vmatpush1.msra.mxu0 %v3332
  %3354 = vmatprep.subr.mxu0 0.0
  %3355 = vmatpush1.msra.mxu0 %v3333
  %3356 = vmatprep.subr.mxu0 0.0
  %3357 = vmatpush1.msra.mxu0 %v3334
  %3358 = vmatprep.subr.mxu0 0.0
  %3359 = vmatpush1.msra.mxu0 %v3335
  %3360 = vmatprep.subr.mxu0 0.0
  %3361 = vmatpush1.msra.mxu0 %v3336
  %3362 = vmatprep.subr.mxu0 0.0
  %3363 = vmatpush1.msra.mxu0 %v3337
  %3364 = vmatprep.subr.mxu0 0.0
  %3365 = vmatpush1.msra.mxu0 %v3338
  %3366 = vmatprep.subr.mxu0 0.0
  %3367 = vmatpush1.msra.mxu0 %v3339
  %3368 = vmatprep.subr.mxu0 0.0
  %3369 = vmatpush1.msra.mxu0 %v3340
  %3370 = vmatprep.subr.mxu0 0.0
  %3371 = vmatpush1.msra.mxu0 %v3341
  %3372 = vmatprep.subr.mxu0 0.0
  %3373 = vmatpush1.msra.mxu0 %v3342
  %3374 = vmatprep.subr.mxu0 0.0
  %3375 = vmatpush1.msra.mxu0 %v3343
  %3376 = vmatprep.subr.mxu0 0.0
  %3377 = vmatpush1.msra.mxu0 %v3344
  %3378 = vmatprep.subr.mxu0 0.0
  %3379 = vmatpush1.msra.mxu0 0.0
  %3380 = vmatprep.subr.mxu0 0.0
  %3381 = vmatpush1.msra.mxu0 0.0
  %3382 = vmatprep.subr.mxu0 0.0
  %3383 = vmatpush1.msra.mxu0 0.0
  %3384 = vmatprep.subr.mxu0 0.0
  %3385 = vmatpush1.msra.mxu0 0.0
  %3386 = vmatprep.subr.mxu0 0.0
  %3387 = vmatpush1.msra.mxu0 0.0
  %3388 = vmatprep.subr.mxu0 0.0
  %3389 = vmatpush1.msra.mxu0 0.0
  %3390 = vmatprep.subr.mxu0 0.0
  %3391 = vmatpush1.msra.mxu0 0.0
  %3392 = vmatprep.subr.mxu0 0.0
  %3393 = vmatpush1.msra.mxu0 0.0
  %3394 = vmatprep.subr.mxu0 0.0
  %3395 = vmatpush1.msra.mxu0 0.0
  %3396 = vmatprep.subr.mxu0 0.0
  %3397 = vmatpush1.msra.mxu0 0.0
  %3398 = vmatprep.subr.mxu0 0.0
  %3399 = vmatpush1.msra.mxu0 0.0
  %3400 = vmatprep.subr.mxu0 0.0
  %3401 = vmatpush1.msra.mxu0 0.0
  %3402 = vmatprep.subr.mxu0 0.0
  %3403 = vmatpush1.msra.mxu0 0.0
  %3404 = vmatprep.subr.mxu0 0.0
  %3405 = vmatpush1.msra.mxu0 0.0
  %3406 = vmatprep.subr.mxu0 0.0
  %3407 = vmatpush1.msra.mxu0 0.0
  %3408 = vmatprep.subr.mxu0 0.0
  %3409 = vmatpush1.msra.mxu0 0.0
  %3410 = vmatprep.subr.mxu0 0.0
  %3411 = vmatpush1.msra.mxu0 0.0
  %3412 = vmatprep.mubr.f32.mxu0 0.0
  %3413 = vmatmul.mubr.f32.gmra.mrb[0].mxu0 %v2354
  %v3414 = vpop.f32.mrb[0].mxu0
  %v3415 = vadd.f32 0.0, %v3414
  %v3416 = vpop.f32.mrb[0].mxu0
  %3417 = vmatprep.mubr.f32.mxu0 0.0
  %3418 = vmatmul.mubr.f32.gmra.mrb[0].mxu0 %v2357
  %v3419 = vpop.f32.mrb[0].mxu0
  %v3420 = vadd.f32 0.0, %v3419
  %v3421 = vpop.f32.mrb[0].mxu0
  %3422 = vmatprep.mubr.f32.mxu0 0.0
  %3423 = vmatmul.mubr.f32.gmra.mrb[0].mxu0 %v2360
  %v3424 = vpop.f32.mrb[0].mxu0
  %v3425 = vadd.f32 0.0, %v3424
  %v3426 = vpop.f32.mrb[0].mxu0
  %3427 = vmatprep.mubr.f32.mxu0 0.0
  %3428 = vmatmul.mubr.f32.gmra.mrb[0].mxu0 %v2363
  %v3429 = vpop.f32.mrb[0].mxu0
  %v3430 = vadd.f32 0.0, %v3429
  %v3431 = vpop.f32.mrb[0].mxu0
  %3432 = vmatprep.mubr.f32.mxu0 0.0
  %3433 = vmatmul.mubr.f32.gmra.mrb[0].mxu0 %v2366
  %v3434 = vpop.f32.mrb[0].mxu0
  %v3435 = vadd.f32 0.0, %v3434
  %v3436 = vpop.f32.mrb[0].mxu0
  %3437 = vmatprep.mubr.f32.mxu0 0.0
  %3438 = vmatmul.mubr.f32.gmra.mrb[0].mxu0 %v2824
  %v3439 = vpop.f32.mrb[0].mxu0
  %v3440 = vadd.f32 0.0, %v3439
  %v3441 = vpop.f32.mrb[0].mxu0
  %3442 = vmatprep.mubr.f32.mxu0 0.0
  %3443 = vmatmul.mubr.f32.gmra.mrb[0].mxu0 %v3085
  %v3444 = vpop.f32.mrb[0].mxu0
  %v3445 = vadd.f32 0.0, %v3444
  %v3446 = vpop.f32.mrb[0].mxu0
  %3447 = vmatprep.mubr.f32.mxu0 0.0
  %3448 = vmatmul.mubr.f32.gmra.mrb[0].mxu0 %v3346
  %v3449 = vpop.f32.mrb[0].mxu0
  %v3450 = vadd.f32 0.0, %v3449
  %v3451 = vpop.f32.mrb[0].mxu0
  %3452 = vdwg.mxu0
  %v3453 = vadd.f32 %v3192, %v3415
  %v3454 = vadd.f32 %v3193, %v3420
  %v3455 = vadd.f32 %v3194, %v3425
  %v3456 = vadd.f32 %v3195, %v3430
  %v3457 = vadd.f32 %v3196, %v3435
  %v3458 = vadd.f32 %v3197, %v3440
  %v3459 = vadd.f32 %v3198, %v3445
  %v3460 = vadd.f32 %v3199, %v3450
  %s3461 = scalar_lea.vmem %s5, 480
  %v3462 = vld [vmem:[%s3461] sm:$0xff]
  %v3463 = vld [vmem:[%s3461 + $0x8] sm:$0xff]
  %v3464 = vld [vmem:[%s3461 + $0x10] sm:$0xff]
  %v3465 = vld [vmem:[%s3461 + $0x18] sm:$0xff]
  %v3466 = vld [vmem:[%s3461 + $0x20] sm:$0xff]
  %v3467 = vld [vmem:[%s3461 + $0x28] sm:$0xff]
  %v3468 = vld [vmem:[%s3461 + $0x30] sm:$0xff]
  %v3469 = vld [vmem:[%s3461 + $0x38] sm:$0xff]
  %v3470 = vld [vmem:[%s3461 + $0x40] sm:$0xff]
  %v3471 = vld [vmem:[%s3461 + $0x48] sm:$0xff]
  %v3472 = vld [vmem:[%s3461 + $0x50] sm:$0xff]
  %v3473 = vld [vmem:[%s3461 + $0x58] sm:$0xff]
  %v3474 = vld [vmem:[%s3461 + $0x60] sm:$0xff]
  %v3475 = vld [vmem:[%s3461 + $0x68] sm:$0xff]
  %v3476 = vld [vmem:[%s3461 + $0x70] sm:$0xff]
  %3477 = vmatprep.subr.mxu0 0.0
  %3478 = vmatpush1.msra.mxu0 %v3462
  %3479 = vmatprep.subr.mxu0 0.0
  %3480 = vmatpush1.msra.mxu0 %v3463
  %3481 = vmatprep.subr.mxu0 0.0
  %3482 = vmatpush1.msra.mxu0 %v3464
  %3483 = vmatprep.subr.mxu0 0.0
  %3484 = vmatpush1.msra.mxu0 %v3465
  %3485 = vmatprep.subr.mxu0 0.0
  %3486 = vmatpush1.msra.mxu0 %v3466
  %3487 = vmatprep.subr.mxu0 0.0
  %3488 = vmatpush1.msra.mxu0 %v3467
  %3489 = vmatprep.subr.mxu0 0.0
  %3490 = vmatpush1.msra.mxu0 %v3468
  %3491 = vmatprep.subr.mxu0 0.0
  %3492 = vmatpush1.msra.mxu0 %v3469
  %3493 = vmatprep.subr.mxu0 0.0
  %3494 = vmatpush1.msra.mxu0 %v3470
  %3495 = vmatprep.subr.mxu0 0.0
  %3496 = vmatpush1.msra.mxu0 %v3471
  %3497 = vmatprep.subr.mxu0 0.0
  %3498 = vmatpush1.msra.mxu0 %v3472
  %3499 = vmatprep.subr.mxu0 0.0
  %3500 = vmatpush1.msra.mxu0 %v3473
  %3501 = vmatprep.subr.mxu0 0.0
  %3502 = vmatpush1.msra.mxu0 %v3474
  %3503 = vmatprep.subr.mxu0 0.0
  %3504 = vmatpush1.msra.mxu0 %v3475
  %3505 = vmatprep.subr.mxu0 0.0
  %3506 = vmatpush1.msra.mxu0 %v3476
  %3507 = vmatprep.subr.mxu0 0.0
  %3508 = vmatpush1.msra.mxu0 0.0
  %3509 = vmatprep.subr.mxu0 0.0
  %3510 = vmatpush1.msra.mxu0 0.0
  %3511 = vmatprep.subr.mxu0 0.0
  %3512 = vmatpush1.msra.mxu0 0.0
  %3513 = vmatprep.subr.mxu0 0.0
  %3514 = vmatpush1.msra.mxu0 0.0
  %3515 = vmatprep.subr.mxu0 0.0
  %3516 = vmatpush1.msra.mxu0 0.0
  %3517 = vmatprep.subr.mxu0 0.0
  %3518 = vmatpush1.msra.mxu0 0.0
  %3519 = vmatprep.subr.mxu0 0.0
  %3520 = vmatpush1.msra.mxu0 0.0
  %3521 = vmatprep.subr.mxu0 0.0
  %3522 = vmatpush1.msra.mxu0 0.0
  %3523 = vmatprep.subr.mxu0 0.0
  %3524 = vmatpush1.msra.mxu0 0.0
  %3525 = vmatprep.subr.mxu0 0.0
  %3526 = vmatpush1.msra.mxu0 0.0
  %3527 = vmatprep.subr.mxu0 0.0
  %3528 = vmatpush1.msra.mxu0 0.0
  %3529 = vmatprep.subr.mxu0 0.0
  %3530 = vmatpush1.msra.mxu0 0.0
  %3531 = vmatprep.subr.mxu0 0.0
  %3532 = vmatpush1.msra.mxu0 0.0
  %3533 = vmatprep.subr.mxu0 0.0
  %3534 = vmatpush1.msra.mxu0 0.0
  %3535 = vmatprep.subr.mxu0 0.0
  %3536 = vmatpush1.msra.mxu0 0.0
  %3537 = vmatprep.subr.mxu0 0.0
  %3538 = vmatpush1.msra.mxu0 0.0
  %3539 = vmatprep.subr.mxu0 0.0
  %3540 = vmatpush1.msra.mxu0 0.0
  %3541 = vmatprep.mubr.f32.mxu0 0.0
  %3542 = vmatmul.mubr.f32.gmra.mrb[0].mxu0 %v2354
  %v3543 = vpop.f32.mrb[0].mxu0
  %v3544 = vadd.f32 0.0, %v3543
  %v3545 = vpop.f32.mrb[0].mxu0
  %3546 = vmatprep.mubr.f32.mxu0 0.0
  %3547 = vmatmul.mubr.f32.gmra.mrb[0].mxu0 %v2357
  %v3548 = vpop.f32.mrb[0].mxu0
  %v3549 = vadd.f32 0.0, %v3548
  %v3550 = vpop.f32.mrb[0].mxu0
  %3551 = vmatprep.mubr.f32.mxu0 0.0
  %3552 = vmatmul.mubr.f32.gmra.mrb[0].mxu0 %v2360
  %v3553 = vpop.f32.mrb[0].mxu0
  %v3554 = vadd.f32 0.0, %v3553
  %v3555 = vpop.f32.mrb[0].mxu0
  %3556 = vmatprep.mubr.f32.mxu0 0.0
  %3557 = vmatmul.mubr.f32.gmra.mrb[0].mxu0 %v2363
  %v3558 = vpop.f32.mrb[0].mxu0
  %v3559 = vadd.f32 0.0, %v3558
  %v3560 = vpop.f32.mrb[0].mxu0
  %3561 = vmatprep.mubr.f32.mxu0 0.0
  %3562 = vmatmul.mubr.f32.gmra.mrb[0].mxu0 %v2366
  %v3563 = vpop.f32.mrb[0].mxu0
  %v3564 = vadd.f32 0.0, %v3563
  %v3565 = vpop.f32.mrb[0].mxu0
  %3566 = vmatprep.mubr.f32.mxu0 0.0
  %3567 = vmatmul.mubr.f32.gmra.mrb[0].mxu0 %v2824
  %v3568 = vpop.f32.mrb[0].mxu0
  %v3569 = vadd.f32 0.0, %v3568
  %v3570 = vpop.f32.mrb[0].mxu0
  %3571 = vmatprep.mubr.f32.mxu0 0.0
  %3572 = vmatmul.mubr.f32.gmra.mrb[0].mxu0 %v3085
  %v3573 = vpop.f32.mrb[0].mxu0
  %v3574 = vadd.f32 0.0, %v3573
  %v3575 = vpop.f32.mrb[0].mxu0
  %3576 = vmatprep.mubr.f32.mxu0 0.0
  %3577 = vmatmul.mubr.f32.gmra.mrb[0].mxu0 %v3346
  %v3578 = vpop.f32.mrb[0].mxu0
  %v3579 = vadd.f32 0.0, %v3578
  %v3580 = vpop.f32.mrb[0].mxu0
  %3581 = vdwg.mxu0
  %v3582 = vadd.f32 %v3321, %v3544
  %v3583 = vadd.f32 %v3322, %v3549
  %v3584 = vadd.f32 %v3323, %v3554
  %v3585 = vadd.f32 %v3324, %v3559
  %v3586 = vadd.f32 %v3325, %v3564
  %v3587 = vadd.f32 %v3326, %v3569
  %v3588 = vadd.f32 %v3327, %v3574
  %v3589 = vadd.f32 %v3328, %v3579
  %v3590 = vmax.f32 %v3453, %v3582
  %v3591 = vmax.f32 %v3454, %v3583
  %v3592 = vmax.f32 %v3455, %v3584
  %v3593 = vmax.f32 %v3456, %v3585
  %v3594 = vmax.f32 %v3457, %v3586
  %v3595 = vmax.f32 %v3458, %v3587
  %v3596 = vmax.f32 %v3459, %v3588
  %v3597 = vmax.f32 %v3460, %v3589
  %v3598 = vld [vmem:[%s6] sm:$0x1]
  %v3600 = vlaneseq
  %v3601 = vshrl.u32 %v3600, 7
  %v3602 = vsub.s32 0, %v3601
  %v3603 = vrot.slane %v3598, %v3602
  %v3605 = vadd.f32 %v3590, %v3603
  %v3606 = vadd.f32 %v3591, %v3603
  %v3607 = vadd.f32 %v3592, %v3603
  %v3608 = vadd.f32 %v3593, %v3603
  %v3609 = vadd.f32 %v3594, %v3603
  %v3610 = vadd.f32 %v3595, %v3603
  %v3611 = vadd.f32 %v3596, %v3603
  %v3612 = vadd.f32 %v3597, %v3603
  %v3613 = vmax.f32 %v3605, %v3606
  %v3614 = vmax.f32 %v3607, %v3608
  %v3615 = vmax.f32 %v3609, %v3610
  %v3616 = vmax.f32 %v3611, %v3612
  %v3617 = vmax.f32 %v3613, 0.0
  %v3618 = vmax.f32 %v3614, 0.0
  %v3619 = vmax.f32 %v3615, 0.0
  %v3620 = vmax.f32 %v3616, 0.0
  %v3621 = vld [vmem:[%s7] sm:$0xff]
  %v3622 = vld [vmem:[%s7 + $0x8] sm:$0xff]
  %v3623 = vld [vmem:[%s7 + $0x10] sm:$0xff]
  %v3624 = vld [vmem:[%s7 + $0x18] sm:$0xff]
  %v3625 = vld [vmem:[%s7 + $0x20] sm:$0xff]
  %v3626 = vld [vmem:[%s7 + $0x28] sm:$0xff]
  %v3627 = vld [vmem:[%s7 + $0x30] sm:$0xff]
  %v3628 = vld [vmem:[%s7 + $0x38] sm:$0xff]
  %v3629 = vld [vmem:[%s7 + $0x40] sm:$0xff]
  %v3630 = vld [vmem:[%s7 + $0x48] sm:$0xff]
  %s3631 = scalar_lea.vmem %s7, 80
  %v3632 = vld [vmem:[%s3631] sm:$0xff]
  %v3633 = vld [vmem:[%s3631 + $0x8] sm:$0xff]
  %v3634 = vld [vmem:[%s3631 + $0x10] sm:$0xff]
  %v3635 = vld [vmem:[%s3631 + $0x18] sm:$0xff]
  %v3636 = vld [vmem:[%s3631 + $0x20] sm:$0xff]
  %v3637 = vld [vmem:[%s3631 + $0x28] sm:$0xff]
  %v3638 = vld [vmem:[%s3631 + $0x30] sm:$0xff]
  %v3639 = vld [vmem:[%s3631 + $0x38] sm:$0xff]
  %v3640 = vld [vmem:[%s3631 + $0x40] sm:$0xff]
  %v3641 = vld [vmem:[%s3631 + $0x48] sm:$0xff]
  %vm3642 = vcmask 654336
  %v3644 = vsel %vm3642, %v3618, 0
  %3646 = vmatprep.subr.mxu0 0.0
  %3647 = vmatpush1.msra.mxu0 %v3632
  %3648 = vmatprep.subr.mxu0 0.0
  %3649 = vmatpush1.msra.mxu0 %v3633
  %3650 = vmatprep.subr.mxu0 0.0
  %3651 = vmatpush1.msra.mxu0 %v3634
  %3652 = vmatprep.subr.mxu0 0.0
  %3653 = vmatpush1.msra.mxu0 %v3635
  %3654 = vmatprep.subr.mxu0 0.0
  %3655 = vmatpush1.msra.mxu0 %v3636
  %3656 = vmatprep.subr.mxu0 0.0
  %3657 = vmatpush1.msra.mxu0 %v3637
  %3658 = vmatprep.subr.mxu0 0.0
  %3659 = vmatpush1.msra.mxu0 %v3638
  %3660 = vmatprep.subr.mxu0 0.0
  %3661 = vmatpush1.msra.mxu0 %v3639
  %3662 = vmatprep.subr.mxu0 0.0
  %3663 = vmatpush1.msra.mxu0 %v3640
  %3664 = vmatprep.subr.mxu0 0.0
  %3665 = vmatpush1.msra.mxu0 %v3641
  %3666 = vmatprep.subr.mxu0 0.0
  %3667 = vmatpush1.msra.mxu0 0.0
  %3668 = vmatprep.subr.mxu0 0.0
  %3669 = vmatpush1.msra.mxu0 0.0
  %3670 = vmatprep.subr.mxu0 0.0
  %3671 = vmatpush1.msra.mxu0 0.0
  %3672 = vmatprep.subr.mxu0 0.0
  %3673 = vmatpush1.msra.mxu0 0.0
  %3674 = vmatprep.subr.mxu0 0.0
  %3675 = vmatpush1.msra.mxu0 0.0
  %3676 = vmatprep.subr.mxu0 0.0
  %3677 = vmatpush1.msra.mxu0 0.0
  %3678 = vmatprep.subr.mxu0 0.0
  %3679 = vmatpush1.msra.mxu0 0.0
  %3680 = vmatprep.subr.mxu0 0.0
  %3681 = vmatpush1.msra.mxu0 0.0
  %3682 = vmatprep.subr.mxu0 0.0
  %3683 = vmatpush1.msra.mxu0 0.0
  %3684 = vmatprep.subr.mxu0 0.0
  %3685 = vmatpush1.msra.mxu0 0.0
  %3686 = vmatprep.subr.mxu0 0.0
  %3687 = vmatpush1.msra.mxu0 0.0
  %3688 = vmatprep.subr.mxu0 0.0
  %3689 = vmatpush1.msra.mxu0 0.0
  %3690 = vmatprep.subr.mxu0 0.0
  %3691 = vmatpush1.msra.mxu0 0.0
  %3692 = vmatprep.subr.mxu0 0.0
  %3693 = vmatpush1.msra.mxu0 0.0
  %3694 = vmatprep.subr.mxu0 0.0
  %3695 = vmatpush1.msra.mxu0 0.0
  %3696 = vmatprep.subr.mxu0 0.0
  %3697 = vmatpush1.msra.mxu0 0.0
  %3698 = vmatprep.subr.mxu0 0.0
  %3699 = vmatpush1.msra.mxu0 0.0
  %3700 = vmatprep.subr.mxu0 0.0
  %3701 = vmatpush1.msra.mxu0 0.0
  %3702 = vmatprep.subr.mxu0 0.0
  %3703 = vmatpush1.msra.mxu0 0.0
  %3704 = vmatprep.subr.mxu0 0.0
  %3705 = vmatpush1.msra.mxu0 0.0
  %3706 = vmatprep.subr.mxu0 0.0
  %3707 = vmatpush1.msra.mxu0 0.0
  %3708 = vmatprep.subr.mxu0 0.0
  %3709 = vmatpush1.msra.mxu0 0.0
  %3710 = vmatprep.mubr.f32.mxu0 0.0
  %3711 = vmatmul.mubr.f32.gmra.mrb[0].mxu0 %v3644
  %v3712 = vpop.f32.mrb[0].mxu0
  %v3713 = vadd.f32 0.0, %v3712
  %v3714 = vpop.f32.mrb[0].mxu0
  %3715 = vdwg.mxu0
  %v3717 = vsel %vm3642, %v3617, 0
  %3719 = vmatprep.subr.mxu0 0.0
  %3720 = vmatpush1.msra.mxu0 %v3621
  %3721 = vmatprep.subr.mxu0 0.0
  %3722 = vmatpush1.msra.mxu0 %v3622
  %3723 = vmatprep.subr.mxu0 0.0
  %3724 = vmatpush1.msra.mxu0 %v3623
  %3725 = vmatprep.subr.mxu0 0.0
  %3726 = vmatpush1.msra.mxu0 %v3624
  %3727 = vmatprep.subr.mxu0 0.0
  %3728 = vmatpush1.msra.mxu0 %v3625
  %3729 = vmatprep.subr.mxu0 0.0
  %3730 = vmatpush1.msra.mxu0 %v3626
  %3731 = vmatprep.subr.mxu0 0.0
  %3732 = vmatpush1.msra.mxu0 %v3627
  %3733 = vmatprep.subr.mxu0 0.0
  %3734 = vmatpush1.msra.mxu0 %v3628
  %3735 = vmatprep.subr.mxu0 0.0
  %3736 = vmatpush1.msra.mxu0 %v3629
  %3737 = vmatprep.subr.mxu0 0.0
  %3738 = vmatpush1.msra.mxu0 %v3630
  %3739 = vmatprep.subr.mxu0 0.0
  %3740 = vmatpush1.msra.mxu0 0.0
  %3741 = vmatprep.subr.mxu0 0.0
  %3742 = vmatpush1.msra.mxu0 0.0
  %3743 = vmatprep.subr.mxu0 0.0
  %3744 = vmatpush1.msra.mxu0 0.0
  %3745 = vmatprep.subr.mxu0 0.0
  %3746 = vmatpush1.msra.mxu0 0.0
  %3747 = vmatprep.subr.mxu0 0.0
  %3748 = vmatpush1.msra.mxu0 0.0
  %3749 = vmatprep.subr.mxu0 0.0
  %3750 = vmatpush1.msra.mxu0 0.0
  %3751 = vmatprep.subr.mxu0 0.0
  %3752 = vmatpush1.msra.mxu0 0.0
  %3753 = vmatprep.subr.mxu0 0.0
  %3754 = vmatpush1.msra.mxu0 0.0
  %3755 = vmatprep.subr.mxu0 0.0
  %3756 = vmatpush1.msra.mxu0 0.0
  %3757 = vmatprep.subr.mxu0 0.0
  %3758 = vmatpush1.msra.mxu0 0.0
  %3759 = vmatprep.subr.mxu0 0.0
  %3760 = vmatpush1.msra.mxu0 0.0
  %3761 = vmatprep.subr.mxu0 0.0
  %3762 = vmatpush1.msra.mxu0 0.0
  %3763 = vmatprep.subr.mxu0 0.0
  %3764 = vmatpush1.msra.mxu0 0.0
  %3765 = vmatprep.subr.mxu0 0.0
  %3766 = vmatpush1.msra.mxu0 0.0
  %3767 = vmatprep.subr.mxu0 0.0
  %3768 = vmatpush1.msra.mxu0 0.0
  %3769 = vmatprep.subr.mxu0 0.0
  %3770 = vmatpush1.msra.mxu0 0.0
  %3771 = vmatprep.subr.mxu0 0.0
  %3772 = vmatpush1.msra.mxu0 0.0
  %3773 = vmatprep.subr.mxu0 0.0
  %3774 = vmatpush1.msra.mxu0 0.0
  %3775 = vmatprep.subr.mxu0 0.0
  %3776 = vmatpush1.msra.mxu0 0.0
  %3777 = vmatprep.subr.mxu0 0.0
  %3778 = vmatpush1.msra.mxu0 0.0
  %3779 = vmatprep.subr.mxu0 0.0
  %3780 = vmatpush1.msra.mxu0 0.0
  %3781 = vmatprep.subr.mxu0 0.0
  %3782 = vmatpush1.msra.mxu0 0.0
  %3783 = vmatprep.mubr.f32.mxu0 0.0
  %3784 = vmatmul.mubr.f32.gmra.mrb[0].mxu0 %v3717
  %v3785 = vpop.f32.mrb[0].mxu0
  %v3786 = vadd.f32 %v3713, %v3785
  %v3787 = vpop.f32.mrb[0].mxu0
  %3788 = vdwg.mxu0
  %s3789 = scalar_lea.vmem %s7, 160
  %v3790 = vld [vmem:[%s3789] sm:$0xff]
  %v3791 = vld [vmem:[%s3789 + $0x8] sm:$0xff]
  %v3792 = vld [vmem:[%s3789 + $0x10] sm:$0xff]
  %v3793 = vld [vmem:[%s3789 + $0x18] sm:$0xff]
  %v3794 = vld [vmem:[%s3789 + $0x20] sm:$0xff]
  %v3795 = vld [vmem:[%s3789 + $0x28] sm:$0xff]
  %v3796 = vld [vmem:[%s3789 + $0x30] sm:$0xff]
  %v3797 = vld [vmem:[%s3789 + $0x38] sm:$0xff]
  %v3798 = vld [vmem:[%s3789 + $0x40] sm:$0xff]
  %v3799 = vld [vmem:[%s3789 + $0x48] sm:$0xff]
  %v3801 = vsel %vm3642, %v3619, 0
  %3803 = vmatprep.subr.mxu0 0.0
  %3804 = vmatpush1.msra.mxu0 %v3790
  %3805 = vmatprep.subr.mxu0 0.0
  %3806 = vmatpush1.msra.mxu0 %v3791
  %3807 = vmatprep.subr.mxu0 0.0
  %3808 = vmatpush1.msra.mxu0 %v3792
  %3809 = vmatprep.subr.mxu0 0.0
  %3810 = vmatpush1.msra.mxu0 %v3793
  %3811 = vmatprep.subr.mxu0 0.0
  %3812 = vmatpush1.msra.mxu0 %v3794
  %3813 = vmatprep.subr.mxu0 0.0
  %3814 = vmatpush1.msra.mxu0 %v3795
  %3815 = vmatprep.subr.mxu0 0.0
  %3816 = vmatpush1.msra.mxu0 %v3796
  %3817 = vmatprep.subr.mxu0 0.0
  %3818 = vmatpush1.msra.mxu0 %v3797
  %3819 = vmatprep.subr.mxu0 0.0
  %3820 = vmatpush1.msra.mxu0 %v3798
  %3821 = vmatprep.subr.mxu0 0.0
  %3822 = vmatpush1.msra.mxu0 %v3799
  %3823 = vmatprep.subr.mxu0 0.0
  %3824 = vmatpush1.msra.mxu0 0.0
  %3825 = vmatprep.subr.mxu0 0.0
  %3826 = vmatpush1.msra.mxu0 0.0
  %3827 = vmatprep.subr.mxu0 0.0
  %3828 = vmatpush1.msra.mxu0 0.0
  %3829 = vmatprep.subr.mxu0 0.0
  %3830 = vmatpush1.msra.mxu0 0.0
  %3831 = vmatprep.subr.mxu0 0.0
  %3832 = vmatpush1.msra.mxu0 0.0
  %3833 = vmatprep.subr.mxu0 0.0
  %3834 = vmatpush1.msra.mxu0 0.0
  %3835 = vmatprep.subr.mxu0 0.0
  %3836 = vmatpush1.msra.mxu0 0.0
  %3837 = vmatprep.subr.mxu0 0.0
  %3838 = vmatpush1.msra.mxu0 0.0
  %3839 = vmatprep.subr.mxu0 0.0
  %3840 = vmatpush1.msra.mxu0 0.0
  %3841 = vmatprep.subr.mxu0 0.0
  %3842 = vmatpush1.msra.mxu0 0.0
  %3843 = vmatprep.subr.mxu0 0.0
  %3844 = vmatpush1.msra.mxu0 0.0
  %3845 = vmatprep.subr.mxu0 0.0
  %3846 = vmatpush1.msra.mxu0 0.0
  %3847 = vmatprep.subr.mxu0 0.0
  %3848 = vmatpush1.msra.mxu0 0.0
  %3849 = vmatprep.subr.mxu0 0.0
  %3850 = vmatpush1.msra.mxu0 0.0
  %3851 = vmatprep.subr.mxu0 0.0
  %3852 = vmatpush1.msra.mxu0 0.0
  %3853 = vmatprep.subr.mxu0 0.0
  %3854 = vmatpush1.msra.mxu0 0.0
  %3855 = vmatprep.subr.mxu0 0.0
  %3856 = vmatpush1.msra.mxu0 0.0
  %3857 = vmatprep.subr.mxu0 0.0
  %3858 = vmatpush1.msra.mxu0 0.0
  %3859 = vmatprep.subr.mxu0 0.0
  %3860 = vmatpush1.msra.mxu0 0.0
  %3861 = vmatprep.subr.mxu0 0.0
  %3862 = vmatpush1.msra.mxu0 0.0
  %3863 = vmatprep.subr.mxu0 0.0
  %3864 = vmatpush1.msra.mxu0 0.0
  %3865 = vmatprep.subr.mxu0 0.0
  %3866 = vmatpush1.msra.mxu0 0.0
  %3867 = vmatprep.mubr.f32.mxu0 0.0
  %3868 = vmatmul.mubr.f32.gmra.mrb[0].mxu0 %v3801
  %v3869 = vpop.f32.mrb[0].mxu0
  %v3870 = vadd.f32 0.0, %v3869
  %v3871 = vpop.f32.mrb[0].mxu0
  %3872 = vdwg.mxu0
  %v3873 = vadd.f32 %v3786, %v3870
  %s3874 = scalar_lea.vmem %s7, 240
  %v3875 = vld [vmem:[%s3874] sm:$0xff]
  %v3876 = vld [vmem:[%s3874 + $0x8] sm:$0xff]
  %v3877 = vld [vmem:[%s3874 + $0x10] sm:$0xff]
  %v3878 = vld [vmem:[%s3874 + $0x18] sm:$0xff]
  %v3879 = vld [vmem:[%s3874 + $0x20] sm:$0xff]
  %v3880 = vld [vmem:[%s3874 + $0x28] sm:$0xff]
  %v3881 = vld [vmem:[%s3874 + $0x30] sm:$0xff]
  %v3882 = vld [vmem:[%s3874 + $0x38] sm:$0xff]
  %v3883 = vld [vmem:[%s3874 + $0x40] sm:$0xff]
  %v3884 = vld [vmem:[%s3874 + $0x48] sm:$0xff]
  %v3886 = vsel %vm3642, %v3620, 0
  %3888 = vmatprep.subr.mxu0 0.0
  %3889 = vmatpush1.msra.mxu0 %v3875
  %3890 = vmatprep.subr.mxu0 0.0
  %3891 = vmatpush1.msra.mxu0 %v3876
  %3892 = vmatprep.subr.mxu0 0.0
  %3893 = vmatpush1.msra.mxu0 %v3877
  %3894 = vmatprep.subr.mxu0 0.0
  %3895 = vmatpush1.msra.mxu0 %v3878
  %3896 = vmatprep.subr.mxu0 0.0
  %3897 = vmatpush1.msra.mxu0 %v3879
  %3898 = vmatprep.subr.mxu0 0.0
  %3899 = vmatpush1.msra.mxu0 %v3880
  %3900 = vmatprep.subr.mxu0 0.0
  %3901 = vmatpush1.msra.mxu0 %v3881
  %3902 = vmatprep.subr.mxu0 0.0
  %3903 = vmatpush1.msra.mxu0 %v3882
  %3904 = vmatprep.subr.mxu0 0.0
  %3905 = vmatpush1.msra.mxu0 %v3883
  %3906 = vmatprep.subr.mxu0 0.0
  %3907 = vmatpush1.msra.mxu0 %v3884
  %3908 = vmatprep.subr.mxu0 0.0
  %3909 = vmatpush1.msra.mxu0 0.0
  %3910 = vmatprep.subr.mxu0 0.0
  %3911 = vmatpush1.msra.mxu0 0.0
  %3912 = vmatprep.subr.mxu0 0.0
  %3913 = vmatpush1.msra.mxu0 0.0
  %3914 = vmatprep.subr.mxu0 0.0
  %3915 = vmatpush1.msra.mxu0 0.0
  %3916 = vmatprep.subr.mxu0 0.0
  %3917 = vmatpush1.msra.mxu0 0.0
  %3918 = vmatprep.subr.mxu0 0.0
  %3919 = vmatpush1.msra.mxu0 0.0
  %3920 = vmatprep.subr.mxu0 0.0
  %3921 = vmatpush1.msra.mxu0 0.0
  %3922 = vmatprep.subr.mxu0 0.0
  %3923 = vmatpush1.msra.mxu0 0.0
  %3924 = vmatprep.subr.mxu0 0.0
  %3925 = vmatpush1.msra.mxu0 0.0
  %3926 = vmatprep.subr.mxu0 0.0
  %3927 = vmatpush1.msra.mxu0 0.0
  %3928 = vmatprep.subr.mxu0 0.0
  %3929 = vmatpush1.msra.mxu0 0.0
  %3930 = vmatprep.subr.mxu0 0.0
  %3931 = vmatpush1.msra.mxu0 0.0
  %3932 = vmatprep.subr.mxu0 0.0
  %3933 = vmatpush1.msra.mxu0 0.0
  %3934 = vmatprep.subr.mxu0 0.0
  %3935 = vmatpush1.msra.mxu0 0.0
  %3936 = vmatprep.subr.mxu0 0.0
  %3937 = vmatpush1.msra.mxu0 0.0
  %3938 = vmatprep.subr.mxu0 0.0
  %3939 = vmatpush1.msra.mxu0 0.0
  %3940 = vmatprep.subr.mxu0 0.0
  %3941 = vmatpush1.msra.mxu0 0.0
  %3942 = vmatprep.subr.mxu0 0.0
  %3943 = vmatpush1.msra.mxu0 0.0
  %3944 = vmatprep.subr.mxu0 0.0
  %3945 = vmatpush1.msra.mxu0 0.0
  %3946 = vmatprep.subr.mxu0 0.0
  %3947 = vmatpush1.msra.mxu0 0.0
  %3948 = vmatprep.subr.mxu0 0.0
  %3949 = vmatpush1.msra.mxu0 0.0
  %3950 = vmatprep.subr.mxu0 0.0
  %3951 = vmatpush1.msra.mxu0 0.0
  %3952 = vmatprep.mubr.f32.mxu0 0.0
  %3953 = vmatmul.mubr.f32.gmra.mrb[0].mxu0 %v3886
  %v3954 = vpop.f32.mrb[0].mxu0
  %v3955 = vadd.f32 0.0, %v3954
  %v3956 = vpop.f32.mrb[0].mxu0
  %3957 = vdwg.mxu0
  %v3958 = vadd.f32 %v3873, %v3955
  %v3959 = vld [vmem:[%s8] sm:$0x1]
  %v3961 = vlaneseq
  %v3962 = vshrl.u32 %v3961, 7
  %v3963 = vsub.s32 0, %v3962
  %v3964 = vrot.slane %v3959, %v3963
  %v3966 = vadd.f32 %v3958, %v3964
  %vm3967 = vcmask 80896
  %3968 = vst.msk [vmem:[%s9] sm:$0xff] %vm3967, %v3966
  // Predicated region
  $region38: #{lenet_forward.1} parent=0 // pred_check
    _
  $region39: #{lenet_forward.1} parent=0 // pred_check_branch
    %3970 = sbr.rel (0) target = $region41
  $region40: #{lenet_forward.1} parent=0 // pred_region
    _
  $region41: #{lenet_forward.1} parent=0 // pred_fallthru
    _
  // Predicated region
  $region42: #{lenet_forward.1} parent=0 // pred_check
    _
  $region43: #{lenet_forward.1} parent=0 // pred_check_branch
    %3972 = sbr.rel (0) target = $region45
  $region44: #{lenet_forward.1} parent=0 // pred_region
    _
  $region45: #{lenet_forward.1} parent=0 // pred_fallthru
    _

</llo_original>
